<compile_context>
chip_gen: v7x
topology: tpu7x:2x2x1
jax: 0.10.0
libtpu: 0.0.40
codegen_flags: <defaults>
</compile_context>

<pallas_src>
import math
import functools

import jax
import jax.numpy as jnp
from jax.experimental import pallas as pl
from jax.experimental.pallas import tpu as pltpu


def _attention_kernel(x_ref, wqkv_ref, wout_ref, bout_ref, o_ref, *,
                      b_tile, heads, d_pad, seq_len, dim_p):
    """One grid step = `b_tile` batch elements (b_tile*seq_len fused rows)."""
    n = seq_len
    inner_p = heads * d_pad

    # Fused QKV projection for every row of the step: bf16 MXU operands,
    # f32 accumulation, then a single downcast so the per-head slices feed
    # the attention matmuls as bf16.
    qkv = jnp.dot(x_ref[...], wqkv_ref[...],
                  preferred_element_type=jnp.float32)        # (b_tile*n, 3*inner_p)
    qkv = qkv.astype(jnp.bfloat16)

    outs = []
    for t in range(b_tile):                                  # static unroll (small)
        r0 = t * n

        dots_list = []
        v_list = []
        for h in range(heads):                               # static unroll
            c0 = h * d_pad                                   # 128-lane aligned slice
            q = qkv[r0:r0 + n, c0:c0 + d_pad]
            k = qkv[r0:r0 + n, inner_p + c0:inner_p + c0 + d_pad]
            v_list.append(qkv[r0:r0 + n,
                              2 * inner_p + c0:2 * inner_p + c0 + d_pad])
            # dots_h = q @ k^T; zero-padded head columns contribute nothing,
            # and the softmax scale was folded into the q-columns of W_qkv.
            dots_list.append(jax.lax.dot_general(
                q, k, dimension_numbers=(((1,), (1,)), ((), ())),
                preferred_element_type=jnp.float32))         # (n, n)

        # All heads' score tiles stacked along sublanes -> ONE numerically
        # stable softmax per batch element (f32; divide goes to the EUP).
        dots = jnp.concatenate(dots_list, axis=0)            # (heads*n, n)
        m = jnp.max(dots, axis=-1, keepdims=True)
        e = jnp.exp(dots - m)
        denom = jnp.sum(e, axis=-1, keepdims=True)
        attn = e * pl.reciprocal(denom, approx=True)

        head_outs = []
        for h in range(heads):
            p = attn[h * n:(h + 1) * n, :].astype(jnp.bfloat16)
            head_outs.append(jnp.dot(p, v_list[h],
                                     preferred_element_type=jnp.float32))
        # Aligned lane-concat of heads -> (n, inner_p) in f32.
        outs.append(jnp.concatenate(head_outs, axis=-1))

    out_all = outs[0] if b_tile == 1 else jnp.concatenate(outs, axis=0)

    # Single long-K output projection (K = heads*d_pad) + bias, then one
    # lane-dense store of the whole (b_tile*n, dim_p) block.
    y = jnp.dot(out_all.astype(jnp.bfloat16), wout_ref[...],
                preferred_element_type=jnp.float32) + bout_ref[...]
    o_ref[...] = y.astype(o_ref.dtype)


def _pick_batch_tile(b, n):
    """Batch elements fused per grid step.

    Target ~128 fused rows (fills the MXU row dimension; v5e note: 128, not
    256), but keep >= 2 parallel grid steps when the batch allows so v7x's
    two TensorCores both get work.  Block row counts must stay 8-aligned.
    """
    target = max(1, 128 // max(n, 1))
    if b >= 2:
        target = min(target, max(1, b // 2))
    target = min(max(target, 1), b)
    for cand in range(target, 0, -1):
        if b % cand == 0 and (cand * n) % 8 == 0:
            return cand
    return b   # fallback: single step, block covers all rows (always legal)


def attention_forward(x, w_qkv, w_out, b_out, *, heads, dim_head):
    b, n, dim = x.shape
    inner = heads * dim_head
    assert w_qkv.shape == (dim, 3 * inner)
    assert w_out.shape == (inner, dim)
    scale = dim_head ** -0.5

    # ---- one-time parameter / layout prep (wrapper side) -------------------
    #  * fold the softmax scale into the q-columns of W_qkv (in f32),
    #  * pad each head's dim_head up to a 128-lane multiple (zero cols/rows)
    #    so every per-head slice / concat in the kernel is vreg-aligned,
    #  * pad the output projection / bias to a 128-lane multiple so the kernel
    #    output stores are lane-dense (unmasked vst),
    #  * cast matmul weights and x to bf16 (f32 accumulation stays in-kernel).
    d_pad = ((dim_head + 127) // 128) * 128
    inner_p = heads * d_pad
    dim_p = ((dim + 127) // 128) * 128

    w_qkv_scaled = w_qkv.astype(jnp.float32).at[:, :inner].multiply(scale)
    w3 = w_qkv_scaled.reshape(dim, 3, heads, dim_head)
    w3 = jnp.pad(w3, ((0, 0), (0, 0), (0, 0), (0, d_pad - dim_head)))
    w_qkv_prep = w3.reshape(dim, 3 * inner_p).astype(jnp.bfloat16)

    wo = w_out.astype(jnp.float32).reshape(heads, dim_head, dim)
    wo = jnp.pad(wo, ((0, 0), (0, d_pad - dim_head), (0, dim_p - dim)))
    w_out_prep = wo.reshape(inner_p, dim_p).astype(jnp.bfloat16)

    b_out_prep = jnp.zeros((1, dim_p), jnp.float32).at[0, :dim].set(
        b_out.astype(jnp.float32))

    b_tile = _pick_batch_tile(b, n)
    rows = b_tile * n
    x_flat = x.reshape(b * n, dim).astype(jnp.bfloat16)

    kernel = functools.partial(_attention_kernel, b_tile=b_tile, heads=heads,
                               d_pad=d_pad, seq_len=n, dim_p=dim_p)

    y_flat = pl.pallas_call(
        kernel,
        out_shape=jax.ShapeDtypeStruct((b * n, dim_p), x.dtype),
        grid_spec=pltpu.PrefetchScalarGridSpec(
            num_scalar_prefetch=0,
            grid=(b // b_tile,),
            in_specs=[
                pl.BlockSpec((rows, dim), lambda i: (i, 0)),         # x rows (bf16)
                pl.BlockSpec((dim, 3 * inner_p), lambda i: (0, 0)),  # W_qkv (resident)
                pl.BlockSpec((inner_p, dim_p), lambda i: (0, 0)),    # W_out (resident)
                pl.BlockSpec((1, dim_p), lambda i: (0, 0)),          # bias  (resident)
            ],
            out_specs=pl.BlockSpec((rows, dim_p), lambda i: (i, 0)),
        ),
        compiler_params=pltpu.CompilerParams(
            dimension_semantics=("parallel",),
            # Above the default scoped limit, below v7x's 64 MiB physical VMEM.
            vmem_limit_bytes=48 * 1024 * 1024),
    )(x_flat, w_qkv_prep, w_out_prep, b_out_prep)

    y = y_flat[:, :dim] if dim_p != dim else y_flat
    return y.reshape(b, n, dim)


def _xavier_normal(key, shape):
    # nn.init.xavier_normal_: std = sqrt(2 / (fan_in + fan_out))
    fan_in, fan_out = shape[0], shape[1]
    std = math.sqrt(2.0 / (fan_in + fan_out))
    return std * jax.random.normal(key, shape, dtype=jnp.float32)


def _reference(x, w_qkv, w_out, b_out, heads, dim_head):
    # Pure-JAX f32 reference of the PyTorch forward for verification.
    b, n, dim = x.shape
    inner = heads * dim_head
    qkv = x @ w_qkv
    q, k, v = jnp.split(qkv, 3, axis=-1)

    def split_heads(t):
        return t.reshape(b, n, heads, dim_head).transpose(0, 2, 1, 3)

    q, k, v = map(split_heads, (q, k, v))
    dots = jnp.einsum('bhid,bhjd->bhij', q, k) * (dim_head ** -0.5)
    attn = jax.nn.softmax(dots, axis=-1)
    out = jnp.einsum('bhij,bhjd->bhid', attn, v)
    out = out.transpose(0, 2, 1, 3).reshape(b, n, inner)
    return out @ w_out + b_out


if __name__ == "__main__":
    # Small shapes consistent with the module: dim=32, num_patches (seq) = 8,
    # default heads=8, dim_head=64 -> inner_dim = 512.  batch=4 exercises the
    # batch-fused path (2 batch elements fused per step, 2 parallel steps).
    batch, seq, dim = 4, 8, 32
    heads, dim_head = 8, 64
    inner = heads * dim_head

    key = jax.random.PRNGKey(0)
    kx, kqkv, kout = jax.random.split(key, 3)

    x = jax.random.normal(kx, (batch, seq, dim), dtype=jnp.float32)

    # Deterministic parameter init mirroring init_weights (xavier_normal, bias=0).
    w_qkv = _xavier_normal(kqkv, (dim, 3 * inner))     # to_qkv.weight (in->out)
    w_out = _xavier_normal(kout, (inner, dim))         # to_out[0].weight (in->out)
    b_out = jnp.zeros((dim,), dtype=jnp.float32)       # to_out[0].bias

    y = attention_forward(x, w_qkv, w_out, b_out, heads=heads, dim_head=dim_head)
    y = jax.block_until_ready(y)

    y_ref = _reference(x, w_qkv, w_out, b_out, heads, dim_head)
    assert y.shape == (batch, seq, dim)
    # bf16 MXU operands + approx reciprocal -> looser tolerance vs f32 reference.
    assert jnp.allclose(y, y_ref, atol=3e-2, rtol=3e-2), "mismatch vs reference"

    print("KERNEL_OK")
</pallas_src>

<mosaic_0001>
module attributes {stable_mosaic.version = 11 : i64} {
  func.func @_attention_kernel(%arg0: i32, %arg1: memref<16x32xbf16, #tpu.memory_space<vmem>>, %arg2: memref<32x3072xbf16, #tpu.memory_space<vmem>>, %arg3: memref<1024x128xbf16, #tpu.memory_space<vmem>>, %arg4: memref<1x128xf32, #tpu.memory_space<vmem>>, %arg5: memref<16x128xf32, #tpu.memory_space<vmem>>) attributes {dimension_semantics = [#tpu.dimension_semantics<parallel>], iteration_bounds = array<i64: 2>, scalar_prefetch = 0 : i64, scratch_operands = 0 : i64, tpu.core_type = #tpu.core_type<tc>, window_params = [{transform_indices = @transform_0, window_bounds = array<i64: 16, 32>}, {pipeline_mode = #tpu.pipeline_mode<synchronous>, transform_indices = @transform_1, window_bounds = array<i64: 32, 3072>}, {pipeline_mode = #tpu.pipeline_mode<synchronous>, transform_indices = @transform_2, window_bounds = array<i64: 1024, 128>}, {pipeline_mode = #tpu.pipeline_mode<synchronous>, transform_indices = @transform_3, window_bounds = array<i64: 1, 128>}, {transform_indices = @transform_4, window_bounds = array<i64: 16, 128>}]} {
    %c0 = arith.constant 0 : index
    %c0_0 = arith.constant 0 : index
    %0 = vector.load %arg1[%c0, %c0_0] : memref<16x32xbf16, #tpu.memory_space<vmem>>, vector<16x32xbf16>
    %c0_1 = arith.constant 0 : index
    %c0_2 = arith.constant 0 : index
    %1 = vector.load %arg2[%c0_1, %c0_2] : memref<32x3072xbf16, #tpu.memory_space<vmem>>, vector<32x3072xbf16>
    %cst = arith.constant dense<0.000000e+00> : vector<16x3072xf32>
    %2 = tpu.matmul %0, %1, %cst {dimension_numbers = #tpu.dot_dimension_numbers<[1], [0], [0], [1], [0, 0, 1, 1], [], []>} : vector<16x32xbf16>, vector<32x3072xbf16>, vector<16x3072xf32> -> vector<16x3072xf32>
    %3 = arith.truncf %2 : vector<16x3072xf32> to vector<16x3072xbf16>
    %4 = vector.extract_strided_slice %3 {offsets = [0, 0], sizes = [8, 128], strides = [1, 1]} : vector<16x3072xbf16> to vector<8x128xbf16>
    %5 = vector.extract_strided_slice %3 {offsets = [0, 1024], sizes = [8, 128], strides = [1, 1]} : vector<16x3072xbf16> to vector<8x128xbf16>
    %6 = vector.extract_strided_slice %3 {offsets = [0, 2048], sizes = [8, 128], strides = [1, 1]} : vector<16x3072xbf16> to vector<8x128xbf16>
    %cst_3 = arith.constant dense<0.000000e+00> : vector<8x8xf32>
    %7 = tpu.matmul %4, %5, %cst_3 {dimension_numbers = #tpu.dot_dimension_numbers<[1], [1], [0], [0], [0, 0, 1, 0], [], []>} : vector<8x128xbf16>, vector<8x128xbf16>, vector<8x8xf32> -> vector<8x8xf32>
    %8 = vector.extract_strided_slice %3 {offsets = [0, 128], sizes = [8, 128], strides = [1, 1]} : vector<16x3072xbf16> to vector<8x128xbf16>
    %9 = vector.extract_strided_slice %3 {offsets = [0, 1152], sizes = [8, 128], strides = [1, 1]} : vector<16x3072xbf16> to vector<8x128xbf16>
    %10 = vector.extract_strided_slice %3 {offsets = [0, 2176], sizes = [8, 128], strides = [1, 1]} : vector<16x3072xbf16> to vector<8x128xbf16>
    %cst_4 = arith.constant dense<0.000000e+00> : vector<8x8xf32>
    %11 = tpu.matmul %8, %9, %cst_4 {dimension_numbers = #tpu.dot_dimension_numbers<[1], [1], [0], [0], [0, 0, 1, 0], [], []>} : vector<8x128xbf16>, vector<8x128xbf16>, vector<8x8xf32> -> vector<8x8xf32>
    %12 = vector.extract_strided_slice %3 {offsets = [0, 256], sizes = [8, 128], strides = [1, 1]} : vector<16x3072xbf16> to vector<8x128xbf16>
    %13 = vector.extract_strided_slice %3 {offsets = [0, 1280], sizes = [8, 128], strides = [1, 1]} : vector<16x3072xbf16> to vector<8x128xbf16>
    %14 = vector.extract_strided_slice %3 {offsets = [0, 2304], sizes = [8, 128], strides = [1, 1]} : vector<16x3072xbf16> to vector<8x128xbf16>
    %cst_5 = arith.constant dense<0.000000e+00> : vector<8x8xf32>
    %15 = tpu.matmul %12, %13, %cst_5 {dimension_numbers = #tpu.dot_dimension_numbers<[1], [1], [0], [0], [0, 0, 1, 0], [], []>} : vector<8x128xbf16>, vector<8x128xbf16>, vector<8x8xf32> -> vector<8x8xf32>
    %16 = vector.extract_strided_slice %3 {offsets = [0, 384], sizes = [8, 128], strides = [1, 1]} : vector<16x3072xbf16> to vector<8x128xbf16>
    %17 = vector.extract_strided_slice %3 {offsets = [0, 1408], sizes = [8, 128], strides = [1, 1]} : vector<16x3072xbf16> to vector<8x128xbf16>
    %18 = vector.extract_strided_slice %3 {offsets = [0, 2432], sizes = [8, 128], strides = [1, 1]} : vector<16x3072xbf16> to vector<8x128xbf16>
    %cst_6 = arith.constant dense<0.000000e+00> : vector<8x8xf32>
    %19 = tpu.matmul %16, %17, %cst_6 {dimension_numbers = #tpu.dot_dimension_numbers<[1], [1], [0], [0], [0, 0, 1, 0], [], []>} : vector<8x128xbf16>, vector<8x128xbf16>, vector<8x8xf32> -> vector<8x8xf32>
    %20 = vector.extract_strided_slice %3 {offsets = [0, 512], sizes = [8, 128], strides = [1, 1]} : vector<16x3072xbf16> to vector<8x128xbf16>
    %21 = vector.extract_strided_slice %3 {offsets = [0, 1536], sizes = [8, 128], strides = [1, 1]} : vector<16x3072xbf16> to vector<8x128xbf16>
    %22 = vector.extract_strided_slice %3 {offsets = [0, 2560], sizes = [8, 128], strides = [1, 1]} : vector<16x3072xbf16> to vector<8x128xbf16>
    %cst_7 = arith.constant dense<0.000000e+00> : vector<8x8xf32>
    %23 = tpu.matmul %20, %21, %cst_7 {dimension_numbers = #tpu.dot_dimension_numbers<[1], [1], [0], [0], [0, 0, 1, 0], [], []>} : vector<8x128xbf16>, vector<8x128xbf16>, vector<8x8xf32> -> vector<8x8xf32>
    %24 = vector.extract_strided_slice %3 {offsets = [0, 640], sizes = [8, 128], strides = [1, 1]} : vector<16x3072xbf16> to vector<8x128xbf16>
    %25 = vector.extract_strided_slice %3 {offsets = [0, 1664], sizes = [8, 128], strides = [1, 1]} : vector<16x3072xbf16> to vector<8x128xbf16>
    %26 = vector.extract_strided_slice %3 {offsets = [0, 2688], sizes = [8, 128], strides = [1, 1]} : vector<16x3072xbf16> to vector<8x128xbf16>
    %cst_8 = arith.constant dense<0.000000e+00> : vector<8x8xf32>
    %27 = tpu.matmul %24, %25, %cst_8 {dimension_numbers = #tpu.dot_dimension_numbers<[1], [1], [0], [0], [0, 0, 1, 0], [], []>} : vector<8x128xbf16>, vector<8x128xbf16>, vector<8x8xf32> -> vector<8x8xf32>
    %28 = vector.extract_strided_slice %3 {offsets = [0, 768], sizes = [8, 128], strides = [1, 1]} : vector<16x3072xbf16> to vector<8x128xbf16>
    %29 = vector.extract_strided_slice %3 {offsets = [0, 1792], sizes = [8, 128], strides = [1, 1]} : vector<16x3072xbf16> to vector<8x128xbf16>
    %30 = vector.extract_strided_slice %3 {offsets = [0, 2816], sizes = [8, 128], strides = [1, 1]} : vector<16x3072xbf16> to vector<8x128xbf16>
    %cst_9 = arith.constant dense<0.000000e+00> : vector<8x8xf32>
    %31 = tpu.matmul %28, %29, %cst_9 {dimension_numbers = #tpu.dot_dimension_numbers<[1], [1], [0], [0], [0, 0, 1, 0], [], []>} : vector<8x128xbf16>, vector<8x128xbf16>, vector<8x8xf32> -> vector<8x8xf32>
    %32 = vector.extract_strided_slice %3 {offsets = [0, 896], sizes = [8, 128], strides = [1, 1]} : vector<16x3072xbf16> to vector<8x128xbf16>
    %33 = vector.extract_strided_slice %3 {offsets = [0, 1920], sizes = [8, 128], strides = [1, 1]} : vector<16x3072xbf16> to vector<8x128xbf16>
    %34 = vector.extract_strided_slice %3 {offsets = [0, 2944], sizes = [8, 128], strides = [1, 1]} : vector<16x3072xbf16> to vector<8x128xbf16>
    %cst_10 = arith.constant dense<0.000000e+00> : vector<8x8xf32>
    %35 = tpu.matmul %32, %33, %cst_10 {dimension_numbers = #tpu.dot_dimension_numbers<[1], [1], [0], [0], [0, 0, 1, 0], [], []>} : vector<8x128xbf16>, vector<8x128xbf16>, vector<8x8xf32> -> vector<8x8xf32>
    %36 = tpu.concatenate %7, %11, %15, %19, %23, %27, %31, %35 in 0 : vector<8x8xf32>, vector<8x8xf32>, vector<8x8xf32>, vector<8x8xf32>, vector<8x8xf32>, vector<8x8xf32>, vector<8x8xf32>, vector<8x8xf32> -> vector<64x8xf32>
    %cst_11 = arith.constant dense<0xFF800000> : vector<64xf32>
    %37 = vector.multi_reduction <maximumf>, %36, %cst_11 [1] : vector<64x8xf32> to vector<64xf32>
    %38 = vector.shape_cast %37 : vector<64xf32> to vector<64x1xf32>
    %39 = vector.broadcast %38 : vector<64x1xf32> to vector<64x8xf32>
    %40 = arith.subf %36, %39 : vector<64x8xf32>
    %41 = math.exp %40 : vector<64x8xf32>
    %cst_12 = arith.constant dense<0.000000e+00> : vector<64xf32>
    %42 = vector.multi_reduction <add>, %41, %cst_12 [1] : vector<64x8xf32> to vector<64xf32>
    %43 = vector.shape_cast %42 : vector<64xf32> to vector<64x1xf32>
    %44 = tpu.reciprocal %43 {approx = true} : vector<64x1xf32> -> vector<64x1xf32>
    %45 = vector.broadcast %44 : vector<64x1xf32> to vector<64x8xf32>
    %46 = arith.mulf %41, %45 : vector<64x8xf32>
    %47 = vector.extract_strided_slice %46 {offsets = [0, 0], sizes = [8, 8], strides = [1, 1]} : vector<64x8xf32> to vector<8x8xf32>
    %48 = arith.truncf %47 : vector<8x8xf32> to vector<8x8xbf16>
    %cst_13 = arith.constant dense<0.000000e+00> : vector<8x128xf32>
    %49 = tpu.matmul %48, %6, %cst_13 {dimension_numbers = #tpu.dot_dimension_numbers<[1], [0], [0], [1], [0, 0, 1, 1], [], []>} : vector<8x8xbf16>, vector<8x128xbf16>, vector<8x128xf32> -> vector<8x128xf32>
    %50 = vector.extract_strided_slice %46 {offsets = [8, 0], sizes = [8, 8], strides = [1, 1]} : vector<64x8xf32> to vector<8x8xf32>
    %51 = arith.truncf %50 : vector<8x8xf32> to vector<8x8xbf16>
    %cst_14 = arith.constant dense<0.000000e+00> : vector<8x128xf32>
    %52 = tpu.matmul %51, %10, %cst_14 {dimension_numbers = #tpu.dot_dimension_numbers<[1], [0], [0], [1], [0, 0, 1, 1], [], []>} : vector<8x8xbf16>, vector<8x128xbf16>, vector<8x128xf32> -> vector<8x128xf32>
    %53 = vector.extract_strided_slice %46 {offsets = [16, 0], sizes = [8, 8], strides = [1, 1]} : vector<64x8xf32> to vector<8x8xf32>
    %54 = arith.truncf %53 : vector<8x8xf32> to vector<8x8xbf16>
    %cst_15 = arith.constant dense<0.000000e+00> : vector<8x128xf32>
    %55 = tpu.matmul %54, %14, %cst_15 {dimension_numbers = #tpu.dot_dimension_numbers<[1], [0], [0], [1], [0, 0, 1, 1], [], []>} : vector<8x8xbf16>, vector<8x128xbf16>, vector<8x128xf32> -> vector<8x128xf32>
    %56 = vector.extract_strided_slice %46 {offsets = [24, 0], sizes = [8, 8], strides = [1, 1]} : vector<64x8xf32> to vector<8x8xf32>
    %57 = arith.truncf %56 : vector<8x8xf32> to vector<8x8xbf16>
    %cst_16 = arith.constant dense<0.000000e+00> : vector<8x128xf32>
    %58 = tpu.matmul %57, %18, %cst_16 {dimension_numbers = #tpu.dot_dimension_numbers<[1], [0], [0], [1], [0, 0, 1, 1], [], []>} : vector<8x8xbf16>, vector<8x128xbf16>, vector<8x128xf32> -> vector<8x128xf32>
    %59 = vector.extract_strided_slice %46 {offsets = [32, 0], sizes = [8, 8], strides = [1, 1]} : vector<64x8xf32> to vector<8x8xf32>
    %60 = arith.truncf %59 : vector<8x8xf32> to vector<8x8xbf16>
    %cst_17 = arith.constant dense<0.000000e+00> : vector<8x128xf32>
    %61 = tpu.matmul %60, %22, %cst_17 {dimension_numbers = #tpu.dot_dimension_numbers<[1], [0], [0], [1], [0, 0, 1, 1], [], []>} : vector<8x8xbf16>, vector<8x128xbf16>, vector<8x128xf32> -> vector<8x128xf32>
    %62 = vector.extract_strided_slice %46 {offsets = [40, 0], sizes = [8, 8], strides = [1, 1]} : vector<64x8xf32> to vector<8x8xf32>
    %63 = arith.truncf %62 : vector<8x8xf32> to vector<8x8xbf16>
    %cst_18 = arith.constant dense<0.000000e+00> : vector<8x128xf32>
    %64 = tpu.matmul %63, %26, %cst_18 {dimension_numbers = #tpu.dot_dimension_numbers<[1], [0], [0], [1], [0, 0, 1, 1], [], []>} : vector<8x8xbf16>, vector<8x128xbf16>, vector<8x128xf32> -> vector<8x128xf32>
    %65 = vector.extract_strided_slice %46 {offsets = [48, 0], sizes = [8, 8], strides = [1, 1]} : vector<64x8xf32> to vector<8x8xf32>
    %66 = arith.truncf %65 : vector<8x8xf32> to vector<8x8xbf16>
    %cst_19 = arith.constant dense<0.000000e+00> : vector<8x128xf32>
    %67 = tpu.matmul %66, %30, %cst_19 {dimension_numbers = #tpu.dot_dimension_numbers<[1], [0], [0], [1], [0, 0, 1, 1], [], []>} : vector<8x8xbf16>, vector<8x128xbf16>, vector<8x128xf32> -> vector<8x128xf32>
    %68 = vector.extract_strided_slice %46 {offsets = [56, 0], sizes = [8, 8], strides = [1, 1]} : vector<64x8xf32> to vector<8x8xf32>
    %69 = arith.truncf %68 : vector<8x8xf32> to vector<8x8xbf16>
    %cst_20 = arith.constant dense<0.000000e+00> : vector<8x128xf32>
    %70 = tpu.matmul %69, %34, %cst_20 {dimension_numbers = #tpu.dot_dimension_numbers<[1], [0], [0], [1], [0, 0, 1, 1], [], []>} : vector<8x8xbf16>, vector<8x128xbf16>, vector<8x128xf32> -> vector<8x128xf32>
    %71 = tpu.concatenate %49, %52, %55, %58, %61, %64, %67, %70 in 1 : vector<8x128xf32>, vector<8x128xf32>, vector<8x128xf32>, vector<8x128xf32>, vector<8x128xf32>, vector<8x128xf32>, vector<8x128xf32>, vector<8x128xf32> -> vector<8x1024xf32>
    %72 = vector.extract_strided_slice %3 {offsets = [8, 0], sizes = [8, 128], strides = [1, 1]} : vector<16x3072xbf16> to vector<8x128xbf16>
    %73 = vector.extract_strided_slice %3 {offsets = [8, 1024], sizes = [8, 128], strides = [1, 1]} : vector<16x3072xbf16> to vector<8x128xbf16>
    %74 = vector.extract_strided_slice %3 {offsets = [8, 2048], sizes = [8, 128], strides = [1, 1]} : vector<16x3072xbf16> to vector<8x128xbf16>
    %cst_21 = arith.constant dense<0.000000e+00> : vector<8x8xf32>
    %75 = tpu.matmul %72, %73, %cst_21 {dimension_numbers = #tpu.dot_dimension_numbers<[1], [1], [0], [0], [0, 0, 1, 0], [], []>} : vector<8x128xbf16>, vector<8x128xbf16>, vector<8x8xf32> -> vector<8x8xf32>
    %76 = vector.extract_strided_slice %3 {offsets = [8, 128], sizes = [8, 128], strides = [1, 1]} : vector<16x3072xbf16> to vector<8x128xbf16>
    %77 = vector.extract_strided_slice %3 {offsets = [8, 1152], sizes = [8, 128], strides = [1, 1]} : vector<16x3072xbf16> to vector<8x128xbf16>
    %78 = vector.extract_strided_slice %3 {offsets = [8, 2176], sizes = [8, 128], strides = [1, 1]} : vector<16x3072xbf16> to vector<8x128xbf16>
    %cst_22 = arith.constant dense<0.000000e+00> : vector<8x8xf32>
    %79 = tpu.matmul %76, %77, %cst_22 {dimension_numbers = #tpu.dot_dimension_numbers<[1], [1], [0], [0], [0, 0, 1, 0], [], []>} : vector<8x128xbf16>, vector<8x128xbf16>, vector<8x8xf32> -> vector<8x8xf32>
    %80 = vector.extract_strided_slice %3 {offsets = [8, 256], sizes = [8, 128], strides = [1, 1]} : vector<16x3072xbf16> to vector<8x128xbf16>
    %81 = vector.extract_strided_slice %3 {offsets = [8, 1280], sizes = [8, 128], strides = [1, 1]} : vector<16x3072xbf16> to vector<8x128xbf16>
    %82 = vector.extract_strided_slice %3 {offsets = [8, 2304], sizes = [8, 128], strides = [1, 1]} : vector<16x3072xbf16> to vector<8x128xbf16>
    %cst_23 = arith.constant dense<0.000000e+00> : vector<8x8xf32>
    %83 = tpu.matmul %80, %81, %cst_23 {dimension_numbers = #tpu.dot_dimension_numbers<[1], [1], [0], [0], [0, 0, 1, 0], [], []>} : vector<8x128xbf16>, vector<8x128xbf16>, vector<8x8xf32> -> vector<8x8xf32>
    %84 = vector.extract_strided_slice %3 {offsets = [8, 384], sizes = [8, 128], strides = [1, 1]} : vector<16x3072xbf16> to vector<8x128xbf16>
    %85 = vector.extract_strided_slice %3 {offsets = [8, 1408], sizes = [8, 128], strides = [1, 1]} : vector<16x3072xbf16> to vector<8x128xbf16>
    %86 = vector.extract_strided_slice %3 {offsets = [8, 2432], sizes = [8, 128], strides = [1, 1]} : vector<16x3072xbf16> to vector<8x128xbf16>
    %cst_24 = arith.constant dense<0.000000e+00> : vector<8x8xf32>
    %87 = tpu.matmul %84, %85, %cst_24 {dimension_numbers = #tpu.dot_dimension_numbers<[1], [1], [0], [0], [0, 0, 1, 0], [], []>} : vector<8x128xbf16>, vector<8x128xbf16>, vector<8x8xf32> -> vector<8x8xf32>
    %88 = vector.extract_strided_slice %3 {offsets = [8, 512], sizes = [8, 128], strides = [1, 1]} : vector<16x3072xbf16> to vector<8x128xbf16>
    %89 = vector.extract_strided_slice %3 {offsets = [8, 1536], sizes = [8, 128], strides = [1, 1]} : vector<16x3072xbf16> to vector<8x128xbf16>
    %90 = vector.extract_strided_slice %3 {offsets = [8, 2560], sizes = [8, 128], strides = [1, 1]} : vector<16x3072xbf16> to vector<8x128xbf16>
    %cst_25 = arith.constant dense<0.000000e+00> : vector<8x8xf32>
    %91 = tpu.matmul %88, %89, %cst_25 {dimension_numbers = #tpu.dot_dimension_numbers<[1], [1], [0], [0], [0, 0, 1, 0], [], []>} : vector<8x128xbf16>, vector<8x128xbf16>, vector<8x8xf32> -> vector<8x8xf32>
    %92 = vector.extract_strided_slice %3 {offsets = [8, 640], sizes = [8, 128], strides = [1, 1]} : vector<16x3072xbf16> to vector<8x128xbf16>
    %93 = vector.extract_strided_slice %3 {offsets = [8, 1664], sizes = [8, 128], strides = [1, 1]} : vector<16x3072xbf16> to vector<8x128xbf16>
    %94 = vector.extract_strided_slice %3 {offsets = [8, 2688], sizes = [8, 128], strides = [1, 1]} : vector<16x3072xbf16> to vector<8x128xbf16>
    %cst_26 = arith.constant dense<0.000000e+00> : vector<8x8xf32>
    %95 = tpu.matmul %92, %93, %cst_26 {dimension_numbers = #tpu.dot_dimension_numbers<[1], [1], [0], [0], [0, 0, 1, 0], [], []>} : vector<8x128xbf16>, vector<8x128xbf16>, vector<8x8xf32> -> vector<8x8xf32>
    %96 = vector.extract_strided_slice %3 {offsets = [8, 768], sizes = [8, 128], strides = [1, 1]} : vector<16x3072xbf16> to vector<8x128xbf16>
    %97 = vector.extract_strided_slice %3 {offsets = [8, 1792], sizes = [8, 128], strides = [1, 1]} : vector<16x3072xbf16> to vector<8x128xbf16>
    %98 = vector.extract_strided_slice %3 {offsets = [8, 2816], sizes = [8, 128], strides = [1, 1]} : vector<16x3072xbf16> to vector<8x128xbf16>
    %cst_27 = arith.constant dense<0.000000e+00> : vector<8x8xf32>
    %99 = tpu.matmul %96, %97, %cst_27 {dimension_numbers = #tpu.dot_dimension_numbers<[1], [1], [0], [0], [0, 0, 1, 0], [], []>} : vector<8x128xbf16>, vector<8x128xbf16>, vector<8x8xf32> -> vector<8x8xf32>
    %100 = vector.extract_strided_slice %3 {offsets = [8, 896], sizes = [8, 128], strides = [1, 1]} : vector<16x3072xbf16> to vector<8x128xbf16>
    %101 = vector.extract_strided_slice %3 {offsets = [8, 1920], sizes = [8, 128], strides = [1, 1]} : vector<16x3072xbf16> to vector<8x128xbf16>
    %102 = vector.extract_strided_slice %3 {offsets = [8, 2944], sizes = [8, 128], strides = [1, 1]} : vector<16x3072xbf16> to vector<8x128xbf16>
    %cst_28 = arith.constant dense<0.000000e+00> : vector<8x8xf32>
    %103 = tpu.matmul %100, %101, %cst_28 {dimension_numbers = #tpu.dot_dimension_numbers<[1], [1], [0], [0], [0, 0, 1, 0], [], []>} : vector<8x128xbf16>, vector<8x128xbf16>, vector<8x8xf32> -> vector<8x8xf32>
    %104 = tpu.concatenate %75, %79, %83, %87, %91, %95, %99, %103 in 0 : vector<8x8xf32>, vector<8x8xf32>, vector<8x8xf32>, vector<8x8xf32>, vector<8x8xf32>, vector<8x8xf32>, vector<8x8xf32>, vector<8x8xf32> -> vector<64x8xf32>
    %cst_29 = arith.constant dense<0xFF800000> : vector<64xf32>
    %105 = vector.multi_reduction <maximumf>, %104, %cst_29 [1] : vector<64x8xf32> to vector<64xf32>
    %106 = vector.shape_cast %105 : vector<64xf32> to vector<64x1xf32>
    %107 = vector.broadcast %106 : vector<64x1xf32> to vector<64x8xf32>
    %108 = arith.subf %104, %107 : vector<64x8xf32>
    %109 = math.exp %108 : vector<64x8xf32>
    %cst_30 = arith.constant dense<0.000000e+00> : vector<64xf32>
    %110 = vector.multi_reduction <add>, %109, %cst_30 [1] : vector<64x8xf32> to vector<64xf32>
    %111 = vector.shape_cast %110 : vector<64xf32> to vector<64x1xf32>
    %112 = tpu.reciprocal %111 {approx = true} : vector<64x1xf32> -> vector<64x1xf32>
    %113 = vector.broadcast %112 : vector<64x1xf32> to vector<64x8xf32>
    %114 = arith.mulf %109, %113 : vector<64x8xf32>
    %115 = vector.extract_strided_slice %114 {offsets = [0, 0], sizes = [8, 8], strides = [1, 1]} : vector<64x8xf32> to vector<8x8xf32>
    %116 = arith.truncf %115 : vector<8x8xf32> to vector<8x8xbf16>
    %cst_31 = arith.constant dense<0.000000e+00> : vector<8x128xf32>
    %117 = tpu.matmul %116, %74, %cst_31 {dimension_numbers = #tpu.dot_dimension_numbers<[1], [0], [0], [1], [0, 0, 1, 1], [], []>} : vector<8x8xbf16>, vector<8x128xbf16>, vector<8x128xf32> -> vector<8x128xf32>
    %118 = vector.extract_strided_slice %114 {offsets = [8, 0], sizes = [8, 8], strides = [1, 1]} : vector<64x8xf32> to vector<8x8xf32>
    %119 = arith.truncf %118 : vector<8x8xf32> to vector<8x8xbf16>
    %cst_32 = arith.constant dense<0.000000e+00> : vector<8x128xf32>
    %120 = tpu.matmul %119, %78, %cst_32 {dimension_numbers = #tpu.dot_dimension_numbers<[1], [0], [0], [1], [0, 0, 1, 1], [], []>} : vector<8x8xbf16>, vector<8x128xbf16>, vector<8x128xf32> -> vector<8x128xf32>
    %121 = vector.extract_strided_slice %114 {offsets = [16, 0], sizes = [8, 8], strides = [1, 1]} : vector<64x8xf32> to vector<8x8xf32>
    %122 = arith.truncf %121 : vector<8x8xf32> to vector<8x8xbf16>
    %cst_33 = arith.constant dense<0.000000e+00> : vector<8x128xf32>
    %123 = tpu.matmul %122, %82, %cst_33 {dimension_numbers = #tpu.dot_dimension_numbers<[1], [0], [0], [1], [0, 0, 1, 1], [], []>} : vector<8x8xbf16>, vector<8x128xbf16>, vector<8x128xf32> -> vector<8x128xf32>
    %124 = vector.extract_strided_slice %114 {offsets = [24, 0], sizes = [8, 8], strides = [1, 1]} : vector<64x8xf32> to vector<8x8xf32>
    %125 = arith.truncf %124 : vector<8x8xf32> to vector<8x8xbf16>
    %cst_34 = arith.constant dense<0.000000e+00> : vector<8x128xf32>
    %126 = tpu.matmul %125, %86, %cst_34 {dimension_numbers = #tpu.dot_dimension_numbers<[1], [0], [0], [1], [0, 0, 1, 1], [], []>} : vector<8x8xbf16>, vector<8x128xbf16>, vector<8x128xf32> -> vector<8x128xf32>
    %127 = vector.extract_strided_slice %114 {offsets = [32, 0], sizes = [8, 8], strides = [1, 1]} : vector<64x8xf32> to vector<8x8xf32>
    %128 = arith.truncf %127 : vector<8x8xf32> to vector<8x8xbf16>
    %cst_35 = arith.constant dense<0.000000e+00> : vector<8x128xf32>
    %129 = tpu.matmul %128, %90, %cst_35 {dimension_numbers = #tpu.dot_dimension_numbers<[1], [0], [0], [1], [0, 0, 1, 1], [], []>} : vector<8x8xbf16>, vector<8x128xbf16>, vector<8x128xf32> -> vector<8x128xf32>
    %130 = vector.extract_strided_slice %114 {offsets = [40, 0], sizes = [8, 8], strides = [1, 1]} : vector<64x8xf32> to vector<8x8xf32>
    %131 = arith.truncf %130 : vector<8x8xf32> to vector<8x8xbf16>
    %cst_36 = arith.constant dense<0.000000e+00> : vector<8x128xf32>
    %132 = tpu.matmul %131, %94, %cst_36 {dimension_numbers = #tpu.dot_dimension_numbers<[1], [0], [0], [1], [0, 0, 1, 1], [], []>} : vector<8x8xbf16>, vector<8x128xbf16>, vector<8x128xf32> -> vector<8x128xf32>
    %133 = vector.extract_strided_slice %114 {offsets = [48, 0], sizes = [8, 8], strides = [1, 1]} : vector<64x8xf32> to vector<8x8xf32>
    %134 = arith.truncf %133 : vector<8x8xf32> to vector<8x8xbf16>
    %cst_37 = arith.constant dense<0.000000e+00> : vector<8x128xf32>
    %135 = tpu.matmul %134, %98, %cst_37 {dimension_numbers = #tpu.dot_dimension_numbers<[1], [0], [0], [1], [0, 0, 1, 1], [], []>} : vector<8x8xbf16>, vector<8x128xbf16>, vector<8x128xf32> -> vector<8x128xf32>
    %136 = vector.extract_strided_slice %114 {offsets = [56, 0], sizes = [8, 8], strides = [1, 1]} : vector<64x8xf32> to vector<8x8xf32>
    %137 = arith.truncf %136 : vector<8x8xf32> to vector<8x8xbf16>
    %cst_38 = arith.constant dense<0.000000e+00> : vector<8x128xf32>
    %138 = tpu.matmul %137, %102, %cst_38 {dimension_numbers = #tpu.dot_dimension_numbers<[1], [0], [0], [1], [0, 0, 1, 1], [], []>} : vector<8x8xbf16>, vector<8x128xbf16>, vector<8x128xf32> -> vector<8x128xf32>
    %139 = tpu.concatenate %117, %120, %123, %126, %129, %132, %135, %138 in 1 : vector<8x128xf32>, vector<8x128xf32>, vector<8x128xf32>, vector<8x128xf32>, vector<8x128xf32>, vector<8x128xf32>, vector<8x128xf32>, vector<8x128xf32> -> vector<8x1024xf32>
    %140 = tpu.concatenate %71, %139 in 0 : vector<8x1024xf32>, vector<8x1024xf32> -> vector<16x1024xf32>
    %141 = arith.truncf %140 : vector<16x1024xf32> to vector<16x1024xbf16>
    %c0_39 = arith.constant 0 : index
    %c0_40 = arith.constant 0 : index
    %142 = vector.load %arg3[%c0_39, %c0_40] : memref<1024x128xbf16, #tpu.memory_space<vmem>>, vector<1024x128xbf16>
    %cst_41 = arith.constant dense<0.000000e+00> : vector<16x128xf32>
    %143 = tpu.matmul %141, %142, %cst_41 {dimension_numbers = #tpu.dot_dimension_numbers<[1], [0], [0], [1], [0, 0, 1, 1], [], []>} : vector<16x1024xbf16>, vector<1024x128xbf16>, vector<16x128xf32> -> vector<16x128xf32>
    %c0_42 = arith.constant 0 : index
    %c0_43 = arith.constant 0 : index
    %144 = vector.load %arg4[%c0_42, %c0_43] : memref<1x128xf32, #tpu.memory_space<vmem>>, vector<1x128xf32>
    %145 = vector.broadcast %144 : vector<1x128xf32> to vector<16x128xf32>
    %146 = arith.addf %143, %145 : vector<16x128xf32>
    %c0_44 = arith.constant 0 : index
    %c0_45 = arith.constant 0 : index
    %147 = vector.load %arg5[%c0_44, %c0_45] : memref<16x128xf32, #tpu.memory_space<vmem>>, vector<16x128xf32>
    tpu.vector_store %arg5[%c0_44, %c0_45], %146 {strides = array<i32>} : memref<16x128xf32, #tpu.memory_space<vmem>>, vector<16x128xf32>,
    return
  }
  func.func @transform_0(%arg0: i32) -> (i32, i32) {
    %c0_i32 = arith.constant 0 : i32
    %c0_i32_0 = arith.constant 0 : i32
    return %arg0, %c0_i32 : i32, i32
  }
  func.func @transform_1(%arg0: i32) -> (i32, i32) {
    %c0_i32 = arith.constant 0 : i32
    %c0_i32_0 = arith.constant 0 : i32
    %c0_i32_1 = arith.constant 0 : i32
    return %c0_i32, %c0_i32_0 : i32, i32
  }
  func.func @transform_2(%arg0: i32) -> (i32, i32) {
    %c0_i32 = arith.constant 0 : i32
    %c0_i32_0 = arith.constant 0 : i32
    %c0_i32_1 = arith.constant 0 : i32
    return %c0_i32, %c0_i32_0 : i32, i32
  }
  func.func @transform_3(%arg0: i32) -> (i32, i32) {
    %c0_i32 = arith.constant 0 : i32
    %c0_i32_0 = arith.constant 0 : i32
    %c0_i32_1 = arith.constant 0 : i32
    return %c0_i32, %c0_i32_0 : i32, i32
  }
  func.func @transform_4(%arg0: i32) -> (i32, i32) {
    %c0_i32 = arith.constant 0 : i32
    %c0_i32_0 = arith.constant 0 : i32
    return %arg0, %c0_i32 : i32, i32
  }
}

</mosaic_0001>

<llo_original>
// kernel: tpu_custom_call.1
$region0: #{tpu_custom_call.1}
  #allocation0 [shape = 'u32[]', space=smem, size = 0x4, offset = 0x4, fixed_abs, tag = 'smem constant byte address 0x4 - core index']
  #allocation1 [shape = 'u32[144,128]{1,0:T(1,128)}', space=vmem, size = 0x12000, scoped, tag = 'internal scratch']
  %s0 = inlined_call_operand.hbm [shape: bf16[32,32], index: 0, kind: input, shape index: {}]
  %s1 = inlined_call_operand.hbm [shape: bf16[32,3072], index: 1, kind: input, shape index: {}]
  %s2 = inlined_call_operand.hbm [shape: bf16[1024,128], index: 2, kind: input, shape index: {}]
  %s3 = inlined_call_operand.vmem [shape: f32[1,128], index: 3, kind: input, shape index: {}]
  %s4 = inlined_call_operand.hbm [shape: f32[32,128], index: 4, kind: output, shape index: {}]
  %s5 = sld [smem:[#allocation0]]
  $region61: #{tpu_custom_call.1} parent=0
    _
  %s7 = ssub.s32 1, %s5
  %s8 = scalar_select 0, %s7, %s5
  $region1: #{tpu_custom_call.1} parent=0
    #allocation2 [shape = 'u8[8192]{0}', space=vmem, size = 0x2000, scoped, tag = 'input window, operand 0']
    #allocation3 [shape = 's32[2]{0}', space=sflag, size = 0x8, scoped, tag = 'scoped memory for tpu_custom_call.1']
    #allocation4 [shape = 's32[2]{0}', space=sflag, size = 0x8, scoped, tag = 'scoped memory for tpu_custom_call.1']
    #allocation5 [shape = 'u8[196608]{0}', space=vmem, size = 0x30000, scoped, tag = 'input window, operand 1, single buffered']
    #allocation6 [shape = 's32[1]{0}', space=sflag, size = 0x4, scoped, tag = 'scoped memory for tpu_custom_call.1']
    #allocation7 [shape = 'u8[262144]{0}', space=vmem, size = 0x40000, scoped, tag = 'input window, operand 2, single buffered']
    #allocation8 [shape = 'u8[16384]{0}', space=vmem, size = 0x4000, scoped, tag = 'output window, operand 0']
    %9 = vsyncpa [#allocation3], 0
    %s10 = scalar_lea.sflag [#allocation3], 1
    %11 = vsyncpa %s10, 0
    %12 = vsyncpa [#allocation6], 0
    %13 = vsyncpa [#allocation4], 0
    %s14 = scalar_lea.sflag [#allocation4], 1
    %15 = vsyncpa %s14, 0
    loop: start=0, step=1, limit=4
    $region2: #{tpu_custom_call.1} parent=1 // loop_pre_header
      _
    $region3: #{tpu_custom_call.1} parent=1 // loop_header
      %s17 = sphi 0, %s21
      %p18 = scmp.ge.s32.totalorder %s17, 4
      %s27 = sphi 0, %s29
      %s30 = sphi 0, %s27
      %s31 = sphi 0, %s30
      %s47 = sphi 0, %s31
      %s51 = sphi 0, %s51
      %s53 = sphi 0, %s51
      %s54 = sphi 0, %s53
      %s68 = sphi 0, %s54
      %s72 = sphi 0, %s72
      %s74 = sphi 0, %s72
      %s75 = sphi 0, %s74
      %s89 = sphi 0, %s75
      %s93 = sphi 0, %s93
      %s95 = sphi 0, %s93
      %s96 = sphi 0, %s95
      %s110 = sphi 0, %s96
      %s116 = sphi 0, %s118
      %s119 = sphi 0, %s116
      %s120 = sphi 0, %s119
      %s136 = sphi 0, %s120
    $region4: #{tpu_custom_call.1} parent=1 // loop_header_branch
      %20 = sbr.rel (%p18) target = $region8
    $region5: #{tpu_custom_call.1} parent=1 // loop_body
      %s22 = ssub.s32 %s17, 1
      %s23 = ssub.s32 %s17, 2
      %s24 = sadd.s32 %s17, 1
      %s25 = ssub.s32 %s17, %s24
      %p26 = scmp.eq.s32.totalorder %s25, 0
      %s28 = sadd.s32 %s27, 1
      %s29 = scalar_select %p26, %s27, %s28
      %p32 = pneg %p26
      %p33 = scmp.eq.s32.totalorder %s17, 1
      %p34 = por %p32, %p33
      %p35 = scmp.ne.s32.totalorder %s27, %s30
      %p36 = scmp.eq.s32.totalorder %s17, 0
      %p37 = por %p35, %p36
      %p38 = scmp.ne.s32.totalorder %s27, %s30
      %p39 = scmp.eq.s32.totalorder %s22, 1
      %p40 = por %p38, %p39
      %p41 = scmp.ne.s32.totalorder %s30, %s31
      %p42 = scmp.eq.s32.totalorder %s22, 0
      %p43 = por %p41, %p42
      %p44 = scmp.ne.s32.totalorder %s30, %s31
      %p45 = scmp.eq.s32.totalorder %s23, 1
      %p46 = por %p44, %p45
      %p48 = scmp.ne.s32.totalorder %s31, %s47
      %p49 = scmp.eq.s32.totalorder %s23, 0
      %p50 = por %p48, %p49
      %s52 = sadd.s32 %s51, 1
      %p55 = scmp.eq.s32.totalorder %s17, 1
      %p56 = scmp.ne.s32.totalorder %s51, %s53
      %p57 = scmp.eq.s32.totalorder %s17, 0
      %p58 = por %p56, %p57
      %p59 = scmp.ne.s32.totalorder %s51, %s53
      %p60 = scmp.eq.s32.totalorder %s22, 1
      %p61 = por %p59, %p60
      %p62 = scmp.ne.s32.totalorder %s53, %s54
      %p63 = scmp.eq.s32.totalorder %s22, 0
      %p64 = por %p62, %p63
      %p65 = scmp.ne.s32.totalorder %s53, %s54
      %p66 = scmp.eq.s32.totalorder %s23, 1
      %p67 = por %p65, %p66
      %p69 = scmp.ne.s32.totalorder %s54, %s68
      %p70 = scmp.eq.s32.totalorder %s23, 0
      %p71 = por %p69, %p70
      %s73 = sadd.s32 %s72, 1
      %p76 = scmp.eq.s32.totalorder %s17, 1
      %p77 = scmp.ne.s32.totalorder %s72, %s74
      %p78 = scmp.eq.s32.totalorder %s17, 0
      %p79 = por %p77, %p78
      %p80 = scmp.ne.s32.totalorder %s72, %s74
      %p81 = scmp.eq.s32.totalorder %s22, 1
      %p82 = por %p80, %p81
      %p83 = scmp.ne.s32.totalorder %s74, %s75
      %p84 = scmp.eq.s32.totalorder %s22, 0
      %p85 = por %p83, %p84
      %p86 = scmp.ne.s32.totalorder %s74, %s75
      %p87 = scmp.eq.s32.totalorder %s23, 1
      %p88 = por %p86, %p87
      %p90 = scmp.ne.s32.totalorder %s75, %s89
      %p91 = scmp.eq.s32.totalorder %s23, 0
      %p92 = por %p90, %p91
      %s94 = sadd.s32 %s93, 1
      %p97 = scmp.eq.s32.totalorder %s17, 1
      %p98 = scmp.ne.s32.totalorder %s93, %s95
      %p99 = scmp.eq.s32.totalorder %s17, 0
      %p100 = por %p98, %p99
      %p101 = scmp.ne.s32.totalorder %s93, %s95
      %p102 = scmp.eq.s32.totalorder %s22, 1
      %p103 = por %p101, %p102
      %p104 = scmp.ne.s32.totalorder %s95, %s96
      %p105 = scmp.eq.s32.totalorder %s22, 0
      %p106 = por %p104, %p105
      %p107 = scmp.ne.s32.totalorder %s95, %s96
      %p108 = scmp.eq.s32.totalorder %s23, 1
      %p109 = por %p107, %p108
      %p111 = scmp.ne.s32.totalorder %s96, %s110
      %p112 = scmp.eq.s32.totalorder %s23, 0
      %p113 = por %p111, %p112
      %s114 = ssub.s32 %s17, %s24
      %p115 = scmp.eq.s32.totalorder %s114, 0
      %s117 = sadd.s32 %s116, 1
      %s118 = scalar_select %p115, %s116, %s117
      %p121 = pneg %p115
      %p122 = scmp.eq.s32.totalorder %s17, 1
      %p123 = por %p121, %p122
      %p124 = scmp.ne.s32.totalorder %s116, %s119
      %p125 = scmp.eq.s32.totalorder %s17, 0
      %p126 = por %p124, %p125
      %p127 = scmp.ne.s32.totalorder %s116, %s119
      %p128 = scmp.eq.s32.totalorder %s22, 1
      %p129 = por %p127, %p128
      %p130 = scmp.ne.s32.totalorder %s119, %s120
      %p131 = scmp.eq.s32.totalorder %s22, 0
      %p132 = por %p130, %p131
      %p133 = scmp.ne.s32.totalorder %s119, %s120
      %p134 = scmp.eq.s32.totalorder %s23, 1
      %p135 = por %p133, %p134
      %p137 = scmp.ne.s32.totalorder %s120, %s136
      %p138 = scmp.eq.s32.totalorder %s23, 0
      %p139 = por %p137, %p138
      %p140 = scmp.le.s32.totalorder 1, %s17
      %p141 = scmp.lt.s32.totalorder %s17, 3
      %p142 = pnand %p140, %p141
      %p143 = pneg %p142
      // Predicated region
      $region9: #{tpu_custom_call.1} parent=5 // pred_check
        _
      $region10: #{tpu_custom_call.1} parent=5 // pred_check_branch
        %145 = sbr.rel (%p142) target = $region12
      $region11: #{tpu_custom_call.1} parent=5 // pred_region
        %s146 = ssub.s32 %s17, 1
        // Predicated region
        $region13: #{tpu_custom_call.1} parent=11 // pred_check
          %p147 = pneg %p64
        $region14: #{tpu_custom_call.1} parent=11 // pred_check_branch
          %149 = sbr.rel (%p147) target = $region16
        $region15: #{tpu_custom_call.1} parent=11 // pred_region
          %s151 = ssub.s32 6144, 6144
          %152 = vsyncadd [#allocation6], %s151
          %s153 = sshll.u32 [#allocation5], 4
          %s154 = int_to_ptr.vmem [resolvable:$true] %s153
          %159 = dma.hbm_to_vmem [thread:$0]  %s1, 6144, %s154, [#allocation6], 1536, 1536, 96
        $region16: #{tpu_custom_call.1} parent=11 // pred_fallthru
          _
        // Predicated region
        $region17: #{tpu_custom_call.1} parent=11 // pred_check
          %p160 = pneg %p85
        $region18: #{tpu_custom_call.1} parent=11 // pred_check_branch
          %162 = sbr.rel (%p160) target = $region20
        $region19: #{tpu_custom_call.1} parent=11 // pred_region
          %s164 = ssub.s32 8192, 8192
          %165 = vsyncadd [#allocation6], %s164
          %s166 = sshll.u32 [#allocation7], 4
          %s167 = int_to_ptr.vmem [resolvable:$true] %s166
          %172 = dma.hbm_to_vmem [thread:$0]  %s2, 8192, %s167, [#allocation6], 64, 64, 4
        $region20: #{tpu_custom_call.1} parent=11 // pred_fallthru
          _
        // Predicated region
        $region21: #{tpu_custom_call.1} parent=11 // pred_check
          %p173 = pneg %p106
        $region22: #{tpu_custom_call.1} parent=11 // pred_check_branch
          %175 = sbr.rel (%p173) target = $region24
        $region23: #{tpu_custom_call.1} parent=11 // pred_region
          _
        $region24: #{tpu_custom_call.1} parent=11 // pred_fallthru
          _
      $region12: #{tpu_custom_call.1} parent=5 // pred_fallthru
        _
      %p176 = scmp.lt.s32.totalorder %s17, 2
      // Predicated region
      $region25: #{tpu_custom_call.1} parent=5 // pred_check
        %p177 = pneg %p176
      $region26: #{tpu_custom_call.1} parent=5 // pred_check_branch
        %179 = sbr.rel (%p177) target = $region28
      $region27: #{tpu_custom_call.1} parent=5 // pred_region
        // Predicated region
        $region29: #{tpu_custom_call.1} parent=27 // pred_check
          %p180 = pneg %p37
        $region30: #{tpu_custom_call.1} parent=27 // pred_check_branch
          %182 = sbr.rel (%p180) target = $region32
        $region31: #{tpu_custom_call.1} parent=27 // pred_region
          %s183 = sand.u32 %s27, 1
          %s184 = scalar_lea.sflag [#allocation3], %s183
          %s185 = sand.u32 %s27, 1
          %s186 = smul.addr %s185, 8
          %s187 = scalar_lea.vmem [#allocation2], %s186
          %s188 = smul.u32 2, %s17
          %s190 = ssub.s32 128, 128
          %191 = vsyncadd %s184, %s190
          %s192 = smul.addr %s188, 64
          %s193 = scalar_lea.hbm %s0, %s192
          %s194 = sshll.u32 %s187, 4
          %s195 = int_to_ptr.vmem [resolvable:$true] %s194
          %200 = dma.hbm_to_vmem [thread:$0]  %s193, 128, %s195, %s184, 64, 64, 4
        $region32: #{tpu_custom_call.1} parent=27 // pred_fallthru
          _
      $region28: #{tpu_custom_call.1} parent=5 // pred_fallthru
        _
      %p201 = scmp.le.s32.totalorder 1, %s17
      %p202 = scmp.lt.s32.totalorder %s17, 3
      %p203 = pnand %p201, %p202
      %p204 = pneg %p203
      // Predicated region
      $region33: #{tpu_custom_call.1} parent=5 // pred_check
        _
      $region34: #{tpu_custom_call.1} parent=5 // pred_check_branch
        %206 = sbr.rel (%p203) target = $region36
      $region35: #{tpu_custom_call.1} parent=5 // pred_region
        %s207 = ssub.s32 %s17, 1
        %s208 = sand.u32 %s30, 1
        %s209 = scalar_lea.sflag [#allocation3], %s208
        %s210 = sand.u32 %s30, 1
        %s211 = smul.addr %s210, 8
        %s212 = scalar_lea.vmem [#allocation2], %s211
        // Predicated region
        $region37: #{tpu_custom_call.1} parent=35 // pred_check
          %p213 = pneg %p43
        $region38: #{tpu_custom_call.1} parent=35 // pred_check_branch
          %215 = sbr.rel (%p213) target = $region40
        $region39: #{tpu_custom_call.1} parent=35 // pred_region
          %216 = dma.done %s209, 128
        $region40: #{tpu_custom_call.1} parent=35 // pred_fallthru
          _
        // Predicated region
        $region41: #{tpu_custom_call.1} parent=35 // pred_check
          %p217 = pneg %p64
        $region42: #{tpu_custom_call.1} parent=35 // pred_check_branch
          %219 = sbr.rel (%p217) target = $region44
        $region43: #{tpu_custom_call.1} parent=35 // pred_region
          %220 = dma.done [#allocation6], 6144
        $region44: #{tpu_custom_call.1} parent=35 // pred_fallthru
          _
        // Predicated region
        $region45: #{tpu_custom_call.1} parent=35 // pred_check
          %p221 = pneg %p85
        $region46: #{tpu_custom_call.1} parent=35 // pred_check_branch
          %223 = sbr.rel (%p221) target = $region48
        $region47: #{tpu_custom_call.1} parent=35 // pred_region
          %224 = dma.done [#allocation6], 8192
        $region48: #{tpu_custom_call.1} parent=35 // pred_fallthru
          _
        %s225 = sand.u32 %s30, 1
        %s226 = scalar_lea.sflag [#allocation3], %s225
        %s227 = sand.u32 %s30, 1
        %s228 = smul.addr %s227, 8
        %s229 = scalar_lea.vmem [#allocation2], %s228
        %p230 = pneg %p43
        %p231 = pneg %p40
        %p232 = pneg %p64
        %p233 = pneg %p61
        %p234 = pneg %p85
        %p235 = pneg %p82
        %p236 = pneg %p106
        %p237 = pneg %p103
        %p238 = pneg %p132
        %p239 = pneg %p129
        %s240 = sand.u32 %s119, 1
        %s241 = scalar_lea.sflag [#allocation4], %s240
        %s242 = sand.u32 %s119, 1
        %s243 = smul.addr %s242, 16
        %s244 = scalar_lea.vmem [#allocation8], %s243
        %s245 = smul.u32 2, %s22
        %s246 = smul.u32 2, %s22
        %v248 = vld [vmem:[%s212] sm:$0xf]
        %v249 = vld [vmem:[%s212 + $0x4] sm:$0xf]
        %v250 = vld [vmem:[#allocation5] sm:$0xff]
        %v251 = vld [vmem:[#allocation5 + $0x8] sm:$0xff]
        %v252 = vld [vmem:[#allocation5 + $0x10] sm:$0xff]
        %v253 = vld [vmem:[#allocation5 + $0x18] sm:$0xff]
        %v254 = vld [vmem:[#allocation5 + $0x20] sm:$0xff]
        %v255 = vld [vmem:[#allocation5 + $0x28] sm:$0xff]
        %v256 = vld [vmem:[#allocation5 + $0x30] sm:$0xff]
        %v257 = vld [vmem:[#allocation5 + $0x38] sm:$0xff]
        %v258 = vld [vmem:[#allocation5 + $0x40] sm:$0xff]
        %v259 = vld [vmem:[#allocation5 + $0x48] sm:$0xff]
        %v260 = vld [vmem:[#allocation5 + $0x50] sm:$0xff]
        %v261 = vld [vmem:[#allocation5 + $0x58] sm:$0xff]
        %v262 = vld [vmem:[#allocation5 + $0x60] sm:$0xff]
        %v263 = vld [vmem:[#allocation5 + $0x68] sm:$0xff]
        %v264 = vld [vmem:[#allocation5 + $0x70] sm:$0xff]
        %v265 = vld [vmem:[#allocation5 + $0x78] sm:$0xff]
        %v266 = vld [vmem:[#allocation5 + $0x80] sm:$0xff]
        %v267 = vld [vmem:[#allocation5 + $0x88] sm:$0xff]
        %v268 = vld [vmem:[#allocation5 + $0x90] sm:$0xff]
        %v269 = vld [vmem:[#allocation5 + $0x98] sm:$0xff]
        %v270 = vld [vmem:[#allocation5 + $0xa0] sm:$0xff]
        %v271 = vld [vmem:[#allocation5 + $0xa8] sm:$0xff]
        %v272 = vld [vmem:[#allocation5 + $0xb0] sm:$0xff]
        %v273 = vld [vmem:[#allocation5 + $0xb8] sm:$0xff]
        %v274 = vld [vmem:[#allocation5 + $0xc0] sm:$0xff]
        %v275 = vld [vmem:[#allocation5 + $0xc8] sm:$0xff]
        %v276 = vld [vmem:[#allocation5 + $0xd0] sm:$0xff]
        %v277 = vld [vmem:[#allocation5 + $0xd8] sm:$0xff]
        %v278 = vld [vmem:[#allocation5 + $0xe0] sm:$0xff]
        %v279 = vld [vmem:[#allocation5 + $0xe8] sm:$0xff]
        %v280 = vld [vmem:[#allocation5 + $0xf0] sm:$0xff]
        %v281 = vld [vmem:[#allocation5 + $0xf8] sm:$0xff]
        %v282 = vld [vmem:[#allocation5 + $0x100] sm:$0xff]
        %v283 = vld [vmem:[#allocation5 + $0x108] sm:$0xff]
        %v284 = vld [vmem:[#allocation5 + $0x110] sm:$0xff]
        %v285 = vld [vmem:[#allocation5 + $0x118] sm:$0xff]
        %v286 = vld [vmem:[#allocation5 + $0x120] sm:$0xff]
        %v287 = vld [vmem:[#allocation5 + $0x128] sm:$0xff]
        %v288 = vld [vmem:[#allocation5 + $0x130] sm:$0xff]
        %v289 = vld [vmem:[#allocation5 + $0x138] sm:$0xff]
        %v290 = vld [vmem:[#allocation5 + $0x140] sm:$0xff]
        %v291 = vld [vmem:[#allocation5 + $0x148] sm:$0xff]
        %v292 = vld [vmem:[#allocation5 + $0x150] sm:$0xff]
        %v293 = vld [vmem:[#allocation5 + $0x158] sm:$0xff]
        %v294 = vld [vmem:[#allocation5 + $0x160] sm:$0xff]
        %v295 = vld [vmem:[#allocation5 + $0x168] sm:$0xff]
        %v296 = vld [vmem:[#allocation5 + $0x170] sm:$0xff]
        %v297 = vld [vmem:[#allocation5 + $0x178] sm:$0xff]
        %v300 = vunpack.c.l.b16 %v248
        %v301 = vunpack.c.l.b16 %v249
        %v302 = vpack.c.b16 %v301, %v300
        %v351 = vunpack.c.l.b16 %v250
        %v352 = vunpack.c.h.b16 %v250
        %v353 = vunpack.c.l.b16 %v251
        %v354 = vunpack.c.h.b16 %v251
        %v355 = vunpack.c.l.b16 %v252
        %v356 = vunpack.c.h.b16 %v252
        %v357 = vunpack.c.l.b16 %v253
        %v358 = vunpack.c.h.b16 %v253
        %v359 = vunpack.c.l.b16 %v254
        %v360 = vunpack.c.h.b16 %v254
        %v361 = vunpack.c.l.b16 %v255
        %v362 = vunpack.c.h.b16 %v255
        %v363 = vunpack.c.l.b16 %v256
        %v364 = vunpack.c.h.b16 %v256
        %v365 = vunpack.c.l.b16 %v257
        %v366 = vunpack.c.h.b16 %v257
        %v367 = vunpack.c.l.b16 %v258
        %v368 = vunpack.c.h.b16 %v258
        %v369 = vunpack.c.l.b16 %v259
        %v370 = vunpack.c.h.b16 %v259
        %v371 = vunpack.c.l.b16 %v260
        %v372 = vunpack.c.h.b16 %v260
        %v373 = vunpack.c.l.b16 %v261
        %v374 = vunpack.c.h.b16 %v261
        %v375 = vunpack.c.l.b16 %v262
        %v376 = vunpack.c.h.b16 %v262
        %v377 = vunpack.c.l.b16 %v263
        %v378 = vunpack.c.h.b16 %v263
        %v379 = vunpack.c.l.b16 %v264
        %v380 = vunpack.c.h.b16 %v264
        %v381 = vunpack.c.l.b16 %v265
        %v382 = vunpack.c.h.b16 %v265
        %v383 = vunpack.c.l.b16 %v266
        %v384 = vunpack.c.h.b16 %v266
        %v385 = vunpack.c.l.b16 %v267
        %v386 = vunpack.c.h.b16 %v267
        %v387 = vunpack.c.l.b16 %v268
        %v388 = vunpack.c.h.b16 %v268
        %v389 = vunpack.c.l.b16 %v269
        %v390 = vunpack.c.h.b16 %v269
        %v391 = vunpack.c.l.b16 %v270
        %v392 = vunpack.c.h.b16 %v270
        %v393 = vunpack.c.l.b16 %v271
        %v394 = vunpack.c.h.b16 %v271
        %v395 = vunpack.c.l.b16 %v272
        %v396 = vunpack.c.h.b16 %v272
        %v397 = vunpack.c.l.b16 %v273
        %v398 = vunpack.c.h.b16 %v273
        %v399 = vunpack.c.l.b16 %v274
        %v400 = vunpack.c.h.b16 %v274
        %v401 = vunpack.c.l.b16 %v275
        %v402 = vunpack.c.h.b16 %v275
        %v403 = vunpack.c.l.b16 %v276
        %v404 = vunpack.c.h.b16 %v276
        %v405 = vunpack.c.l.b16 %v277
        %v406 = vunpack.c.h.b16 %v277
        %v407 = vunpack.c.l.b16 %v278
        %v408 = vunpack.c.h.b16 %v278
        %v409 = vunpack.c.l.b16 %v279
        %v410 = vunpack.c.h.b16 %v279
        %v411 = vunpack.c.l.b16 %v280
        %v412 = vunpack.c.h.b16 %v280
        %v413 = vunpack.c.l.b16 %v281
        %v414 = vunpack.c.h.b16 %v281
        %v415 = vunpack.c.l.b16 %v282
        %v416 = vunpack.c.h.b16 %v282
        %v417 = vunpack.c.l.b16 %v283
        %v418 = vunpack.c.h.b16 %v283
        %v419 = vunpack.c.l.b16 %v284
        %v420 = vunpack.c.h.b16 %v284
        %v421 = vunpack.c.l.b16 %v285
        %v422 = vunpack.c.h.b16 %v285
        %v423 = vunpack.c.l.b16 %v286
        %v424 = vunpack.c.h.b16 %v286
        %v425 = vunpack.c.l.b16 %v287
        %v426 = vunpack.c.h.b16 %v287
        %v427 = vunpack.c.l.b16 %v288
        %v428 = vunpack.c.h.b16 %v288
        %v429 = vunpack.c.l.b16 %v289
        %v430 = vunpack.c.h.b16 %v289
        %v431 = vunpack.c.l.b16 %v290
        %v432 = vunpack.c.h.b16 %v290
        %v433 = vunpack.c.l.b16 %v291
        %v434 = vunpack.c.h.b16 %v291
        %v435 = vunpack.c.l.b16 %v292
        %v436 = vunpack.c.h.b16 %v292
        %v437 = vunpack.c.l.b16 %v293
        %v438 = vunpack.c.h.b16 %v293
        %v439 = vunpack.c.l.b16 %v294
        %v440 = vunpack.c.h.b16 %v294
        %v441 = vunpack.c.l.b16 %v295
        %v442 = vunpack.c.h.b16 %v295
        %v443 = vunpack.c.l.b16 %v296
        %v444 = vunpack.c.h.b16 %v296
        %v445 = vunpack.c.l.b16 %v297
        %v446 = vunpack.c.h.b16 %v297
        %v447 = vpack.c.b16 %v375, %v351
        %v448 = vpack.c.b16 %v376, %v352
        %v449 = vpack.c.b16 %v377, %v353
        %v450 = vpack.c.b16 %v378, %v354
        %v451 = vpack.c.b16 %v379, %v355
        %v452 = vpack.c.b16 %v380, %v356
        %v453 = vpack.c.b16 %v381, %v357
        %v454 = vpack.c.b16 %v382, %v358
        %v455 = vpack.c.b16 %v383, %v359
        %v456 = vpack.c.b16 %v384, %v360
        %v457 = vpack.c.b16 %v385, %v361
        %v458 = vpack.c.b16 %v386, %v362
        %v459 = vpack.c.b16 %v387, %v363
        %v460 = vpack.c.b16 %v388, %v364
        %v461 = vpack.c.b16 %v389, %v365
        %v462 = vpack.c.b16 %v390, %v366
        %v463 = vpack.c.b16 %v391, %v367
        %v464 = vpack.c.b16 %v392, %v368
        %v465 = vpack.c.b16 %v393, %v369
        %v466 = vpack.c.b16 %v394, %v370
        %v467 = vpack.c.b16 %v395, %v371
        %v468 = vpack.c.b16 %v396, %v372
        %v469 = vpack.c.b16 %v397, %v373
        %v470 = vpack.c.b16 %v398, %v374
        %v471 = vpack.c.b16 %v423, %v399
        %v472 = vpack.c.b16 %v424, %v400
        %v473 = vpack.c.b16 %v425, %v401
        %v474 = vpack.c.b16 %v426, %v402
        %v475 = vpack.c.b16 %v427, %v403
        %v476 = vpack.c.b16 %v428, %v404
        %v477 = vpack.c.b16 %v429, %v405
        %v478 = vpack.c.b16 %v430, %v406
        %v479 = vpack.c.b16 %v431, %v407
        %v480 = vpack.c.b16 %v432, %v408
        %v481 = vpack.c.b16 %v433, %v409
        %v482 = vpack.c.b16 %v434, %v410
        %v483 = vpack.c.b16 %v435, %v411
        %v484 = vpack.c.b16 %v436, %v412
        %v485 = vpack.c.b16 %v437, %v413
        %v486 = vpack.c.b16 %v438, %v414
        %v487 = vpack.c.b16 %v439, %v415
        %v488 = vpack.c.b16 %v440, %v416
        %v489 = vpack.c.b16 %v441, %v417
        %v490 = vpack.c.b16 %v442, %v418
        %v491 = vpack.c.b16 %v443, %v419
        %v492 = vpack.c.b16 %v444, %v420
        %v493 = vpack.c.b16 %v445, %v421
        %v494 = vpack.c.b16 %v446, %v422
        %vm543 = vcmask 261120
        %v545 = vsel %vm543, %v302, 0
        %547 = vmatprep.subr.bf16.mxu0 %v448
        %548 = vmatpush1.bf16.msra.mxu0 %v447
        %549 = vmatprep.subr.bf16.mxu0 %v472
        %550 = vmatpush1.bf16.msra.mxu0 %v471
        %551 = vmatprep.subr.bf16.mxu0 0
        %552 = vmatpush1.bf16.msra.mxu0 0
        %553 = vmatprep.subr.bf16.mxu0 0
        %554 = vmatpush1.bf16.msra.mxu0 0
        %555 = vmatprep.subr.bf16.mxu0 0
        %556 = vmatpush1.bf16.msra.mxu0 0
        %557 = vmatprep.subr.bf16.mxu0 0
        %558 = vmatpush1.bf16.msra.mxu0 0
        %559 = vmatprep.subr.bf16.mxu0 0
        %560 = vmatpush1.bf16.msra.mxu0 0
        %561 = vmatprep.subr.bf16.mxu0 0
        %562 = vmatpush1.bf16.msra.mxu0 0
        %563 = vmatprep.subr.bf16.mxu0 0
        %564 = vmatpush1.bf16.msra.mxu0 0
        %565 = vmatprep.subr.bf16.mxu0 0
        %566 = vmatpush1.bf16.msra.mxu0 0
        %567 = vmatprep.subr.bf16.mxu0 0
        %568 = vmatpush1.bf16.msra.mxu0 0
        %569 = vmatprep.subr.bf16.mxu0 0
        %570 = vmatpush1.bf16.msra.mxu0 0
        %571 = vmatprep.subr.bf16.mxu0 0
        %572 = vmatpush1.bf16.msra.mxu0 0
        %573 = vmatprep.subr.bf16.mxu0 0
        %574 = vmatpush1.bf16.msra.mxu0 0
        %575 = vmatprep.subr.bf16.mxu0 0
        %576 = vmatpush1.bf16.msra.mxu0 0
        %577 = vmatprep.subr.bf16.mxu0 0
        %578 = vmatpush1.bf16.msra.mxu0 0
        %579 = vmatprep.mubr.bf16.mxu0 0
        %580 = vmatmul.mubr.bf16.gmra.mrb[0].mxu0 %v545
        %v581 = vpop.f32.mrb[0].mxu0
        %v582 = vadd.f32 0.0, %v581
        %v583 = vpop.f32.mrb[0].mxu0
        %v584 = vadd.f32 0.0, %v583
        %v585 = vpop.f32.mrb[0].mxu0
        %v586 = vadd.f32 0.0, %v585
        %v587 = vpop.f32.mrb[0].mxu0
        %v588 = vadd.f32 0.0, %v587
        %589 = vdwg.mxu0
        %590 = vmatprep.subr.bf16.mxu0 %v450
        %591 = vmatpush1.bf16.msra.mxu0 %v449
        %592 = vmatprep.subr.bf16.mxu0 %v474
        %593 = vmatpush1.bf16.msra.mxu0 %v473
        %594 = vmatprep.subr.bf16.mxu0 0
        %595 = vmatpush1.bf16.msra.mxu0 0
        %596 = vmatprep.subr.bf16.mxu0 0
        %597 = vmatpush1.bf16.msra.mxu0 0
        %598 = vmatprep.subr.bf16.mxu0 0
        %599 = vmatpush1.bf16.msra.mxu0 0
        %600 = vmatprep.subr.bf16.mxu0 0
        %601 = vmatpush1.bf16.msra.mxu0 0
        %602 = vmatprep.subr.bf16.mxu0 0
        %603 = vmatpush1.bf16.msra.mxu0 0
        %604 = vmatprep.subr.bf16.mxu0 0
        %605 = vmatpush1.bf16.msra.mxu0 0
        %606 = vmatprep.subr.bf16.mxu0 0
        %607 = vmatpush1.bf16.msra.mxu0 0
        %608 = vmatprep.subr.bf16.mxu0 0
        %609 = vmatpush1.bf16.msra.mxu0 0
        %610 = vmatprep.subr.bf16.mxu0 0
        %611 = vmatpush1.bf16.msra.mxu0 0
        %612 = vmatprep.subr.bf16.mxu0 0
        %613 = vmatpush1.bf16.msra.mxu0 0
        %614 = vmatprep.subr.bf16.mxu0 0
        %615 = vmatpush1.bf16.msra.mxu0 0
        %616 = vmatprep.subr.bf16.mxu0 0
        %617 = vmatpush1.bf16.msra.mxu0 0
        %618 = vmatprep.subr.bf16.mxu0 0
        %619 = vmatpush1.bf16.msra.mxu0 0
        %620 = vmatprep.subr.bf16.mxu0 0
        %621 = vmatpush1.bf16.msra.mxu0 0
        %622 = vmatprep.mubr.bf16.mxu0 0
        %623 = vmatmul.mubr.bf16.gmra.mrb[0].mxu0 %v545
        %v624 = vpop.f32.mrb[0].mxu0
        %v625 = vadd.f32 0.0, %v624
        %v626 = vpop.f32.mrb[0].mxu0
        %v627 = vadd.f32 0.0, %v626
        %v628 = vpop.f32.mrb[0].mxu0
        %v629 = vadd.f32 0.0, %v628
        %v630 = vpop.f32.mrb[0].mxu0
        %v631 = vadd.f32 0.0, %v630
        %632 = vdwg.mxu0
        %633 = vmatprep.subr.bf16.mxu0 %v452
        %634 = vmatpush1.bf16.msra.mxu0 %v451
        %635 = vmatprep.subr.bf16.mxu0 %v476
        %636 = vmatpush1.bf16.msra.mxu0 %v475
        %637 = vmatprep.subr.bf16.mxu0 0
        %638 = vmatpush1.bf16.msra.mxu0 0
        %639 = vmatprep.subr.bf16.mxu0 0
        %640 = vmatpush1.bf16.msra.mxu0 0
        %641 = vmatprep.subr.bf16.mxu0 0
        %642 = vmatpush1.bf16.msra.mxu0 0
        %643 = vmatprep.subr.bf16.mxu0 0
        %644 = vmatpush1.bf16.msra.mxu0 0
        %645 = vmatprep.subr.bf16.mxu0 0
        %646 = vmatpush1.bf16.msra.mxu0 0
        %647 = vmatprep.subr.bf16.mxu0 0
        %648 = vmatpush1.bf16.msra.mxu0 0
        %649 = vmatprep.subr.bf16.mxu0 0
        %650 = vmatpush1.bf16.msra.mxu0 0
        %651 = vmatprep.subr.bf16.mxu0 0
        %652 = vmatpush1.bf16.msra.mxu0 0
        %653 = vmatprep.subr.bf16.mxu0 0
        %654 = vmatpush1.bf16.msra.mxu0 0
        %655 = vmatprep.subr.bf16.mxu0 0
        %656 = vmatpush1.bf16.msra.mxu0 0
        %657 = vmatprep.subr.bf16.mxu0 0
        %658 = vmatpush1.bf16.msra.mxu0 0
        %659 = vmatprep.subr.bf16.mxu0 0
        %660 = vmatpush1.bf16.msra.mxu0 0
        %661 = vmatprep.subr.bf16.mxu0 0
        %662 = vmatpush1.bf16.msra.mxu0 0
        %663 = vmatprep.subr.bf16.mxu0 0
        %664 = vmatpush1.bf16.msra.mxu0 0
        %665 = vmatprep.mubr.bf16.mxu0 0
        %666 = vmatmul.mubr.bf16.gmra.mrb[0].mxu0 %v545
        %v667 = vpop.f32.mrb[0].mxu0
        %v668 = vadd.f32 0.0, %v667
        %v669 = vpop.f32.mrb[0].mxu0
        %v670 = vadd.f32 0.0, %v669
        %v671 = vpop.f32.mrb[0].mxu0
        %v672 = vadd.f32 0.0, %v671
        %v673 = vpop.f32.mrb[0].mxu0
        %v674 = vadd.f32 0.0, %v673
        %675 = vdwg.mxu0
        %676 = vmatprep.subr.bf16.mxu0 %v454
        %677 = vmatpush1.bf16.msra.mxu0 %v453
        %678 = vmatprep.subr.bf16.mxu0 %v478
        %679 = vmatpush1.bf16.msra.mxu0 %v477
        %680 = vmatprep.subr.bf16.mxu0 0
        %681 = vmatpush1.bf16.msra.mxu0 0
        %682 = vmatprep.subr.bf16.mxu0 0
        %683 = vmatpush1.bf16.msra.mxu0 0
        %684 = vmatprep.subr.bf16.mxu0 0
        %685 = vmatpush1.bf16.msra.mxu0 0
        %686 = vmatprep.subr.bf16.mxu0 0
        %687 = vmatpush1.bf16.msra.mxu0 0
        %688 = vmatprep.subr.bf16.mxu0 0
        %689 = vmatpush1.bf16.msra.mxu0 0
        %690 = vmatprep.subr.bf16.mxu0 0
        %691 = vmatpush1.bf16.msra.mxu0 0
        %692 = vmatprep.subr.bf16.mxu0 0
        %693 = vmatpush1.bf16.msra.mxu0 0
        %694 = vmatprep.subr.bf16.mxu0 0
        %695 = vmatpush1.bf16.msra.mxu0 0
        %696 = vmatprep.subr.bf16.mxu0 0
        %697 = vmatpush1.bf16.msra.mxu0 0
        %698 = vmatprep.subr.bf16.mxu0 0
        %699 = vmatpush1.bf16.msra.mxu0 0
        %700 = vmatprep.subr.bf16.mxu0 0
        %701 = vmatpush1.bf16.msra.mxu0 0
        %702 = vmatprep.subr.bf16.mxu0 0
        %703 = vmatpush1.bf16.msra.mxu0 0
        %704 = vmatprep.subr.bf16.mxu0 0
        %705 = vmatpush1.bf16.msra.mxu0 0
        %706 = vmatprep.subr.bf16.mxu0 0
        %707 = vmatpush1.bf16.msra.mxu0 0
        %708 = vmatprep.mubr.bf16.mxu0 0
        %709 = vmatmul.mubr.bf16.gmra.mrb[0].mxu0 %v545
        %v710 = vpop.f32.mrb[0].mxu0
        %v711 = vadd.f32 0.0, %v710
        %v712 = vpop.f32.mrb[0].mxu0
        %v713 = vadd.f32 0.0, %v712
        %v714 = vpop.f32.mrb[0].mxu0
        %v715 = vadd.f32 0.0, %v714
        %v716 = vpop.f32.mrb[0].mxu0
        %v717 = vadd.f32 0.0, %v716
        %718 = vdwg.mxu0
        %719 = vmatprep.subr.bf16.mxu0 %v456
        %720 = vmatpush1.bf16.msra.mxu0 %v455
        %721 = vmatprep.subr.bf16.mxu0 %v480
        %722 = vmatpush1.bf16.msra.mxu0 %v479
        %723 = vmatprep.subr.bf16.mxu0 0
        %724 = vmatpush1.bf16.msra.mxu0 0
        %725 = vmatprep.subr.bf16.mxu0 0
        %726 = vmatpush1.bf16.msra.mxu0 0
        %727 = vmatprep.subr.bf16.mxu0 0
        %728 = vmatpush1.bf16.msra.mxu0 0
        %729 = vmatprep.subr.bf16.mxu0 0
        %730 = vmatpush1.bf16.msra.mxu0 0
        %731 = vmatprep.subr.bf16.mxu0 0
        %732 = vmatpush1.bf16.msra.mxu0 0
        %733 = vmatprep.subr.bf16.mxu0 0
        %734 = vmatpush1.bf16.msra.mxu0 0
        %735 = vmatprep.subr.bf16.mxu0 0
        %736 = vmatpush1.bf16.msra.mxu0 0
        %737 = vmatprep.subr.bf16.mxu0 0
        %738 = vmatpush1.bf16.msra.mxu0 0
        %739 = vmatprep.subr.bf16.mxu0 0
        %740 = vmatpush1.bf16.msra.mxu0 0
        %741 = vmatprep.subr.bf16.mxu0 0
        %742 = vmatpush1.bf16.msra.mxu0 0
        %743 = vmatprep.subr.bf16.mxu0 0
        %744 = vmatpush1.bf16.msra.mxu0 0
        %745 = vmatprep.subr.bf16.mxu0 0
        %746 = vmatpush1.bf16.msra.mxu0 0
        %747 = vmatprep.subr.bf16.mxu0 0
        %748 = vmatpush1.bf16.msra.mxu0 0
        %749 = vmatprep.subr.bf16.mxu0 0
        %750 = vmatpush1.bf16.msra.mxu0 0
        %751 = vmatprep.mubr.bf16.mxu0 0
        %752 = vmatmul.mubr.bf16.gmra.mrb[0].mxu0 %v545
        %v753 = vpop.f32.mrb[0].mxu0
        %v754 = vadd.f32 0.0, %v753
        %v755 = vpop.f32.mrb[0].mxu0
        %v756 = vadd.f32 0.0, %v755
        %v757 = vpop.f32.mrb[0].mxu0
        %v758 = vadd.f32 0.0, %v757
        %v759 = vpop.f32.mrb[0].mxu0
        %v760 = vadd.f32 0.0, %v759
        %761 = vdwg.mxu0
        %762 = vmatprep.subr.bf16.mxu0 %v458
        %763 = vmatpush1.bf16.msra.mxu0 %v457
        %764 = vmatprep.subr.bf16.mxu0 %v482
        %765 = vmatpush1.bf16.msra.mxu0 %v481
        %766 = vmatprep.subr.bf16.mxu0 0
        %767 = vmatpush1.bf16.msra.mxu0 0
        %768 = vmatprep.subr.bf16.mxu0 0
        %769 = vmatpush1.bf16.msra.mxu0 0
        %770 = vmatprep.subr.bf16.mxu0 0
        %771 = vmatpush1.bf16.msra.mxu0 0
        %772 = vmatprep.subr.bf16.mxu0 0
        %773 = vmatpush1.bf16.msra.mxu0 0
        %774 = vmatprep.subr.bf16.mxu0 0
        %775 = vmatpush1.bf16.msra.mxu0 0
        %776 = vmatprep.subr.bf16.mxu0 0
        %777 = vmatpush1.bf16.msra.mxu0 0
        %778 = vmatprep.subr.bf16.mxu0 0
        %779 = vmatpush1.bf16.msra.mxu0 0
        %780 = vmatprep.subr.bf16.mxu0 0
        %781 = vmatpush1.bf16.msra.mxu0 0
        %782 = vmatprep.subr.bf16.mxu0 0
        %783 = vmatpush1.bf16.msra.mxu0 0
        %784 = vmatprep.subr.bf16.mxu0 0
        %785 = vmatpush1.bf16.msra.mxu0 0
        %786 = vmatprep.subr.bf16.mxu0 0
        %787 = vmatpush1.bf16.msra.mxu0 0
        %788 = vmatprep.subr.bf16.mxu0 0
        %789 = vmatpush1.bf16.msra.mxu0 0
        %790 = vmatprep.subr.bf16.mxu0 0
        %791 = vmatpush1.bf16.msra.mxu0 0
        %792 = vmatprep.subr.bf16.mxu0 0
        %793 = vmatpush1.bf16.msra.mxu0 0
        %794 = vmatprep.mubr.bf16.mxu0 0
        %795 = vmatmul.mubr.bf16.gmra.mrb[0].mxu0 %v545
        %v796 = vpop.f32.mrb[0].mxu0
        %v797 = vadd.f32 0.0, %v796
        %v798 = vpop.f32.mrb[0].mxu0
        %v799 = vadd.f32 0.0, %v798
        %v800 = vpop.f32.mrb[0].mxu0
        %v801 = vadd.f32 0.0, %v800
        %v802 = vpop.f32.mrb[0].mxu0
        %v803 = vadd.f32 0.0, %v802
        %804 = vdwg.mxu0
        %805 = vmatprep.subr.bf16.mxu0 %v460
        %806 = vmatpush1.bf16.msra.mxu0 %v459
        %807 = vmatprep.subr.bf16.mxu0 %v484
        %808 = vmatpush1.bf16.msra.mxu0 %v483
        %809 = vmatprep.subr.bf16.mxu0 0
        %810 = vmatpush1.bf16.msra.mxu0 0
        %811 = vmatprep.subr.bf16.mxu0 0
        %812 = vmatpush1.bf16.msra.mxu0 0
        %813 = vmatprep.subr.bf16.mxu0 0
        %814 = vmatpush1.bf16.msra.mxu0 0
        %815 = vmatprep.subr.bf16.mxu0 0
        %816 = vmatpush1.bf16.msra.mxu0 0
        %817 = vmatprep.subr.bf16.mxu0 0
        %818 = vmatpush1.bf16.msra.mxu0 0
        %819 = vmatprep.subr.bf16.mxu0 0
        %820 = vmatpush1.bf16.msra.mxu0 0
        %821 = vmatprep.subr.bf16.mxu0 0
        %822 = vmatpush1.bf16.msra.mxu0 0
        %823 = vmatprep.subr.bf16.mxu0 0
        %824 = vmatpush1.bf16.msra.mxu0 0
        %825 = vmatprep.subr.bf16.mxu0 0
        %826 = vmatpush1.bf16.msra.mxu0 0
        %827 = vmatprep.subr.bf16.mxu0 0
        %828 = vmatpush1.bf16.msra.mxu0 0
        %829 = vmatprep.subr.bf16.mxu0 0
        %830 = vmatpush1.bf16.msra.mxu0 0
        %831 = vmatprep.subr.bf16.mxu0 0
        %832 = vmatpush1.bf16.msra.mxu0 0
        %833 = vmatprep.subr.bf16.mxu0 0
        %834 = vmatpush1.bf16.msra.mxu0 0
        %835 = vmatprep.subr.bf16.mxu0 0
        %836 = vmatpush1.bf16.msra.mxu0 0
        %837 = vmatprep.mubr.bf16.mxu0 0
        %838 = vmatmul.mubr.bf16.gmra.mrb[0].mxu0 %v545
        %v839 = vpop.f32.mrb[0].mxu0
        %v840 = vadd.f32 0.0, %v839
        %v841 = vpop.f32.mrb[0].mxu0
        %v842 = vadd.f32 0.0, %v841
        %v843 = vpop.f32.mrb[0].mxu0
        %v844 = vadd.f32 0.0, %v843
        %v845 = vpop.f32.mrb[0].mxu0
        %v846 = vadd.f32 0.0, %v845
        %847 = vdwg.mxu0
        %848 = vmatprep.subr.bf16.mxu0 %v462
        %849 = vmatpush1.bf16.msra.mxu0 %v461
        %850 = vmatprep.subr.bf16.mxu0 %v486
        %851 = vmatpush1.bf16.msra.mxu0 %v485
        %852 = vmatprep.subr.bf16.mxu0 0
        %853 = vmatpush1.bf16.msra.mxu0 0
        %854 = vmatprep.subr.bf16.mxu0 0
        %855 = vmatpush1.bf16.msra.mxu0 0
        %856 = vmatprep.subr.bf16.mxu0 0
        %857 = vmatpush1.bf16.msra.mxu0 0
        %858 = vmatprep.subr.bf16.mxu0 0
        %859 = vmatpush1.bf16.msra.mxu0 0
        %860 = vmatprep.subr.bf16.mxu0 0
        %861 = vmatpush1.bf16.msra.mxu0 0
        %862 = vmatprep.subr.bf16.mxu0 0
        %863 = vmatpush1.bf16.msra.mxu0 0
        %864 = vmatprep.subr.bf16.mxu0 0
        %865 = vmatpush1.bf16.msra.mxu0 0
        %866 = vmatprep.subr.bf16.mxu0 0
        %867 = vmatpush1.bf16.msra.mxu0 0
        %868 = vmatprep.subr.bf16.mxu0 0
        %869 = vmatpush1.bf16.msra.mxu0 0
        %870 = vmatprep.subr.bf16.mxu0 0
        %871 = vmatpush1.bf16.msra.mxu0 0
        %872 = vmatprep.subr.bf16.mxu0 0
        %873 = vmatpush1.bf16.msra.mxu0 0
        %874 = vmatprep.subr.bf16.mxu0 0
        %875 = vmatpush1.bf16.msra.mxu0 0
        %876 = vmatprep.subr.bf16.mxu0 0
        %877 = vmatpush1.bf16.msra.mxu0 0
        %878 = vmatprep.subr.bf16.mxu0 0
        %879 = vmatpush1.bf16.msra.mxu0 0
        %880 = vmatprep.mubr.bf16.mxu0 0
        %881 = vmatmul.mubr.bf16.gmra.mrb[0].mxu0 %v545
        %v882 = vpop.f32.mrb[0].mxu0
        %v883 = vadd.f32 0.0, %v882
        %v884 = vpop.f32.mrb[0].mxu0
        %v885 = vadd.f32 0.0, %v884
        %v886 = vpop.f32.mrb[0].mxu0
        %v887 = vadd.f32 0.0, %v886
        %v888 = vpop.f32.mrb[0].mxu0
        %v889 = vadd.f32 0.0, %v888
        %890 = vdwg.mxu0
        %891 = vmatprep.subr.bf16.mxu0 %v464
        %892 = vmatpush1.bf16.msra.mxu0 %v463
        %893 = vmatprep.subr.bf16.mxu0 %v488
        %894 = vmatpush1.bf16.msra.mxu0 %v487
        %895 = vmatprep.subr.bf16.mxu0 0
        %896 = vmatpush1.bf16.msra.mxu0 0
        %897 = vmatprep.subr.bf16.mxu0 0
        %898 = vmatpush1.bf16.msra.mxu0 0
        %899 = vmatprep.subr.bf16.mxu0 0
        %900 = vmatpush1.bf16.msra.mxu0 0
        %901 = vmatprep.subr.bf16.mxu0 0
        %902 = vmatpush1.bf16.msra.mxu0 0
        %903 = vmatprep.subr.bf16.mxu0 0
        %904 = vmatpush1.bf16.msra.mxu0 0
        %905 = vmatprep.subr.bf16.mxu0 0
        %906 = vmatpush1.bf16.msra.mxu0 0
        %907 = vmatprep.subr.bf16.mxu0 0
        %908 = vmatpush1.bf16.msra.mxu0 0
        %909 = vmatprep.subr.bf16.mxu0 0
        %910 = vmatpush1.bf16.msra.mxu0 0
        %911 = vmatprep.subr.bf16.mxu0 0
        %912 = vmatpush1.bf16.msra.mxu0 0
        %913 = vmatprep.subr.bf16.mxu0 0
        %914 = vmatpush1.bf16.msra.mxu0 0
        %915 = vmatprep.subr.bf16.mxu0 0
        %916 = vmatpush1.bf16.msra.mxu0 0
        %917 = vmatprep.subr.bf16.mxu0 0
        %918 = vmatpush1.bf16.msra.mxu0 0
        %919 = vmatprep.subr.bf16.mxu0 0
        %920 = vmatpush1.bf16.msra.mxu0 0
        %921 = vmatprep.subr.bf16.mxu0 0
        %922 = vmatpush1.bf16.msra.mxu0 0
        %923 = vmatprep.mubr.bf16.mxu0 0
        %924 = vmatmul.mubr.bf16.gmra.mrb[0].mxu0 %v545
        %v925 = vpop.f32.mrb[0].mxu0
        %v926 = vadd.f32 0.0, %v925
        %v927 = vpop.f32.mrb[0].mxu0
        %v928 = vadd.f32 0.0, %v927
        %v929 = vpop.f32.mrb[0].mxu0
        %v930 = vadd.f32 0.0, %v929
        %v931 = vpop.f32.mrb[0].mxu0
        %v932 = vadd.f32 0.0, %v931
        %933 = vdwg.mxu0
        %934 = vmatprep.subr.bf16.mxu0 %v466
        %935 = vmatpush1.bf16.msra.mxu0 %v465
        %936 = vmatprep.subr.bf16.mxu0 %v490
        %937 = vmatpush1.bf16.msra.mxu0 %v489
        %938 = vmatprep.subr.bf16.mxu0 0
        %939 = vmatpush1.bf16.msra.mxu0 0
        %940 = vmatprep.subr.bf16.mxu0 0
        %941 = vmatpush1.bf16.msra.mxu0 0
        %942 = vmatprep.subr.bf16.mxu0 0
        %943 = vmatpush1.bf16.msra.mxu0 0
        %944 = vmatprep.subr.bf16.mxu0 0
        %945 = vmatpush1.bf16.msra.mxu0 0
        %946 = vmatprep.subr.bf16.mxu0 0
        %947 = vmatpush1.bf16.msra.mxu0 0
        %948 = vmatprep.subr.bf16.mxu0 0
        %949 = vmatpush1.bf16.msra.mxu0 0
        %950 = vmatprep.subr.bf16.mxu0 0
        %951 = vmatpush1.bf16.msra.mxu0 0
        %952 = vmatprep.subr.bf16.mxu0 0
        %953 = vmatpush1.bf16.msra.mxu0 0
        %954 = vmatprep.subr.bf16.mxu0 0
        %955 = vmatpush1.bf16.msra.mxu0 0
        %956 = vmatprep.subr.bf16.mxu0 0
        %957 = vmatpush1.bf16.msra.mxu0 0
        %958 = vmatprep.subr.bf16.mxu0 0
        %959 = vmatpush1.bf16.msra.mxu0 0
        %960 = vmatprep.subr.bf16.mxu0 0
        %961 = vmatpush1.bf16.msra.mxu0 0
        %962 = vmatprep.subr.bf16.mxu0 0
        %963 = vmatpush1.bf16.msra.mxu0 0
        %964 = vmatprep.subr.bf16.mxu0 0
        %965 = vmatpush1.bf16.msra.mxu0 0
        %966 = vmatprep.mubr.bf16.mxu0 0
        %967 = vmatmul.mubr.bf16.gmra.mrb[0].mxu0 %v545
        %v968 = vpop.f32.mrb[0].mxu0
        %v969 = vadd.f32 0.0, %v968
        %v970 = vpop.f32.mrb[0].mxu0
        %v971 = vadd.f32 0.0, %v970
        %v972 = vpop.f32.mrb[0].mxu0
        %v973 = vadd.f32 0.0, %v972
        %v974 = vpop.f32.mrb[0].mxu0
        %v975 = vadd.f32 0.0, %v974
        %976 = vdwg.mxu0
        %977 = vmatprep.subr.bf16.mxu0 %v468
        %978 = vmatpush1.bf16.msra.mxu0 %v467
        %979 = vmatprep.subr.bf16.mxu0 %v492
        %980 = vmatpush1.bf16.msra.mxu0 %v491
        %981 = vmatprep.subr.bf16.mxu0 0
        %982 = vmatpush1.bf16.msra.mxu0 0
        %983 = vmatprep.subr.bf16.mxu0 0
        %984 = vmatpush1.bf16.msra.mxu0 0
        %985 = vmatprep.subr.bf16.mxu0 0
        %986 = vmatpush1.bf16.msra.mxu0 0
        %987 = vmatprep.subr.bf16.mxu0 0
        %988 = vmatpush1.bf16.msra.mxu0 0
        %989 = vmatprep.subr.bf16.mxu0 0
        %990 = vmatpush1.bf16.msra.mxu0 0
        %991 = vmatprep.subr.bf16.mxu0 0
        %992 = vmatpush1.bf16.msra.mxu0 0
        %993 = vmatprep.subr.bf16.mxu0 0
        %994 = vmatpush1.bf16.msra.mxu0 0
        %995 = vmatprep.subr.bf16.mxu0 0
        %996 = vmatpush1.bf16.msra.mxu0 0
        %997 = vmatprep.subr.bf16.mxu0 0
        %998 = vmatpush1.bf16.msra.mxu0 0
        %999 = vmatprep.subr.bf16.mxu0 0
        %1000 = vmatpush1.bf16.msra.mxu0 0
        %1001 = vmatprep.subr.bf16.mxu0 0
        %1002 = vmatpush1.bf16.msra.mxu0 0
        %1003 = vmatprep.subr.bf16.mxu0 0
        %1004 = vmatpush1.bf16.msra.mxu0 0
        %1005 = vmatprep.subr.bf16.mxu0 0
        %1006 = vmatpush1.bf16.msra.mxu0 0
        %1007 = vmatprep.subr.bf16.mxu0 0
        %1008 = vmatpush1.bf16.msra.mxu0 0
        %1009 = vmatprep.mubr.bf16.mxu0 0
        %1010 = vmatmul.mubr.bf16.gmra.mrb[0].mxu0 %v545
        %v1011 = vpop.f32.mrb[0].mxu0
        %v1012 = vadd.f32 0.0, %v1011
        %v1013 = vpop.f32.mrb[0].mxu0
        %v1014 = vadd.f32 0.0, %v1013
        %v1015 = vpop.f32.mrb[0].mxu0
        %v1016 = vadd.f32 0.0, %v1015
        %v1017 = vpop.f32.mrb[0].mxu0
        %v1018 = vadd.f32 0.0, %v1017
        %1019 = vdwg.mxu0
        %1020 = vmatprep.subr.bf16.mxu0 %v470
        %1021 = vmatpush1.bf16.msra.mxu0 %v469
        %1022 = vmatprep.subr.bf16.mxu0 %v494
        %1023 = vmatpush1.bf16.msra.mxu0 %v493
        %1024 = vmatprep.subr.bf16.mxu0 0
        %1025 = vmatpush1.bf16.msra.mxu0 0
        %1026 = vmatprep.subr.bf16.mxu0 0
        %1027 = vmatpush1.bf16.msra.mxu0 0
        %1028 = vmatprep.subr.bf16.mxu0 0
        %1029 = vmatpush1.bf16.msra.mxu0 0
        %1030 = vmatprep.subr.bf16.mxu0 0
        %1031 = vmatpush1.bf16.msra.mxu0 0
        %1032 = vmatprep.subr.bf16.mxu0 0
        %1033 = vmatpush1.bf16.msra.mxu0 0
        %1034 = vmatprep.subr.bf16.mxu0 0
        %1035 = vmatpush1.bf16.msra.mxu0 0
        %1036 = vmatprep.subr.bf16.mxu0 0
        %1037 = vmatpush1.bf16.msra.mxu0 0
        %1038 = vmatprep.subr.bf16.mxu0 0
        %1039 = vmatpush1.bf16.msra.mxu0 0
        %1040 = vmatprep.subr.bf16.mxu0 0
        %1041 = vmatpush1.bf16.msra.mxu0 0
        %1042 = vmatprep.subr.bf16.mxu0 0
        %1043 = vmatpush1.bf16.msra.mxu0 0
        %1044 = vmatprep.subr.bf16.mxu0 0
        %1045 = vmatpush1.bf16.msra.mxu0 0
        %1046 = vmatprep.subr.bf16.mxu0 0
        %1047 = vmatpush1.bf16.msra.mxu0 0
        %1048 = vmatprep.subr.bf16.mxu0 0
        %1049 = vmatpush1.bf16.msra.mxu0 0
        %1050 = vmatprep.subr.bf16.mxu0 0
        %1051 = vmatpush1.bf16.msra.mxu0 0
        %1052 = vmatprep.mubr.bf16.mxu0 0
        %1053 = vmatmul.mubr.bf16.gmra.mrb[0].mxu0 %v545
        %v1054 = vpop.f32.mrb[0].mxu0
        %v1055 = vadd.f32 0.0, %v1054
        %v1056 = vpop.f32.mrb[0].mxu0
        %v1057 = vadd.f32 0.0, %v1056
        %v1058 = vpop.f32.mrb[0].mxu0
        %v1059 = vadd.f32 0.0, %v1058
        %v1060 = vpop.f32.mrb[0].mxu0
        %v1061 = vadd.f32 0.0, %v1060
        %1062 = vdwg.mxu0
        %v1063 = vpack.c.bf16 %v586, %v582
        %v1064 = vpack.c.bf16 %v588, %v584
        %v1065 = vpack.c.bf16 %v629, %v625
        %v1066 = vpack.c.bf16 %v631, %v627
        %v1067 = vpack.c.bf16 %v672, %v668
        %v1068 = vpack.c.bf16 %v674, %v670
        %v1069 = vpack.c.bf16 %v715, %v711
        %v1070 = vpack.c.bf16 %v717, %v713
        %v1071 = vpack.c.bf16 %v758, %v754
        %v1072 = vpack.c.bf16 %v760, %v756
        %v1073 = vpack.c.bf16 %v801, %v797
        %v1074 = vpack.c.bf16 %v803, %v799
        %v1075 = vpack.c.bf16 %v844, %v840
        %v1076 = vpack.c.bf16 %v846, %v842
        %v1077 = vpack.c.bf16 %v887, %v883
        %v1078 = vpack.c.bf16 %v889, %v885
        %v1079 = vpack.c.bf16 %v930, %v926
        %v1080 = vpack.c.bf16 %v932, %v928
        %v1081 = vpack.c.bf16 %v973, %v969
        %v1082 = vpack.c.bf16 %v975, %v971
        %v1083 = vpack.c.bf16 %v1016, %v1012
        %v1084 = vpack.c.bf16 %v1018, %v1014
        %v1085 = vpack.c.bf16 %v1059, %v1055
        %v1086 = vpack.c.bf16 %v1061, %v1057
        %1087 = vmatprep.subr.bf16.mxu0 0
        %1088 = vmatpush1.bf16.xpose.msra.mxu0 %v1071
        %1089 = vmatprep.subr.bf16.mxu0 0
        %1090 = vmatpush1.bf16.xpose.msra.mxu0 0
        %1091 = vmatprep.subr.bf16.mxu0 0
        %1092 = vmatpush1.bf16.xpose.msra.mxu0 0
        %1093 = vmatprep.subr.bf16.mxu0 0
        %1094 = vmatpush1.bf16.xpose.msra.mxu0 0
        %1095 = vmatprep.subr.bf16.mxu0 0
        %1096 = vmatpush1.bf16.xpose.msra.mxu0 0
        %1097 = vmatprep.subr.bf16.mxu0 0
        %1098 = vmatpush1.bf16.xpose.msra.mxu0 0
        %1099 = vmatprep.subr.bf16.mxu0 0
        %1100 = vmatpush1.bf16.xpose.msra.mxu0 0
        %1101 = vmatprep.subr.bf16.mxu0 0
        %1102 = vmatpush1.bf16.xpose.msra.mxu0 0
        %1103 = vmatprep.subr.bf16.mxu0 0
        %1104 = vmatpush1.bf16.xpose.msra.mxu0 0
        %1105 = vmatprep.subr.bf16.mxu0 0
        %1106 = vmatpush1.bf16.xpose.msra.mxu0 0
        %1107 = vmatprep.subr.bf16.mxu0 0
        %1108 = vmatpush1.bf16.xpose.msra.mxu0 0
        %1109 = vmatprep.subr.bf16.mxu0 0
        %1110 = vmatpush1.bf16.xpose.msra.mxu0 0
        %1111 = vmatprep.subr.bf16.mxu0 0
        %1112 = vmatpush1.bf16.xpose.msra.mxu0 0
        %1113 = vmatprep.subr.bf16.mxu0 0
        %1114 = vmatpush1.bf16.xpose.msra.mxu0 0
        %1115 = vmatprep.subr.bf16.mxu0 0
        %1116 = vmatpush1.bf16.xpose.msra.mxu0 0
        %1117 = vmatprep.subr.bf16.mxu0 0
        %1118 = vmatpush1.bf16.xpose.msra.mxu0 0
        %1119 = vmatprep.mubr.bf16.mxu0 0
        %1120 = vmatmul.mubr.bf16.gmra.mrb[0].mxu0 %v1063
        %v1121 = vpop.f32.mrb[0].mxu0
        %v1122 = vadd.f32 0.0, %v1121
        %v1123 = vpop.f32.mrb[0].mxu0
        %v1124 = vpop.f32.mrb[0].mxu0
        %v1125 = vpop.f32.mrb[0].mxu0
        %1126 = vdwg.mxu0
        %1127 = vmatprep.subr.bf16.mxu0 0
        %1128 = vmatpush1.bf16.xpose.msra.mxu0 %v1072
        %1129 = vmatprep.subr.bf16.mxu0 0
        %1130 = vmatpush1.bf16.xpose.msra.mxu0 0
        %1131 = vmatprep.subr.bf16.mxu0 0
        %1132 = vmatpush1.bf16.xpose.msra.mxu0 0
        %1133 = vmatprep.subr.bf16.mxu0 0
        %1134 = vmatpush1.bf16.xpose.msra.mxu0 0
        %1135 = vmatprep.subr.bf16.mxu0 0
        %1136 = vmatpush1.bf16.xpose.msra.mxu0 0
        %1137 = vmatprep.subr.bf16.mxu0 0
        %1138 = vmatpush1.bf16.xpose.msra.mxu0 0
        %1139 = vmatprep.subr.bf16.mxu0 0
        %1140 = vmatpush1.bf16.xpose.msra.mxu0 0
        %1141 = vmatprep.subr.bf16.mxu0 0
        %1142 = vmatpush1.bf16.xpose.msra.mxu0 0
        %1143 = vmatprep.subr.bf16.mxu0 0
        %1144 = vmatpush1.bf16.xpose.msra.mxu0 0
        %1145 = vmatprep.subr.bf16.mxu0 0
        %1146 = vmatpush1.bf16.xpose.msra.mxu0 0
        %1147 = vmatprep.subr.bf16.mxu0 0
        %1148 = vmatpush1.bf16.xpose.msra.mxu0 0
        %1149 = vmatprep.subr.bf16.mxu0 0
        %1150 = vmatpush1.bf16.xpose.msra.mxu0 0
        %1151 = vmatprep.subr.bf16.mxu0 0
        %1152 = vmatpush1.bf16.xpose.msra.mxu0 0
        %1153 = vmatprep.subr.bf16.mxu0 0
        %1154 = vmatpush1.bf16.xpose.msra.mxu0 0
        %1155 = vmatprep.subr.bf16.mxu0 0
        %1156 = vmatpush1.bf16.xpose.msra.mxu0 0
        %1157 = vmatprep.subr.bf16.mxu0 0
        %1158 = vmatpush1.bf16.xpose.msra.mxu0 0
        %1159 = vmatprep.mubr.bf16.mxu0 0
        %1160 = vmatmul.mubr.bf16.gmra.mrb[0].mxu0 %v1064
        %v1161 = vpop.f32.mrb[0].mxu0
        %v1162 = vadd.f32 0.0, %v1161
        %v1163 = vpop.f32.mrb[0].mxu0
        %v1164 = vpop.f32.mrb[0].mxu0
        %v1165 = vpop.f32.mrb[0].mxu0
        %1166 = vdwg.mxu0
        %1167 = vmatprep.subr.bf16.mxu0 0
        %1168 = vmatpush1.bf16.xpose.msra.mxu0 %v1073
        %1169 = vmatprep.subr.bf16.mxu0 0
        %1170 = vmatpush1.bf16.xpose.msra.mxu0 0
        %1171 = vmatprep.subr.bf16.mxu0 0
        %1172 = vmatpush1.bf16.xpose.msra.mxu0 0
        %1173 = vmatprep.subr.bf16.mxu0 0
        %1174 = vmatpush1.bf16.xpose.msra.mxu0 0
        %1175 = vmatprep.subr.bf16.mxu0 0
        %1176 = vmatpush1.bf16.xpose.msra.mxu0 0
        %1177 = vmatprep.subr.bf16.mxu0 0
        %1178 = vmatpush1.bf16.xpose.msra.mxu0 0
        %1179 = vmatprep.subr.bf16.mxu0 0
        %1180 = vmatpush1.bf16.xpose.msra.mxu0 0
        %1181 = vmatprep.subr.bf16.mxu0 0
        %1182 = vmatpush1.bf16.xpose.msra.mxu0 0
        %1183 = vmatprep.subr.bf16.mxu0 0
        %1184 = vmatpush1.bf16.xpose.msra.mxu0 0
        %1185 = vmatprep.subr.bf16.mxu0 0
        %1186 = vmatpush1.bf16.xpose.msra.mxu0 0
        %1187 = vmatprep.subr.bf16.mxu0 0
        %1188 = vmatpush1.bf16.xpose.msra.mxu0 0
        %1189 = vmatprep.subr.bf16.mxu0 0
        %1190 = vmatpush1.bf16.xpose.msra.mxu0 0
        %1191 = vmatprep.subr.bf16.mxu0 0
        %1192 = vmatpush1.bf16.xpose.msra.mxu0 0
        %1193 = vmatprep.subr.bf16.mxu0 0
        %1194 = vmatpush1.bf16.xpose.msra.mxu0 0
        %1195 = vmatprep.subr.bf16.mxu0 0
        %1196 = vmatpush1.bf16.xpose.msra.mxu0 0
        %1197 = vmatprep.subr.bf16.mxu0 0
        %1198 = vmatpush1.bf16.xpose.msra.mxu0 0
        %1199 = vmatprep.mubr.bf16.mxu0 0
        %1200 = vmatmul.mubr.bf16.gmra.mrb[0].mxu0 %v1065
        %v1201 = vpop.f32.mrb[0].mxu0
        %v1202 = vadd.f32 0.0, %v1201
        %v1203 = vpop.f32.mrb[0].mxu0
        %v1204 = vpop.f32.mrb[0].mxu0
        %v1205 = vpop.f32.mrb[0].mxu0
        %1206 = vdwg.mxu0
        %1207 = vmatprep.subr.bf16.mxu0 0
        %1208 = vmatpush1.bf16.xpose.msra.mxu0 %v1074
        %1209 = vmatprep.subr.bf16.mxu0 0
        %1210 = vmatpush1.bf16.xpose.msra.mxu0 0
        %1211 = vmatprep.subr.bf16.mxu0 0
        %1212 = vmatpush1.bf16.xpose.msra.mxu0 0
        %1213 = vmatprep.subr.bf16.mxu0 0
        %1214 = vmatpush1.bf16.xpose.msra.mxu0 0
        %1215 = vmatprep.subr.bf16.mxu0 0
        %1216 = vmatpush1.bf16.xpose.msra.mxu0 0
        %1217 = vmatprep.subr.bf16.mxu0 0
        %1218 = vmatpush1.bf16.xpose.msra.mxu0 0
        %1219 = vmatprep.subr.bf16.mxu0 0
        %1220 = vmatpush1.bf16.xpose.msra.mxu0 0
        %1221 = vmatprep.subr.bf16.mxu0 0
        %1222 = vmatpush1.bf16.xpose.msra.mxu0 0
        %1223 = vmatprep.subr.bf16.mxu0 0
        %1224 = vmatpush1.bf16.xpose.msra.mxu0 0
        %1225 = vmatprep.subr.bf16.mxu0 0
        %1226 = vmatpush1.bf16.xpose.msra.mxu0 0
        %1227 = vmatprep.subr.bf16.mxu0 0
        %1228 = vmatpush1.bf16.xpose.msra.mxu0 0
        %1229 = vmatprep.subr.bf16.mxu0 0
        %1230 = vmatpush1.bf16.xpose.msra.mxu0 0
        %1231 = vmatprep.subr.bf16.mxu0 0
        %1232 = vmatpush1.bf16.xpose.msra.mxu0 0
        %1233 = vmatprep.subr.bf16.mxu0 0
        %1234 = vmatpush1.bf16.xpose.msra.mxu0 0
        %1235 = vmatprep.subr.bf16.mxu0 0
        %1236 = vmatpush1.bf16.xpose.msra.mxu0 0
        %1237 = vmatprep.subr.bf16.mxu0 0
        %1238 = vmatpush1.bf16.xpose.msra.mxu0 0
        %1239 = vmatprep.mubr.bf16.mxu0 0
        %1240 = vmatmul.mubr.bf16.gmra.mrb[0].mxu0 %v1066
        %v1241 = vpop.f32.mrb[0].mxu0
        %v1242 = vadd.f32 0.0, %v1241
        %v1243 = vpop.f32.mrb[0].mxu0
        %v1244 = vpop.f32.mrb[0].mxu0
        %v1245 = vpop.f32.mrb[0].mxu0
        %1246 = vdwg.mxu0
        %1247 = vmatprep.subr.bf16.mxu0 0
        %1248 = vmatpush1.bf16.xpose.msra.mxu0 %v1075
        %1249 = vmatprep.subr.bf16.mxu0 0
        %1250 = vmatpush1.bf16.xpose.msra.mxu0 0
        %1251 = vmatprep.subr.bf16.mxu0 0
        %1252 = vmatpush1.bf16.xpose.msra.mxu0 0
        %1253 = vmatprep.subr.bf16.mxu0 0
        %1254 = vmatpush1.bf16.xpose.msra.mxu0 0
        %1255 = vmatprep.subr.bf16.mxu0 0
        %1256 = vmatpush1.bf16.xpose.msra.mxu0 0
        %1257 = vmatprep.subr.bf16.mxu0 0
        %1258 = vmatpush1.bf16.xpose.msra.mxu0 0
        %1259 = vmatprep.subr.bf16.mxu0 0
        %1260 = vmatpush1.bf16.xpose.msra.mxu0 0
        %1261 = vmatprep.subr.bf16.mxu0 0
        %1262 = vmatpush1.bf16.xpose.msra.mxu0 0
        %1263 = vmatprep.subr.bf16.mxu0 0
        %1264 = vmatpush1.bf16.xpose.msra.mxu0 0
        %1265 = vmatprep.subr.bf16.mxu0 0
        %1266 = vmatpush1.bf16.xpose.msra.mxu0 0
        %1267 = vmatprep.subr.bf16.mxu0 0
        %1268 = vmatpush1.bf16.xpose.msra.mxu0 0
        %1269 = vmatprep.subr.bf16.mxu0 0
        %1270 = vmatpush1.bf16.xpose.msra.mxu0 0
        %1271 = vmatprep.subr.bf16.mxu0 0
        %1272 = vmatpush1.bf16.xpose.msra.mxu0 0
        %1273 = vmatprep.subr.bf16.mxu0 0
        %1274 = vmatpush1.bf16.xpose.msra.mxu0 0
        %1275 = vmatprep.subr.bf16.mxu0 0
        %1276 = vmatpush1.bf16.xpose.msra.mxu0 0
        %1277 = vmatprep.subr.bf16.mxu0 0
        %1278 = vmatpush1.bf16.xpose.msra.mxu0 0
        %1279 = vmatprep.mubr.bf16.mxu0 0
        %1280 = vmatmul.mubr.bf16.gmra.mrb[0].mxu0 %v1067
        %v1281 = vpop.f32.mrb[0].mxu0
        %v1282 = vadd.f32 0.0, %v1281
        %v1283 = vpop.f32.mrb[0].mxu0
        %v1284 = vpop.f32.mrb[0].mxu0
        %v1285 = vpop.f32.mrb[0].mxu0
        %1286 = vdwg.mxu0
        %1287 = vmatprep.subr.bf16.mxu0 0
        %1288 = vmatpush1.bf16.xpose.msra.mxu0 %v1076
        %1289 = vmatprep.subr.bf16.mxu0 0
        %1290 = vmatpush1.bf16.xpose.msra.mxu0 0
        %1291 = vmatprep.subr.bf16.mxu0 0
        %1292 = vmatpush1.bf16.xpose.msra.mxu0 0
        %1293 = vmatprep.subr.bf16.mxu0 0
        %1294 = vmatpush1.bf16.xpose.msra.mxu0 0
        %1295 = vmatprep.subr.bf16.mxu0 0
        %1296 = vmatpush1.bf16.xpose.msra.mxu0 0
        %1297 = vmatprep.subr.bf16.mxu0 0
        %1298 = vmatpush1.bf16.xpose.msra.mxu0 0
        %1299 = vmatprep.subr.bf16.mxu0 0
        %1300 = vmatpush1.bf16.xpose.msra.mxu0 0
        %1301 = vmatprep.subr.bf16.mxu0 0
        %1302 = vmatpush1.bf16.xpose.msra.mxu0 0
        %1303 = vmatprep.subr.bf16.mxu0 0
        %1304 = vmatpush1.bf16.xpose.msra.mxu0 0
        %1305 = vmatprep.subr.bf16.mxu0 0
        %1306 = vmatpush1.bf16.xpose.msra.mxu0 0
        %1307 = vmatprep.subr.bf16.mxu0 0
        %1308 = vmatpush1.bf16.xpose.msra.mxu0 0
        %1309 = vmatprep.subr.bf16.mxu0 0
        %1310 = vmatpush1.bf16.xpose.msra.mxu0 0
        %1311 = vmatprep.subr.bf16.mxu0 0
        %1312 = vmatpush1.bf16.xpose.msra.mxu0 0
        %1313 = vmatprep.subr.bf16.mxu0 0
        %1314 = vmatpush1.bf16.xpose.msra.mxu0 0
        %1315 = vmatprep.subr.bf16.mxu0 0
        %1316 = vmatpush1.bf16.xpose.msra.mxu0 0
        %1317 = vmatprep.subr.bf16.mxu0 0
        %1318 = vmatpush1.bf16.xpose.msra.mxu0 0
        %1319 = vmatprep.mubr.bf16.mxu0 0
        %1320 = vmatmul.mubr.bf16.gmra.mrb[0].mxu0 %v1068
        %v1321 = vpop.f32.mrb[0].mxu0
        %v1322 = vadd.f32 0.0, %v1321
        %v1323 = vpop.f32.mrb[0].mxu0
        %v1324 = vpop.f32.mrb[0].mxu0
        %v1325 = vpop.f32.mrb[0].mxu0
        %1326 = vdwg.mxu0
        %1327 = vmatprep.subr.bf16.mxu0 0
        %1328 = vmatpush1.bf16.xpose.msra.mxu0 %v1077
        %1329 = vmatprep.subr.bf16.mxu0 0
        %1330 = vmatpush1.bf16.xpose.msra.mxu0 0
        %1331 = vmatprep.subr.bf16.mxu0 0
        %1332 = vmatpush1.bf16.xpose.msra.mxu0 0
        %1333 = vmatprep.subr.bf16.mxu0 0
        %1334 = vmatpush1.bf16.xpose.msra.mxu0 0
        %1335 = vmatprep.subr.bf16.mxu0 0
        %1336 = vmatpush1.bf16.xpose.msra.mxu0 0
        %1337 = vmatprep.subr.bf16.mxu0 0
        %1338 = vmatpush1.bf16.xpose.msra.mxu0 0
        %1339 = vmatprep.subr.bf16.mxu0 0
        %1340 = vmatpush1.bf16.xpose.msra.mxu0 0
        %1341 = vmatprep.subr.bf16.mxu0 0
        %1342 = vmatpush1.bf16.xpose.msra.mxu0 0
        %1343 = vmatprep.subr.bf16.mxu0 0
        %1344 = vmatpush1.bf16.xpose.msra.mxu0 0
        %1345 = vmatprep.subr.bf16.mxu0 0
        %1346 = vmatpush1.bf16.xpose.msra.mxu0 0
        %1347 = vmatprep.subr.bf16.mxu0 0
        %1348 = vmatpush1.bf16.xpose.msra.mxu0 0
        %1349 = vmatprep.subr.bf16.mxu0 0
        %1350 = vmatpush1.bf16.xpose.msra.mxu0 0
        %1351 = vmatprep.subr.bf16.mxu0 0
        %1352 = vmatpush1.bf16.xpose.msra.mxu0 0
        %1353 = vmatprep.subr.bf16.mxu0 0
        %1354 = vmatpush1.bf16.xpose.msra.mxu0 0
        %1355 = vmatprep.subr.bf16.mxu0 0
        %1356 = vmatpush1.bf16.xpose.msra.mxu0 0
        %1357 = vmatprep.subr.bf16.mxu0 0
        %1358 = vmatpush1.bf16.xpose.msra.mxu0 0
        %1359 = vmatprep.mubr.bf16.mxu0 0
        %1360 = vmatmul.mubr.bf16.gmra.mrb[0].mxu0 %v1069
        %v1361 = vpop.f32.mrb[0].mxu0
        %v1362 = vadd.f32 0.0, %v1361
        %v1363 = vpop.f32.mrb[0].mxu0
        %v1364 = vpop.f32.mrb[0].mxu0
        %v1365 = vpop.f32.mrb[0].mxu0
        %1366 = vdwg.mxu0
        %1367 = vmatprep.subr.bf16.mxu0 0
        %1368 = vmatpush1.bf16.xpose.msra.mxu0 %v1078
        %1369 = vmatprep.subr.bf16.mxu0 0
        %1370 = vmatpush1.bf16.xpose.msra.mxu0 0
        %1371 = vmatprep.subr.bf16.mxu0 0
        %1372 = vmatpush1.bf16.xpose.msra.mxu0 0
        %1373 = vmatprep.subr.bf16.mxu0 0
        %1374 = vmatpush1.bf16.xpose.msra.mxu0 0
        %1375 = vmatprep.subr.bf16.mxu0 0
        %1376 = vmatpush1.bf16.xpose.msra.mxu0 0
        %1377 = vmatprep.subr.bf16.mxu0 0
        %1378 = vmatpush1.bf16.xpose.msra.mxu0 0
        %1379 = vmatprep.subr.bf16.mxu0 0
        %1380 = vmatpush1.bf16.xpose.msra.mxu0 0
        %1381 = vmatprep.subr.bf16.mxu0 0
        %1382 = vmatpush1.bf16.xpose.msra.mxu0 0
        %1383 = vmatprep.subr.bf16.mxu0 0
        %1384 = vmatpush1.bf16.xpose.msra.mxu0 0
        %1385 = vmatprep.subr.bf16.mxu0 0
        %1386 = vmatpush1.bf16.xpose.msra.mxu0 0
        %1387 = vmatprep.subr.bf16.mxu0 0
        %1388 = vmatpush1.bf16.xpose.msra.mxu0 0
        %1389 = vmatprep.subr.bf16.mxu0 0
        %1390 = vmatpush1.bf16.xpose.msra.mxu0 0
        %1391 = vmatprep.subr.bf16.mxu0 0
        %1392 = vmatpush1.bf16.xpose.msra.mxu0 0
        %1393 = vmatprep.subr.bf16.mxu0 0
        %1394 = vmatpush1.bf16.xpose.msra.mxu0 0
        %1395 = vmatprep.subr.bf16.mxu0 0
        %1396 = vmatpush1.bf16.xpose.msra.mxu0 0
        %1397 = vmatprep.subr.bf16.mxu0 0
        %1398 = vmatpush1.bf16.xpose.msra.mxu0 0
        %1399 = vmatprep.mubr.bf16.mxu0 0
        %1400 = vmatmul.mubr.bf16.gmra.mrb[0].mxu0 %v1070
        %v1401 = vpop.f32.mrb[0].mxu0
        %v1402 = vadd.f32 0.0, %v1401
        %v1403 = vpop.f32.mrb[0].mxu0
        %v1404 = vpop.f32.mrb[0].mxu0
        %v1405 = vpop.f32.mrb[0].mxu0
        %1406 = vdwg.mxu0
        %vm1407 = vcmask 64512
        %v1408 = vsel %vm1407, %v1122, -inf
        %1409 = vmax.xlane.f32.xlu0 %v1408
        %v1410 = vpop.xlane.xlu0 %1409
        %v1411 = vsel %vm1407, %v1162, -inf
        %1412 = vmax.xlane.f32.xlu0 %v1411
        %v1413 = vpop.xlane.xlu0 %1412
        %v1414 = vsel %vm1407, %v1202, -inf
        %1415 = vmax.xlane.f32.xlu0 %v1414
        %v1416 = vpop.xlane.xlu0 %1415
        %v1417 = vsel %vm1407, %v1242, -inf
        %1418 = vmax.xlane.f32.xlu0 %v1417
        %v1419 = vpop.xlane.xlu0 %1418
        %v1420 = vsel %vm1407, %v1282, -inf
        %1421 = vmax.xlane.f32.xlu0 %v1420
        %v1422 = vpop.xlane.xlu0 %1421
        %v1423 = vsel %vm1407, %v1322, -inf
        %1424 = vmax.xlane.f32.xlu0 %v1423
        %v1425 = vpop.xlane.xlu0 %1424
        %v1426 = vsel %vm1407, %v1362, -inf
        %1427 = vmax.xlane.f32.xlu0 %v1426
        %v1428 = vpop.xlane.xlu0 %1427
        %v1429 = vsel %vm1407, %v1402, -inf
        %1430 = vmax.xlane.f32.xlu0 %v1429
        %v1431 = vpop.xlane.xlu0 %1430
        %v1432 = vsub.f32 %v1122, %v1410
        %v1433 = vsub.f32 %v1162, %v1413
        %v1434 = vsub.f32 %v1202, %v1416
        %v1435 = vsub.f32 %v1242, %v1419
        %v1436 = vsub.f32 %v1282, %v1422
        %v1437 = vsub.f32 %v1322, %v1425
        %v1438 = vsub.f32 %v1362, %v1428
        %v1439 = vsub.f32 %v1402, %v1431
        %v1440 = vmul.f32 %v1432, 1.442695
        %v1441 = vpow.pop %v1440
        %v1442 = vmul.f32 %v1433, 1.442695
        %v1443 = vpow.pop %v1442
        %v1444 = vmul.f32 %v1434, 1.442695
        %v1445 = vpow.pop %v1444
        %v1446 = vmul.f32 %v1435, 1.442695
        %v1447 = vpow.pop %v1446
        %v1448 = vmul.f32 %v1436, 1.442695
        %v1449 = vpow.pop %v1448
        %v1450 = vmul.f32 %v1437, 1.442695
        %v1451 = vpow.pop %v1450
        %v1452 = vmul.f32 %v1438, 1.442695
        %v1453 = vpow.pop %v1452
        %v1454 = vmul.f32 %v1439, 1.442695
        %v1455 = vpow.pop %v1454
        %v1456 = vsel %vm1407, %v1441, 0.0
        %1457 = vadd.xlane.f32.xlu0 %v1456
        %v1458 = vpop.xlane.xlu0 %1457
        %v1459 = vsel %vm1407, %v1443, 0.0
        %1460 = vadd.xlane.f32.xlu0 %v1459
        %v1461 = vpop.xlane.xlu0 %1460
        %v1462 = vsel %vm1407, %v1445, 0.0
        %1463 = vadd.xlane.f32.xlu0 %v1462
        %v1464 = vpop.xlane.xlu0 %1463
        %v1465 = vsel %vm1407, %v1447, 0.0
        %1466 = vadd.xlane.f32.xlu0 %v1465
        %v1467 = vpop.xlane.xlu0 %1466
        %v1468 = vsel %vm1407, %v1449, 0.0
        %1469 = vadd.xlane.f32.xlu0 %v1468
        %v1470 = vpop.xlane.xlu0 %1469
        %v1471 = vsel %vm1407, %v1451, 0.0
        %1472 = vadd.xlane.f32.xlu0 %v1471
        %v1473 = vpop.xlane.xlu0 %1472
        %v1474 = vsel %vm1407, %v1453, 0.0
        %1475 = vadd.xlane.f32.xlu0 %v1474
        %v1476 = vpop.xlane.xlu0 %1475
        %v1477 = vsel %vm1407, %v1455, 0.0
        %1478 = vadd.xlane.f32.xlu0 %v1477
        %v1479 = vpop.xlane.xlu0 %1478
        %v1480 = vrcp.pop %v1458
        %v1481 = vrcp.pop %v1461
        %v1482 = vrcp.pop %v1464
        %v1483 = vrcp.pop %v1467
        %v1484 = vrcp.pop %v1470
        %v1485 = vrcp.pop %v1473
        %v1486 = vrcp.pop %v1476
        %v1487 = vrcp.pop %v1479
        %v1488 = vmul.f32 %v1441, %v1480
        %v1489 = vmul.f32 %v1443, %v1481
        %v1490 = vmul.f32 %v1445, %v1482
        %v1491 = vmul.f32 %v1447, %v1483
        %v1492 = vmul.f32 %v1449, %v1484
        %v1493 = vmul.f32 %v1451, %v1485
        %v1494 = vmul.f32 %v1453, %v1486
        %v1495 = vmul.f32 %v1455, %v1487
        %v1496 = vpack.c.bf16 %v1488, %v1488
        %v1498 = vsel %vm1407, %v1496, 0
        %vm1500 = vcmask 1043456
        %v1502 = vsel %vm1500, %v1079, 0
        %1504 = vmatprep.subr.bf16.mxu0 0
        %1505 = vmatpush1.bf16.msra.mxu0 %v1502
        %1506 = vmatprep.subr.bf16.mxu0 0
        %1507 = vmatpush1.bf16.msra.mxu0 0
        %1508 = vmatprep.subr.bf16.mxu0 0
        %1509 = vmatpush1.bf16.msra.mxu0 0
        %1510 = vmatprep.subr.bf16.mxu0 0
        %1511 = vmatpush1.bf16.msra.mxu0 0
        %1512 = vmatprep.subr.bf16.mxu0 0
        %1513 = vmatpush1.bf16.msra.mxu0 0
        %1514 = vmatprep.subr.bf16.mxu0 0
        %1515 = vmatpush1.bf16.msra.mxu0 0
        %1516 = vmatprep.subr.bf16.mxu0 0
        %1517 = vmatpush1.bf16.msra.mxu0 0
        %1518 = vmatprep.subr.bf16.mxu0 0
        %1519 = vmatpush1.bf16.msra.mxu0 0
        %1520 = vmatprep.subr.bf16.mxu0 0
        %1521 = vmatpush1.bf16.msra.mxu0 0
        %1522 = vmatprep.subr.bf16.mxu0 0
        %1523 = vmatpush1.bf16.msra.mxu0 0
        %1524 = vmatprep.subr.bf16.mxu0 0
        %1525 = vmatpush1.bf16.msra.mxu0 0
        %1526 = vmatprep.subr.bf16.mxu0 0
        %1527 = vmatpush1.bf16.msra.mxu0 0
        %1528 = vmatprep.subr.bf16.mxu0 0
        %1529 = vmatpush1.bf16.msra.mxu0 0
        %1530 = vmatprep.subr.bf16.mxu0 0
        %1531 = vmatpush1.bf16.msra.mxu0 0
        %1532 = vmatprep.subr.bf16.mxu0 0
        %1533 = vmatpush1.bf16.msra.mxu0 0
        %1534 = vmatprep.subr.bf16.mxu0 0
        %1535 = vmatpush1.bf16.msra.mxu0 0
        %1536 = vmatprep.mubr.bf16.mxu0 0
        %1537 = vmatmul.mubr.bf16.gmra.mrb[0].mxu0 %v1498
        %v1538 = vpop.f32.mrb[0].mxu0
        %v1539 = vadd.f32 0.0, %v1538
        %v1540 = vpop.f32.mrb[0].mxu0
        %v1541 = vpop.f32.mrb[0].mxu0
        %v1542 = vpop.f32.mrb[0].mxu0
        %1543 = vdwg.mxu0
        %v1544 = vpack.c.bf16 %v1489, %v1489
        %v1546 = vsel %vm1407, %v1544, 0
        %v1549 = vsel %vm1500, %v1080, 0
        %1551 = vmatprep.subr.bf16.mxu0 0
        %1552 = vmatpush1.bf16.msra.mxu0 %v1549
        %1553 = vmatprep.subr.bf16.mxu0 0
        %1554 = vmatpush1.bf16.msra.mxu0 0
        %1555 = vmatprep.subr.bf16.mxu0 0
        %1556 = vmatpush1.bf16.msra.mxu0 0
        %1557 = vmatprep.subr.bf16.mxu0 0
        %1558 = vmatpush1.bf16.msra.mxu0 0
        %1559 = vmatprep.subr.bf16.mxu0 0
        %1560 = vmatpush1.bf16.msra.mxu0 0
        %1561 = vmatprep.subr.bf16.mxu0 0
        %1562 = vmatpush1.bf16.msra.mxu0 0
        %1563 = vmatprep.subr.bf16.mxu0 0
        %1564 = vmatpush1.bf16.msra.mxu0 0
        %1565 = vmatprep.subr.bf16.mxu0 0
        %1566 = vmatpush1.bf16.msra.mxu0 0
        %1567 = vmatprep.subr.bf16.mxu0 0
        %1568 = vmatpush1.bf16.msra.mxu0 0
        %1569 = vmatprep.subr.bf16.mxu0 0
        %1570 = vmatpush1.bf16.msra.mxu0 0
        %1571 = vmatprep.subr.bf16.mxu0 0
        %1572 = vmatpush1.bf16.msra.mxu0 0
        %1573 = vmatprep.subr.bf16.mxu0 0
        %1574 = vmatpush1.bf16.msra.mxu0 0
        %1575 = vmatprep.subr.bf16.mxu0 0
        %1576 = vmatpush1.bf16.msra.mxu0 0
        %1577 = vmatprep.subr.bf16.mxu0 0
        %1578 = vmatpush1.bf16.msra.mxu0 0
        %1579 = vmatprep.subr.bf16.mxu0 0
        %1580 = vmatpush1.bf16.msra.mxu0 0
        %1581 = vmatprep.subr.bf16.mxu0 0
        %1582 = vmatpush1.bf16.msra.mxu0 0
        %1583 = vmatprep.mubr.bf16.mxu0 0
        %1584 = vmatmul.mubr.bf16.gmra.mrb[0].mxu0 %v1546
        %v1585 = vpop.f32.mrb[0].mxu0
        %v1586 = vadd.f32 0.0, %v1585
        %v1587 = vpop.f32.mrb[0].mxu0
        %v1588 = vpop.f32.mrb[0].mxu0
        %v1589 = vpop.f32.mrb[0].mxu0
        %1590 = vdwg.mxu0
        %v1591 = vpack.c.bf16 %v1490, %v1490
        %v1593 = vsel %vm1407, %v1591, 0
        %v1596 = vsel %vm1500, %v1081, 0
        %1598 = vmatprep.subr.bf16.mxu0 0
        %1599 = vmatpush1.bf16.msra.mxu0 %v1596
        %1600 = vmatprep.subr.bf16.mxu0 0
        %1601 = vmatpush1.bf16.msra.mxu0 0
        %1602 = vmatprep.subr.bf16.mxu0 0
        %1603 = vmatpush1.bf16.msra.mxu0 0
        %1604 = vmatprep.subr.bf16.mxu0 0
        %1605 = vmatpush1.bf16.msra.mxu0 0
        %1606 = vmatprep.subr.bf16.mxu0 0
        %1607 = vmatpush1.bf16.msra.mxu0 0
        %1608 = vmatprep.subr.bf16.mxu0 0
        %1609 = vmatpush1.bf16.msra.mxu0 0
        %1610 = vmatprep.subr.bf16.mxu0 0
        %1611 = vmatpush1.bf16.msra.mxu0 0
        %1612 = vmatprep.subr.bf16.mxu0 0
        %1613 = vmatpush1.bf16.msra.mxu0 0
        %1614 = vmatprep.subr.bf16.mxu0 0
        %1615 = vmatpush1.bf16.msra.mxu0 0
        %1616 = vmatprep.subr.bf16.mxu0 0
        %1617 = vmatpush1.bf16.msra.mxu0 0
        %1618 = vmatprep.subr.bf16.mxu0 0
        %1619 = vmatpush1.bf16.msra.mxu0 0
        %1620 = vmatprep.subr.bf16.mxu0 0
        %1621 = vmatpush1.bf16.msra.mxu0 0
        %1622 = vmatprep.subr.bf16.mxu0 0
        %1623 = vmatpush1.bf16.msra.mxu0 0
        %1624 = vmatprep.subr.bf16.mxu0 0
        %1625 = vmatpush1.bf16.msra.mxu0 0
        %1626 = vmatprep.subr.bf16.mxu0 0
        %1627 = vmatpush1.bf16.msra.mxu0 0
        %1628 = vmatprep.subr.bf16.mxu0 0
        %1629 = vmatpush1.bf16.msra.mxu0 0
        %1630 = vmatprep.mubr.bf16.mxu0 0
        %1631 = vmatmul.mubr.bf16.gmra.mrb[0].mxu0 %v1593
        %v1632 = vpop.f32.mrb[0].mxu0
        %v1633 = vadd.f32 0.0, %v1632
        %v1634 = vpop.f32.mrb[0].mxu0
        %v1635 = vpop.f32.mrb[0].mxu0
        %v1636 = vpop.f32.mrb[0].mxu0
        %1637 = vdwg.mxu0
        %v1638 = vpack.c.bf16 %v1491, %v1491
        %v1640 = vsel %vm1407, %v1638, 0
        %v1643 = vsel %vm1500, %v1082, 0
        %1645 = vmatprep.subr.bf16.mxu0 0
        %1646 = vmatpush1.bf16.msra.mxu0 %v1643
        %1647 = vmatprep.subr.bf16.mxu0 0
        %1648 = vmatpush1.bf16.msra.mxu0 0
        %1649 = vmatprep.subr.bf16.mxu0 0
        %1650 = vmatpush1.bf16.msra.mxu0 0
        %1651 = vmatprep.subr.bf16.mxu0 0
        %1652 = vmatpush1.bf16.msra.mxu0 0
        %1653 = vmatprep.subr.bf16.mxu0 0
        %1654 = vmatpush1.bf16.msra.mxu0 0
        %1655 = vmatprep.subr.bf16.mxu0 0
        %1656 = vmatpush1.bf16.msra.mxu0 0
        %1657 = vmatprep.subr.bf16.mxu0 0
        %1658 = vmatpush1.bf16.msra.mxu0 0
        %1659 = vmatprep.subr.bf16.mxu0 0
        %1660 = vmatpush1.bf16.msra.mxu0 0
        %1661 = vmatprep.subr.bf16.mxu0 0
        %1662 = vmatpush1.bf16.msra.mxu0 0
        %1663 = vmatprep.subr.bf16.mxu0 0
        %1664 = vmatpush1.bf16.msra.mxu0 0
        %1665 = vmatprep.subr.bf16.mxu0 0
        %1666 = vmatpush1.bf16.msra.mxu0 0
        %1667 = vmatprep.subr.bf16.mxu0 0
        %1668 = vmatpush1.bf16.msra.mxu0 0
        %1669 = vmatprep.subr.bf16.mxu0 0
        %1670 = vmatpush1.bf16.msra.mxu0 0
        %1671 = vmatprep.subr.bf16.mxu0 0
        %1672 = vmatpush1.bf16.msra.mxu0 0
        %1673 = vmatprep.subr.bf16.mxu0 0
        %1674 = vmatpush1.bf16.msra.mxu0 0
        %1675 = vmatprep.subr.bf16.mxu0 0
        %1676 = vmatpush1.bf16.msra.mxu0 0
        %1677 = vmatprep.mubr.bf16.mxu0 0
        %1678 = vmatmul.mubr.bf16.gmra.mrb[0].mxu0 %v1640
        %v1679 = vpop.f32.mrb[0].mxu0
        %v1680 = vadd.f32 0.0, %v1679
        %v1681 = vpop.f32.mrb[0].mxu0
        %v1682 = vpop.f32.mrb[0].mxu0
        %v1683 = vpop.f32.mrb[0].mxu0
        %1684 = vdwg.mxu0
        %v1685 = vpack.c.bf16 %v1492, %v1492
        %v1687 = vsel %vm1407, %v1685, 0
        %v1690 = vsel %vm1500, %v1083, 0
        %1692 = vmatprep.subr.bf16.mxu0 0
        %1693 = vmatpush1.bf16.msra.mxu0 %v1690
        %1694 = vmatprep.subr.bf16.mxu0 0
        %1695 = vmatpush1.bf16.msra.mxu0 0
        %1696 = vmatprep.subr.bf16.mxu0 0
        %1697 = vmatpush1.bf16.msra.mxu0 0
        %1698 = vmatprep.subr.bf16.mxu0 0
        %1699 = vmatpush1.bf16.msra.mxu0 0
        %1700 = vmatprep.subr.bf16.mxu0 0
        %1701 = vmatpush1.bf16.msra.mxu0 0
        %1702 = vmatprep.subr.bf16.mxu0 0
        %1703 = vmatpush1.bf16.msra.mxu0 0
        %1704 = vmatprep.subr.bf16.mxu0 0
        %1705 = vmatpush1.bf16.msra.mxu0 0
        %1706 = vmatprep.subr.bf16.mxu0 0
        %1707 = vmatpush1.bf16.msra.mxu0 0
        %1708 = vmatprep.subr.bf16.mxu0 0
        %1709 = vmatpush1.bf16.msra.mxu0 0
        %1710 = vmatprep.subr.bf16.mxu0 0
        %1711 = vmatpush1.bf16.msra.mxu0 0
        %1712 = vmatprep.subr.bf16.mxu0 0
        %1713 = vmatpush1.bf16.msra.mxu0 0
        %1714 = vmatprep.subr.bf16.mxu0 0
        %1715 = vmatpush1.bf16.msra.mxu0 0
        %1716 = vmatprep.subr.bf16.mxu0 0
        %1717 = vmatpush1.bf16.msra.mxu0 0
        %1718 = vmatprep.subr.bf16.mxu0 0
        %1719 = vmatpush1.bf16.msra.mxu0 0
        %1720 = vmatprep.subr.bf16.mxu0 0
        %1721 = vmatpush1.bf16.msra.mxu0 0
        %1722 = vmatprep.subr.bf16.mxu0 0
        %1723 = vmatpush1.bf16.msra.mxu0 0
        %1724 = vmatprep.mubr.bf16.mxu0 0
        %1725 = vmatmul.mubr.bf16.gmra.mrb[0].mxu0 %v1687
        %v1726 = vpop.f32.mrb[0].mxu0
        %v1727 = vadd.f32 0.0, %v1726
        %v1728 = vpop.f32.mrb[0].mxu0
        %v1729 = vpop.f32.mrb[0].mxu0
        %v1730 = vpop.f32.mrb[0].mxu0
        %1731 = vdwg.mxu0
        %v1732 = vpack.c.bf16 %v1493, %v1493
        %v1734 = vsel %vm1407, %v1732, 0
        %v1737 = vsel %vm1500, %v1084, 0
        %1739 = vmatprep.subr.bf16.mxu0 0
        %1740 = vmatpush1.bf16.msra.mxu0 %v1737
        %1741 = vmatprep.subr.bf16.mxu0 0
        %1742 = vmatpush1.bf16.msra.mxu0 0
        %1743 = vmatprep.subr.bf16.mxu0 0
        %1744 = vmatpush1.bf16.msra.mxu0 0
        %1745 = vmatprep.subr.bf16.mxu0 0
        %1746 = vmatpush1.bf16.msra.mxu0 0
        %1747 = vmatprep.subr.bf16.mxu0 0
        %1748 = vmatpush1.bf16.msra.mxu0 0
        %1749 = vmatprep.subr.bf16.mxu0 0
        %1750 = vmatpush1.bf16.msra.mxu0 0
        %1751 = vmatprep.subr.bf16.mxu0 0
        %1752 = vmatpush1.bf16.msra.mxu0 0
        %1753 = vmatprep.subr.bf16.mxu0 0
        %1754 = vmatpush1.bf16.msra.mxu0 0
        %1755 = vmatprep.subr.bf16.mxu0 0
        %1756 = vmatpush1.bf16.msra.mxu0 0
        %1757 = vmatprep.subr.bf16.mxu0 0
        %1758 = vmatpush1.bf16.msra.mxu0 0
        %1759 = vmatprep.subr.bf16.mxu0 0
        %1760 = vmatpush1.bf16.msra.mxu0 0
        %1761 = vmatprep.subr.bf16.mxu0 0
        %1762 = vmatpush1.bf16.msra.mxu0 0
        %1763 = vmatprep.subr.bf16.mxu0 0
        %1764 = vmatpush1.bf16.msra.mxu0 0
        %1765 = vmatprep.subr.bf16.mxu0 0
        %1766 = vmatpush1.bf16.msra.mxu0 0
        %1767 = vmatprep.subr.bf16.mxu0 0
        %1768 = vmatpush1.bf16.msra.mxu0 0
        %1769 = vmatprep.subr.bf16.mxu0 0
        %1770 = vmatpush1.bf16.msra.mxu0 0
        %1771 = vmatprep.mubr.bf16.mxu0 0
        %1772 = vmatmul.mubr.bf16.gmra.mrb[0].mxu0 %v1734
        %v1773 = vpop.f32.mrb[0].mxu0
        %v1774 = vadd.f32 0.0, %v1773
        %v1775 = vpop.f32.mrb[0].mxu0
        %v1776 = vpop.f32.mrb[0].mxu0
        %v1777 = vpop.f32.mrb[0].mxu0
        %1778 = vdwg.mxu0
        %v1779 = vpack.c.bf16 %v1494, %v1494
        %v1781 = vsel %vm1407, %v1779, 0
        %v1784 = vsel %vm1500, %v1085, 0
        %1786 = vmatprep.subr.bf16.mxu0 0
        %1787 = vmatpush1.bf16.msra.mxu0 %v1784
        %1788 = vmatprep.subr.bf16.mxu0 0
        %1789 = vmatpush1.bf16.msra.mxu0 0
        %1790 = vmatprep.subr.bf16.mxu0 0
        %1791 = vmatpush1.bf16.msra.mxu0 0
        %1792 = vmatprep.subr.bf16.mxu0 0
        %1793 = vmatpush1.bf16.msra.mxu0 0
        %1794 = vmatprep.subr.bf16.mxu0 0
        %1795 = vmatpush1.bf16.msra.mxu0 0
        %1796 = vmatprep.subr.bf16.mxu0 0
        %1797 = vmatpush1.bf16.msra.mxu0 0
        %1798 = vmatprep.subr.bf16.mxu0 0
        %1799 = vmatpush1.bf16.msra.mxu0 0
        %1800 = vmatprep.subr.bf16.mxu0 0
        %1801 = vmatpush1.bf16.msra.mxu0 0
        %1802 = vmatprep.subr.bf16.mxu0 0
        %1803 = vmatpush1.bf16.msra.mxu0 0
        %1804 = vmatprep.subr.bf16.mxu0 0
        %1805 = vmatpush1.bf16.msra.mxu0 0
        %1806 = vmatprep.subr.bf16.mxu0 0
        %1807 = vmatpush1.bf16.msra.mxu0 0
        %1808 = vmatprep.subr.bf16.mxu0 0
        %1809 = vmatpush1.bf16.msra.mxu0 0
        %1810 = vmatprep.subr.bf16.mxu0 0
        %1811 = vmatpush1.bf16.msra.mxu0 0
        %1812 = vmatprep.subr.bf16.mxu0 0
        %1813 = vmatpush1.bf16.msra.mxu0 0
        %1814 = vmatprep.subr.bf16.mxu0 0
        %1815 = vmatpush1.bf16.msra.mxu0 0
        %1816 = vmatprep.subr.bf16.mxu0 0
        %1817 = vmatpush1.bf16.msra.mxu0 0
        %1818 = vmatprep.mubr.bf16.mxu0 0
        %1819 = vmatmul.mubr.bf16.gmra.mrb[0].mxu0 %v1781
        %v1820 = vpop.f32.mrb[0].mxu0
        %v1821 = vadd.f32 0.0, %v1820
        %v1822 = vpop.f32.mrb[0].mxu0
        %v1823 = vpop.f32.mrb[0].mxu0
        %v1824 = vpop.f32.mrb[0].mxu0
        %1825 = vdwg.mxu0
        %v1826 = vpack.c.bf16 %v1495, %v1495
        %v1828 = vsel %vm1407, %v1826, 0
        %v1831 = vsel %vm1500, %v1086, 0
        %1833 = vmatprep.subr.bf16.mxu0 0
        %1834 = vmatpush1.bf16.msra.mxu0 %v1831
        %1835 = vmatprep.subr.bf16.mxu0 0
        %1836 = vmatpush1.bf16.msra.mxu0 0
        %1837 = vmatprep.subr.bf16.mxu0 0
        %1838 = vmatpush1.bf16.msra.mxu0 0
        %1839 = vmatprep.subr.bf16.mxu0 0
        %1840 = vmatpush1.bf16.msra.mxu0 0
        %1841 = vmatprep.subr.bf16.mxu0 0
        %1842 = vmatpush1.bf16.msra.mxu0 0
        %1843 = vmatprep.subr.bf16.mxu0 0
        %1844 = vmatpush1.bf16.msra.mxu0 0
        %1845 = vmatprep.subr.bf16.mxu0 0
        %1846 = vmatpush1.bf16.msra.mxu0 0
        %1847 = vmatprep.subr.bf16.mxu0 0
        %1848 = vmatpush1.bf16.msra.mxu0 0
        %1849 = vmatprep.subr.bf16.mxu0 0
        %1850 = vmatpush1.bf16.msra.mxu0 0
        %1851 = vmatprep.subr.bf16.mxu0 0
        %1852 = vmatpush1.bf16.msra.mxu0 0
        %1853 = vmatprep.subr.bf16.mxu0 0
        %1854 = vmatpush1.bf16.msra.mxu0 0
        %1855 = vmatprep.subr.bf16.mxu0 0
        %1856 = vmatpush1.bf16.msra.mxu0 0
        %1857 = vmatprep.subr.bf16.mxu0 0
        %1858 = vmatpush1.bf16.msra.mxu0 0
        %1859 = vmatprep.subr.bf16.mxu0 0
        %1860 = vmatpush1.bf16.msra.mxu0 0
        %1861 = vmatprep.subr.bf16.mxu0 0
        %1862 = vmatpush1.bf16.msra.mxu0 0
        %1863 = vmatprep.subr.bf16.mxu0 0
        %1864 = vmatpush1.bf16.msra.mxu0 0
        %1865 = vmatprep.mubr.bf16.mxu0 0
        %1866 = vmatmul.mubr.bf16.gmra.mrb[0].mxu0 %v1828
        %v1867 = vpop.f32.mrb[0].mxu0
        %v1868 = vadd.f32 0.0, %v1867
        %v1869 = vpop.f32.mrb[0].mxu0
        %v1870 = vpop.f32.mrb[0].mxu0
        %v1871 = vpop.f32.mrb[0].mxu0
        %1872 = vdwg.mxu0
        %v1874 = vrot.slane %v1063, 4
        %v1877 = vrot.slane %v1071, 4
        %1879 = vmatprep.subr.bf16.mxu0 0
        %1880 = vmatpush1.bf16.xpose.msra.mxu0 %v1877
        %1881 = vmatprep.subr.bf16.mxu0 0
        %1882 = vmatpush1.bf16.xpose.msra.mxu0 0
        %1883 = vmatprep.subr.bf16.mxu0 0
        %1884 = vmatpush1.bf16.xpose.msra.mxu0 0
        %1885 = vmatprep.subr.bf16.mxu0 0
        %1886 = vmatpush1.bf16.xpose.msra.mxu0 0
        %1887 = vmatprep.subr.bf16.mxu0 0
        %1888 = vmatpush1.bf16.xpose.msra.mxu0 0
        %1889 = vmatprep.subr.bf16.mxu0 0
        %1890 = vmatpush1.bf16.xpose.msra.mxu0 0
        %1891 = vmatprep.subr.bf16.mxu0 0
        %1892 = vmatpush1.bf16.xpose.msra.mxu0 0
        %1893 = vmatprep.subr.bf16.mxu0 0
        %1894 = vmatpush1.bf16.xpose.msra.mxu0 0
        %1895 = vmatprep.subr.bf16.mxu0 0
        %1896 = vmatpush1.bf16.xpose.msra.mxu0 0
        %1897 = vmatprep.subr.bf16.mxu0 0
        %1898 = vmatpush1.bf16.xpose.msra.mxu0 0
        %1899 = vmatprep.subr.bf16.mxu0 0
        %1900 = vmatpush1.bf16.xpose.msra.mxu0 0
        %1901 = vmatprep.subr.bf16.mxu0 0
        %1902 = vmatpush1.bf16.xpose.msra.mxu0 0
        %1903 = vmatprep.subr.bf16.mxu0 0
        %1904 = vmatpush1.bf16.xpose.msra.mxu0 0
        %1905 = vmatprep.subr.bf16.mxu0 0
        %1906 = vmatpush1.bf16.xpose.msra.mxu0 0
        %1907 = vmatprep.subr.bf16.mxu0 0
        %1908 = vmatpush1.bf16.xpose.msra.mxu0 0
        %1909 = vmatprep.subr.bf16.mxu0 0
        %1910 = vmatpush1.bf16.xpose.msra.mxu0 0
        %1911 = vmatprep.mubr.bf16.mxu0 0
        %1912 = vmatmul.mubr.bf16.gmra.mrb[0].mxu0 %v1874
        %v1913 = vpop.f32.mrb[0].mxu0
        %v1914 = vadd.f32 0.0, %v1913
        %v1915 = vpop.f32.mrb[0].mxu0
        %v1916 = vpop.f32.mrb[0].mxu0
        %v1917 = vpop.f32.mrb[0].mxu0
        %1918 = vdwg.mxu0
        %v1920 = vrot.slane %v1064, 4
        %v1923 = vrot.slane %v1072, 4
        %1925 = vmatprep.subr.bf16.mxu0 0
        %1926 = vmatpush1.bf16.xpose.msra.mxu0 %v1923
        %1927 = vmatprep.subr.bf16.mxu0 0
        %1928 = vmatpush1.bf16.xpose.msra.mxu0 0
        %1929 = vmatprep.subr.bf16.mxu0 0
        %1930 = vmatpush1.bf16.xpose.msra.mxu0 0
        %1931 = vmatprep.subr.bf16.mxu0 0
        %1932 = vmatpush1.bf16.xpose.msra.mxu0 0
        %1933 = vmatprep.subr.bf16.mxu0 0
        %1934 = vmatpush1.bf16.xpose.msra.mxu0 0
        %1935 = vmatprep.subr.bf16.mxu0 0
        %1936 = vmatpush1.bf16.xpose.msra.mxu0 0
        %1937 = vmatprep.subr.bf16.mxu0 0
        %1938 = vmatpush1.bf16.xpose.msra.mxu0 0
        %1939 = vmatprep.subr.bf16.mxu0 0
        %1940 = vmatpush1.bf16.xpose.msra.mxu0 0
        %1941 = vmatprep.subr.bf16.mxu0 0
        %1942 = vmatpush1.bf16.xpose.msra.mxu0 0
        %1943 = vmatprep.subr.bf16.mxu0 0
        %1944 = vmatpush1.bf16.xpose.msra.mxu0 0
        %1945 = vmatprep.subr.bf16.mxu0 0
        %1946 = vmatpush1.bf16.xpose.msra.mxu0 0
        %1947 = vmatprep.subr.bf16.mxu0 0
        %1948 = vmatpush1.bf16.xpose.msra.mxu0 0
        %1949 = vmatprep.subr.bf16.mxu0 0
        %1950 = vmatpush1.bf16.xpose.msra.mxu0 0
        %1951 = vmatprep.subr.bf16.mxu0 0
        %1952 = vmatpush1.bf16.xpose.msra.mxu0 0
        %1953 = vmatprep.subr.bf16.mxu0 0
        %1954 = vmatpush1.bf16.xpose.msra.mxu0 0
        %1955 = vmatprep.subr.bf16.mxu0 0
        %1956 = vmatpush1.bf16.xpose.msra.mxu0 0
        %1957 = vmatprep.mubr.bf16.mxu0 0
        %1958 = vmatmul.mubr.bf16.gmra.mrb[0].mxu0 %v1920
        %v1959 = vpop.f32.mrb[0].mxu0
        %v1960 = vadd.f32 0.0, %v1959
        %v1961 = vpop.f32.mrb[0].mxu0
        %v1962 = vpop.f32.mrb[0].mxu0
        %v1963 = vpop.f32.mrb[0].mxu0
        %1964 = vdwg.mxu0
        %v1966 = vrot.slane %v1065, 4
        %v1969 = vrot.slane %v1073, 4
        %1971 = vmatprep.subr.bf16.mxu0 0
        %1972 = vmatpush1.bf16.xpose.msra.mxu0 %v1969
        %1973 = vmatprep.subr.bf16.mxu0 0
        %1974 = vmatpush1.bf16.xpose.msra.mxu0 0
        %1975 = vmatprep.subr.bf16.mxu0 0
        %1976 = vmatpush1.bf16.xpose.msra.mxu0 0
        %1977 = vmatprep.subr.bf16.mxu0 0
        %1978 = vmatpush1.bf16.xpose.msra.mxu0 0
        %1979 = vmatprep.subr.bf16.mxu0 0
        %1980 = vmatpush1.bf16.xpose.msra.mxu0 0
        %1981 = vmatprep.subr.bf16.mxu0 0
        %1982 = vmatpush1.bf16.xpose.msra.mxu0 0
        %1983 = vmatprep.subr.bf16.mxu0 0
        %1984 = vmatpush1.bf16.xpose.msra.mxu0 0
        %1985 = vmatprep.subr.bf16.mxu0 0
        %1986 = vmatpush1.bf16.xpose.msra.mxu0 0
        %1987 = vmatprep.subr.bf16.mxu0 0
        %1988 = vmatpush1.bf16.xpose.msra.mxu0 0
        %1989 = vmatprep.subr.bf16.mxu0 0
        %1990 = vmatpush1.bf16.xpose.msra.mxu0 0
        %1991 = vmatprep.subr.bf16.mxu0 0
        %1992 = vmatpush1.bf16.xpose.msra.mxu0 0
        %1993 = vmatprep.subr.bf16.mxu0 0
        %1994 = vmatpush1.bf16.xpose.msra.mxu0 0
        %1995 = vmatprep.subr.bf16.mxu0 0
        %1996 = vmatpush1.bf16.xpose.msra.mxu0 0
        %1997 = vmatprep.subr.bf16.mxu0 0
        %1998 = vmatpush1.bf16.xpose.msra.mxu0 0
        %1999 = vmatprep.subr.bf16.mxu0 0
        %2000 = vmatpush1.bf16.xpose.msra.mxu0 0
        %2001 = vmatprep.subr.bf16.mxu0 0
        %2002 = vmatpush1.bf16.xpose.msra.mxu0 0
        %2003 = vmatprep.mubr.bf16.mxu0 0
        %2004 = vmatmul.mubr.bf16.gmra.mrb[0].mxu0 %v1966
        %v2005 = vpop.f32.mrb[0].mxu0
        %v2006 = vadd.f32 0.0, %v2005
        %v2007 = vpop.f32.mrb[0].mxu0
        %v2008 = vpop.f32.mrb[0].mxu0
        %v2009 = vpop.f32.mrb[0].mxu0
        %2010 = vdwg.mxu0
        %v2012 = vrot.slane %v1066, 4
        %v2015 = vrot.slane %v1074, 4
        %2017 = vmatprep.subr.bf16.mxu0 0
        %2018 = vmatpush1.bf16.xpose.msra.mxu0 %v2015
        %2019 = vmatprep.subr.bf16.mxu0 0
        %2020 = vmatpush1.bf16.xpose.msra.mxu0 0
        %2021 = vmatprep.subr.bf16.mxu0 0
        %2022 = vmatpush1.bf16.xpose.msra.mxu0 0
        %2023 = vmatprep.subr.bf16.mxu0 0
        %2024 = vmatpush1.bf16.xpose.msra.mxu0 0
        %2025 = vmatprep.subr.bf16.mxu0 0
        %2026 = vmatpush1.bf16.xpose.msra.mxu0 0
        %2027 = vmatprep.subr.bf16.mxu0 0
        %2028 = vmatpush1.bf16.xpose.msra.mxu0 0
        %2029 = vmatprep.subr.bf16.mxu0 0
        %2030 = vmatpush1.bf16.xpose.msra.mxu0 0
        %2031 = vmatprep.subr.bf16.mxu0 0
        %2032 = vmatpush1.bf16.xpose.msra.mxu0 0
        %2033 = vmatprep.subr.bf16.mxu0 0
        %2034 = vmatpush1.bf16.xpose.msra.mxu0 0
        %2035 = vmatprep.subr.bf16.mxu0 0
        %2036 = vmatpush1.bf16.xpose.msra.mxu0 0
        %2037 = vmatprep.subr.bf16.mxu0 0
        %2038 = vmatpush1.bf16.xpose.msra.mxu0 0
        %2039 = vmatprep.subr.bf16.mxu0 0
        %2040 = vmatpush1.bf16.xpose.msra.mxu0 0
        %2041 = vmatprep.subr.bf16.mxu0 0
        %2042 = vmatpush1.bf16.xpose.msra.mxu0 0
        %2043 = vmatprep.subr.bf16.mxu0 0
        %2044 = vmatpush1.bf16.xpose.msra.mxu0 0
        %2045 = vmatprep.subr.bf16.mxu0 0
        %2046 = vmatpush1.bf16.xpose.msra.mxu0 0
        %2047 = vmatprep.subr.bf16.mxu0 0
        %2048 = vmatpush1.bf16.xpose.msra.mxu0 0
        %2049 = vmatprep.mubr.bf16.mxu0 0
        %2050 = vmatmul.mubr.bf16.gmra.mrb[0].mxu0 %v2012
        %v2051 = vpop.f32.mrb[0].mxu0
        %v2052 = vadd.f32 0.0, %v2051
        %v2053 = vpop.f32.mrb[0].mxu0
        %v2054 = vpop.f32.mrb[0].mxu0
        %v2055 = vpop.f32.mrb[0].mxu0
        %2056 = vdwg.mxu0
        %v2058 = vrot.slane %v1067, 4
        %v2061 = vrot.slane %v1075, 4
        %2063 = vmatprep.subr.bf16.mxu0 0
        %2064 = vmatpush1.bf16.xpose.msra.mxu0 %v2061
        %2065 = vmatprep.subr.bf16.mxu0 0
        %2066 = vmatpush1.bf16.xpose.msra.mxu0 0
        %2067 = vmatprep.subr.bf16.mxu0 0
        %2068 = vmatpush1.bf16.xpose.msra.mxu0 0
        %2069 = vmatprep.subr.bf16.mxu0 0
        %2070 = vmatpush1.bf16.xpose.msra.mxu0 0
        %2071 = vmatprep.subr.bf16.mxu0 0
        %2072 = vmatpush1.bf16.xpose.msra.mxu0 0
        %2073 = vmatprep.subr.bf16.mxu0 0
        %2074 = vmatpush1.bf16.xpose.msra.mxu0 0
        %2075 = vmatprep.subr.bf16.mxu0 0
        %2076 = vmatpush1.bf16.xpose.msra.mxu0 0
        %2077 = vmatprep.subr.bf16.mxu0 0
        %2078 = vmatpush1.bf16.xpose.msra.mxu0 0
        %2079 = vmatprep.subr.bf16.mxu0 0
        %2080 = vmatpush1.bf16.xpose.msra.mxu0 0
        %2081 = vmatprep.subr.bf16.mxu0 0
        %2082 = vmatpush1.bf16.xpose.msra.mxu0 0
        %2083 = vmatprep.subr.bf16.mxu0 0
        %2084 = vmatpush1.bf16.xpose.msra.mxu0 0
        %2085 = vmatprep.subr.bf16.mxu0 0
        %2086 = vmatpush1.bf16.xpose.msra.mxu0 0
        %2087 = vmatprep.subr.bf16.mxu0 0
        %2088 = vmatpush1.bf16.xpose.msra.mxu0 0
        %2089 = vmatprep.subr.bf16.mxu0 0
        %2090 = vmatpush1.bf16.xpose.msra.mxu0 0
        %2091 = vmatprep.subr.bf16.mxu0 0
        %2092 = vmatpush1.bf16.xpose.msra.mxu0 0
        %2093 = vmatprep.subr.bf16.mxu0 0
        %2094 = vmatpush1.bf16.xpose.msra.mxu0 0
        %2095 = vmatprep.mubr.bf16.mxu0 0
        %2096 = vmatmul.mubr.bf16.gmra.mrb[0].mxu0 %v2058
        %v2097 = vpop.f32.mrb[0].mxu0
        %v2098 = vadd.f32 0.0, %v2097
        %v2099 = vpop.f32.mrb[0].mxu0
        %v2100 = vpop.f32.mrb[0].mxu0
        %v2101 = vpop.f32.mrb[0].mxu0
        %2102 = vdwg.mxu0
        %v2104 = vrot.slane %v1068, 4
        %v2107 = vrot.slane %v1076, 4
        %2109 = vmatprep.subr.bf16.mxu0 0
        %2110 = vmatpush1.bf16.xpose.msra.mxu0 %v2107
        %2111 = vmatprep.subr.bf16.mxu0 0
        %2112 = vmatpush1.bf16.xpose.msra.mxu0 0
        %2113 = vmatprep.subr.bf16.mxu0 0
        %2114 = vmatpush1.bf16.xpose.msra.mxu0 0
        %2115 = vmatprep.subr.bf16.mxu0 0
        %2116 = vmatpush1.bf16.xpose.msra.mxu0 0
        %2117 = vmatprep.subr.bf16.mxu0 0
        %2118 = vmatpush1.bf16.xpose.msra.mxu0 0
        %2119 = vmatprep.subr.bf16.mxu0 0
        %2120 = vmatpush1.bf16.xpose.msra.mxu0 0
        %2121 = vmatprep.subr.bf16.mxu0 0
        %2122 = vmatpush1.bf16.xpose.msra.mxu0 0
        %2123 = vmatprep.subr.bf16.mxu0 0
        %2124 = vmatpush1.bf16.xpose.msra.mxu0 0
        %2125 = vmatprep.subr.bf16.mxu0 0
        %2126 = vmatpush1.bf16.xpose.msra.mxu0 0
        %2127 = vmatprep.subr.bf16.mxu0 0
        %2128 = vmatpush1.bf16.xpose.msra.mxu0 0
        %2129 = vmatprep.subr.bf16.mxu0 0
        %2130 = vmatpush1.bf16.xpose.msra.mxu0 0
        %2131 = vmatprep.subr.bf16.mxu0 0
        %2132 = vmatpush1.bf16.xpose.msra.mxu0 0
        %2133 = vmatprep.subr.bf16.mxu0 0
        %2134 = vmatpush1.bf16.xpose.msra.mxu0 0
        %2135 = vmatprep.subr.bf16.mxu0 0
        %2136 = vmatpush1.bf16.xpose.msra.mxu0 0
        %2137 = vmatprep.subr.bf16.mxu0 0
        %2138 = vmatpush1.bf16.xpose.msra.mxu0 0
        %2139 = vmatprep.subr.bf16.mxu0 0
        %2140 = vmatpush1.bf16.xpose.msra.mxu0 0
        %2141 = vmatprep.mubr.bf16.mxu0 0
        %2142 = vmatmul.mubr.bf16.gmra.mrb[0].mxu0 %v2104
        %v2143 = vpop.f32.mrb[0].mxu0
        %v2144 = vadd.f32 0.0, %v2143
        %v2145 = vpop.f32.mrb[0].mxu0
        %v2146 = vpop.f32.mrb[0].mxu0
        %v2147 = vpop.f32.mrb[0].mxu0
        %2148 = vdwg.mxu0
        %v2150 = vrot.slane %v1069, 4
        %v2153 = vrot.slane %v1077, 4
        %2155 = vmatprep.subr.bf16.mxu0 0
        %2156 = vmatpush1.bf16.xpose.msra.mxu0 %v2153
        %2157 = vmatprep.subr.bf16.mxu0 0
        %2158 = vmatpush1.bf16.xpose.msra.mxu0 0
        %2159 = vmatprep.subr.bf16.mxu0 0
        %2160 = vmatpush1.bf16.xpose.msra.mxu0 0
        %2161 = vmatprep.subr.bf16.mxu0 0
        %2162 = vmatpush1.bf16.xpose.msra.mxu0 0
        %2163 = vmatprep.subr.bf16.mxu0 0
        %2164 = vmatpush1.bf16.xpose.msra.mxu0 0
        %2165 = vmatprep.subr.bf16.mxu0 0
        %2166 = vmatpush1.bf16.xpose.msra.mxu0 0
        %2167 = vmatprep.subr.bf16.mxu0 0
        %2168 = vmatpush1.bf16.xpose.msra.mxu0 0
        %2169 = vmatprep.subr.bf16.mxu0 0
        %2170 = vmatpush1.bf16.xpose.msra.mxu0 0
        %2171 = vmatprep.subr.bf16.mxu0 0
        %2172 = vmatpush1.bf16.xpose.msra.mxu0 0
        %2173 = vmatprep.subr.bf16.mxu0 0
        %2174 = vmatpush1.bf16.xpose.msra.mxu0 0
        %2175 = vmatprep.subr.bf16.mxu0 0
        %2176 = vmatpush1.bf16.xpose.msra.mxu0 0
        %2177 = vmatprep.subr.bf16.mxu0 0
        %2178 = vmatpush1.bf16.xpose.msra.mxu0 0
        %2179 = vmatprep.subr.bf16.mxu0 0
        %2180 = vmatpush1.bf16.xpose.msra.mxu0 0
        %2181 = vmatprep.subr.bf16.mxu0 0
        %2182 = vmatpush1.bf16.xpose.msra.mxu0 0
        %2183 = vmatprep.subr.bf16.mxu0 0
        %2184 = vmatpush1.bf16.xpose.msra.mxu0 0
        %2185 = vmatprep.subr.bf16.mxu0 0
        %2186 = vmatpush1.bf16.xpose.msra.mxu0 0
        %2187 = vmatprep.mubr.bf16.mxu0 0
        %2188 = vmatmul.mubr.bf16.gmra.mrb[0].mxu0 %v2150
        %v2189 = vpop.f32.mrb[0].mxu0
        %v2190 = vadd.f32 0.0, %v2189
        %v2191 = vpop.f32.mrb[0].mxu0
        %v2192 = vpop.f32.mrb[0].mxu0
        %v2193 = vpop.f32.mrb[0].mxu0
        %2194 = vdwg.mxu0
        %v2196 = vrot.slane %v1070, 4
        %v2199 = vrot.slane %v1078, 4
        %2201 = vmatprep.subr.bf16.mxu0 0
        %2202 = vmatpush1.bf16.xpose.msra.mxu0 %v2199
        %2203 = vmatprep.subr.bf16.mxu0 0
        %2204 = vmatpush1.bf16.xpose.msra.mxu0 0
        %2205 = vmatprep.subr.bf16.mxu0 0
        %2206 = vmatpush1.bf16.xpose.msra.mxu0 0
        %2207 = vmatprep.subr.bf16.mxu0 0
        %2208 = vmatpush1.bf16.xpose.msra.mxu0 0
        %2209 = vmatprep.subr.bf16.mxu0 0
        %2210 = vmatpush1.bf16.xpose.msra.mxu0 0
        %2211 = vmatprep.subr.bf16.mxu0 0
        %2212 = vmatpush1.bf16.xpose.msra.mxu0 0
        %2213 = vmatprep.subr.bf16.mxu0 0
        %2214 = vmatpush1.bf16.xpose.msra.mxu0 0
        %2215 = vmatprep.subr.bf16.mxu0 0
        %2216 = vmatpush1.bf16.xpose.msra.mxu0 0
        %2217 = vmatprep.subr.bf16.mxu0 0
        %2218 = vmatpush1.bf16.xpose.msra.mxu0 0
        %2219 = vmatprep.subr.bf16.mxu0 0
        %2220 = vmatpush1.bf16.xpose.msra.mxu0 0
        %2221 = vmatprep.subr.bf16.mxu0 0
        %2222 = vmatpush1.bf16.xpose.msra.mxu0 0
        %2223 = vmatprep.subr.bf16.mxu0 0
        %2224 = vmatpush1.bf16.xpose.msra.mxu0 0
        %2225 = vmatprep.subr.bf16.mxu0 0
        %2226 = vmatpush1.bf16.xpose.msra.mxu0 0
        %2227 = vmatprep.subr.bf16.mxu0 0
        %2228 = vmatpush1.bf16.xpose.msra.mxu0 0
        %2229 = vmatprep.subr.bf16.mxu0 0
        %2230 = vmatpush1.bf16.xpose.msra.mxu0 0
        %2231 = vmatprep.subr.bf16.mxu0 0
        %2232 = vmatpush1.bf16.xpose.msra.mxu0 0
        %2233 = vmatprep.mubr.bf16.mxu0 0
        %2234 = vmatmul.mubr.bf16.gmra.mrb[0].mxu0 %v2196
        %v2235 = vpop.f32.mrb[0].mxu0
        %v2236 = vadd.f32 0.0, %v2235
        %v2237 = vpop.f32.mrb[0].mxu0
        %v2238 = vpop.f32.mrb[0].mxu0
        %v2239 = vpop.f32.mrb[0].mxu0
        %2240 = vdwg.mxu0
        %v2241 = vsel %vm1407, %v1914, -inf
        %2242 = vmax.xlane.f32.xlu0 %v2241
        %v2243 = vpop.xlane.xlu0 %2242
        %v2244 = vsel %vm1407, %v1960, -inf
        %2245 = vmax.xlane.f32.xlu0 %v2244
        %v2246 = vpop.xlane.xlu0 %2245
        %v2247 = vsel %vm1407, %v2006, -inf
        %2248 = vmax.xlane.f32.xlu0 %v2247
        %v2249 = vpop.xlane.xlu0 %2248
        %v2250 = vsel %vm1407, %v2052, -inf
        %2251 = vmax.xlane.f32.xlu0 %v2250
        %v2252 = vpop.xlane.xlu0 %2251
        %v2253 = vsel %vm1407, %v2098, -inf
        %2254 = vmax.xlane.f32.xlu0 %v2253
        %v2255 = vpop.xlane.xlu0 %2254
        %v2256 = vsel %vm1407, %v2144, -inf
        %2257 = vmax.xlane.f32.xlu0 %v2256
        %v2258 = vpop.xlane.xlu0 %2257
        %v2259 = vsel %vm1407, %v2190, -inf
        %2260 = vmax.xlane.f32.xlu0 %v2259
        %v2261 = vpop.xlane.xlu0 %2260
        %v2262 = vsel %vm1407, %v2236, -inf
        %2263 = vmax.xlane.f32.xlu0 %v2262
        %v2264 = vpop.xlane.xlu0 %2263
        %v2265 = vsub.f32 %v1914, %v2243
        %v2266 = vsub.f32 %v1960, %v2246
        %v2267 = vsub.f32 %v2006, %v2249
        %v2268 = vsub.f32 %v2052, %v2252
        %v2269 = vsub.f32 %v2098, %v2255
        %v2270 = vsub.f32 %v2144, %v2258
        %v2271 = vsub.f32 %v2190, %v2261
        %v2272 = vsub.f32 %v2236, %v2264
        %v2273 = vmul.f32 %v2265, 1.442695
        %v2274 = vpow.pop %v2273
        %v2275 = vmul.f32 %v2266, 1.442695
        %v2276 = vpow.pop %v2275
        %v2277 = vmul.f32 %v2267, 1.442695
        %v2278 = vpow.pop %v2277
        %v2279 = vmul.f32 %v2268, 1.442695
        %v2280 = vpow.pop %v2279
        %v2281 = vmul.f32 %v2269, 1.442695
        %v2282 = vpow.pop %v2281
        %v2283 = vmul.f32 %v2270, 1.442695
        %v2284 = vpow.pop %v2283
        %v2285 = vmul.f32 %v2271, 1.442695
        %v2286 = vpow.pop %v2285
        %v2287 = vmul.f32 %v2272, 1.442695
        %v2288 = vpow.pop %v2287
        %v2289 = vsel %vm1407, %v2274, 0.0
        %2290 = vadd.xlane.f32.xlu0 %v2289
        %v2291 = vpop.xlane.xlu0 %2290
        %v2292 = vsel %vm1407, %v2276, 0.0
        %2293 = vadd.xlane.f32.xlu0 %v2292
        %v2294 = vpop.xlane.xlu0 %2293
        %v2295 = vsel %vm1407, %v2278, 0.0
        %2296 = vadd.xlane.f32.xlu0 %v2295
        %v2297 = vpop.xlane.xlu0 %2296
        %v2298 = vsel %vm1407, %v2280, 0.0
        %2299 = vadd.xlane.f32.xlu0 %v2298
        %v2300 = vpop.xlane.xlu0 %2299
        %v2301 = vsel %vm1407, %v2282, 0.0
        %2302 = vadd.xlane.f32.xlu0 %v2301
        %v2303 = vpop.xlane.xlu0 %2302
        %v2304 = vsel %vm1407, %v2284, 0.0
        %2305 = vadd.xlane.f32.xlu0 %v2304
        %v2306 = vpop.xlane.xlu0 %2305
        %v2307 = vsel %vm1407, %v2286, 0.0
        %2308 = vadd.xlane.f32.xlu0 %v2307
        %v2309 = vpop.xlane.xlu0 %2308
        %v2310 = vsel %vm1407, %v2288, 0.0
        %2311 = vadd.xlane.f32.xlu0 %v2310
        %v2312 = vpop.xlane.xlu0 %2311
        %v2313 = vrcp.pop %v2291
        %v2314 = vrcp.pop %v2294
        %v2315 = vrcp.pop %v2297
        %v2316 = vrcp.pop %v2300
        %v2317 = vrcp.pop %v2303
        %v2318 = vrcp.pop %v2306
        %v2319 = vrcp.pop %v2309
        %v2320 = vrcp.pop %v2312
        %v2321 = vmul.f32 %v2274, %v2313
        %v2322 = vmul.f32 %v2276, %v2314
        %v2323 = vmul.f32 %v2278, %v2315
        %v2324 = vmul.f32 %v2280, %v2316
        %v2325 = vmul.f32 %v2282, %v2317
        %v2326 = vmul.f32 %v2284, %v2318
        %v2327 = vmul.f32 %v2286, %v2319
        %v2328 = vmul.f32 %v2288, %v2320
        %v2329 = vpack.c.bf16 %v2321, %v2321
        %v2331 = vrot.slane %v1079, 4
        %v2333 = vsel %vm1407, %v2329, 0
        %v2336 = vsel %vm1500, %v2331, 0
        %2338 = vmatprep.subr.bf16.mxu0 0
        %2339 = vmatpush1.bf16.msra.mxu0 %v2336
        %2340 = vmatprep.subr.bf16.mxu0 0
        %2341 = vmatpush1.bf16.msra.mxu0 0
        %2342 = vmatprep.subr.bf16.mxu0 0
        %2343 = vmatpush1.bf16.msra.mxu0 0
        %2344 = vmatprep.subr.bf16.mxu0 0
        %2345 = vmatpush1.bf16.msra.mxu0 0
        %2346 = vmatprep.subr.bf16.mxu0 0
        %2347 = vmatpush1.bf16.msra.mxu0 0
        %2348 = vmatprep.subr.bf16.mxu0 0
        %2349 = vmatpush1.bf16.msra.mxu0 0
        %2350 = vmatprep.subr.bf16.mxu0 0
        %2351 = vmatpush1.bf16.msra.mxu0 0
        %2352 = vmatprep.subr.bf16.mxu0 0
        %2353 = vmatpush1.bf16.msra.mxu0 0
        %2354 = vmatprep.subr.bf16.mxu0 0
        %2355 = vmatpush1.bf16.msra.mxu0 0
        %2356 = vmatprep.subr.bf16.mxu0 0
        %2357 = vmatpush1.bf16.msra.mxu0 0
        %2358 = vmatprep.subr.bf16.mxu0 0
        %2359 = vmatpush1.bf16.msra.mxu0 0
        %2360 = vmatprep.subr.bf16.mxu0 0
        %2361 = vmatpush1.bf16.msra.mxu0 0
        %2362 = vmatprep.subr.bf16.mxu0 0
        %2363 = vmatpush1.bf16.msra.mxu0 0
        %2364 = vmatprep.subr.bf16.mxu0 0
        %2365 = vmatpush1.bf16.msra.mxu0 0
        %2366 = vmatprep.subr.bf16.mxu0 0
        %2367 = vmatpush1.bf16.msra.mxu0 0
        %2368 = vmatprep.subr.bf16.mxu0 0
        %2369 = vmatpush1.bf16.msra.mxu0 0
        %2370 = vmatprep.mubr.bf16.mxu0 0
        %2371 = vmatmul.mubr.bf16.gmra.mrb[0].mxu0 %v2333
        %v2372 = vpop.f32.mrb[0].mxu0
        %v2373 = vadd.f32 0.0, %v2372
        %v2374 = vpop.f32.mrb[0].mxu0
        %v2375 = vpop.f32.mrb[0].mxu0
        %v2376 = vpop.f32.mrb[0].mxu0
        %2377 = vdwg.mxu0
        %v2378 = vpack.c.bf16 %v2322, %v2322
        %v2380 = vrot.slane %v1080, 4
        %v2382 = vsel %vm1407, %v2378, 0
        %v2385 = vsel %vm1500, %v2380, 0
        %2387 = vmatprep.subr.bf16.mxu0 0
        %2388 = vmatpush1.bf16.msra.mxu0 %v2385
        %2389 = vmatprep.subr.bf16.mxu0 0
        %2390 = vmatpush1.bf16.msra.mxu0 0
        %2391 = vmatprep.subr.bf16.mxu0 0
        %2392 = vmatpush1.bf16.msra.mxu0 0
        %2393 = vmatprep.subr.bf16.mxu0 0
        %2394 = vmatpush1.bf16.msra.mxu0 0
        %2395 = vmatprep.subr.bf16.mxu0 0
        %2396 = vmatpush1.bf16.msra.mxu0 0
        %2397 = vmatprep.subr.bf16.mxu0 0
        %2398 = vmatpush1.bf16.msra.mxu0 0
        %2399 = vmatprep.subr.bf16.mxu0 0
        %2400 = vmatpush1.bf16.msra.mxu0 0
        %2401 = vmatprep.subr.bf16.mxu0 0
        %2402 = vmatpush1.bf16.msra.mxu0 0
        %2403 = vmatprep.subr.bf16.mxu0 0
        %2404 = vmatpush1.bf16.msra.mxu0 0
        %2405 = vmatprep.subr.bf16.mxu0 0
        %2406 = vmatpush1.bf16.msra.mxu0 0
        %2407 = vmatprep.subr.bf16.mxu0 0
        %2408 = vmatpush1.bf16.msra.mxu0 0
        %2409 = vmatprep.subr.bf16.mxu0 0
        %2410 = vmatpush1.bf16.msra.mxu0 0
        %2411 = vmatprep.subr.bf16.mxu0 0
        %2412 = vmatpush1.bf16.msra.mxu0 0
        %2413 = vmatprep.subr.bf16.mxu0 0
        %2414 = vmatpush1.bf16.msra.mxu0 0
        %2415 = vmatprep.subr.bf16.mxu0 0
        %2416 = vmatpush1.bf16.msra.mxu0 0
        %2417 = vmatprep.subr.bf16.mxu0 0
        %2418 = vmatpush1.bf16.msra.mxu0 0
        %2419 = vmatprep.mubr.bf16.mxu0 0
        %2420 = vmatmul.mubr.bf16.gmra.mrb[0].mxu0 %v2382
        %v2421 = vpop.f32.mrb[0].mxu0
        %v2422 = vadd.f32 0.0, %v2421
        %v2423 = vpop.f32.mrb[0].mxu0
        %v2424 = vpop.f32.mrb[0].mxu0
        %v2425 = vpop.f32.mrb[0].mxu0
        %2426 = vdwg.mxu0
        %v2427 = vpack.c.bf16 %v2323, %v2323
        %v2429 = vrot.slane %v1081, 4
        %v2431 = vsel %vm1407, %v2427, 0
        %v2434 = vsel %vm1500, %v2429, 0
        %2436 = vmatprep.subr.bf16.mxu0 0
        %2437 = vmatpush1.bf16.msra.mxu0 %v2434
        %2438 = vmatprep.subr.bf16.mxu0 0
        %2439 = vmatpush1.bf16.msra.mxu0 0
        %2440 = vmatprep.subr.bf16.mxu0 0
        %2441 = vmatpush1.bf16.msra.mxu0 0
        %2442 = vmatprep.subr.bf16.mxu0 0
        %2443 = vmatpush1.bf16.msra.mxu0 0
        %2444 = vmatprep.subr.bf16.mxu0 0
        %2445 = vmatpush1.bf16.msra.mxu0 0
        %2446 = vmatprep.subr.bf16.mxu0 0
        %2447 = vmatpush1.bf16.msra.mxu0 0
        %2448 = vmatprep.subr.bf16.mxu0 0
        %2449 = vmatpush1.bf16.msra.mxu0 0
        %2450 = vmatprep.subr.bf16.mxu0 0
        %2451 = vmatpush1.bf16.msra.mxu0 0
        %2452 = vmatprep.subr.bf16.mxu0 0
        %2453 = vmatpush1.bf16.msra.mxu0 0
        %2454 = vmatprep.subr.bf16.mxu0 0
        %2455 = vmatpush1.bf16.msra.mxu0 0
        %2456 = vmatprep.subr.bf16.mxu0 0
        %2457 = vmatpush1.bf16.msra.mxu0 0
        %2458 = vmatprep.subr.bf16.mxu0 0
        %2459 = vmatpush1.bf16.msra.mxu0 0
        %2460 = vmatprep.subr.bf16.mxu0 0
        %2461 = vmatpush1.bf16.msra.mxu0 0
        %2462 = vmatprep.subr.bf16.mxu0 0
        %2463 = vmatpush1.bf16.msra.mxu0 0
        %2464 = vmatprep.subr.bf16.mxu0 0
        %2465 = vmatpush1.bf16.msra.mxu0 0
        %2466 = vmatprep.subr.bf16.mxu0 0
        %2467 = vmatpush1.bf16.msra.mxu0 0
        %2468 = vmatprep.mubr.bf16.mxu0 0
        %2469 = vmatmul.mubr.bf16.gmra.mrb[0].mxu0 %v2431
        %v2470 = vpop.f32.mrb[0].mxu0
        %v2471 = vadd.f32 0.0, %v2470
        %v2472 = vpop.f32.mrb[0].mxu0
        %v2473 = vpop.f32.mrb[0].mxu0
        %v2474 = vpop.f32.mrb[0].mxu0
        %2475 = vdwg.mxu0
        %v2476 = vpack.c.bf16 %v2324, %v2324
        %v2478 = vrot.slane %v1082, 4
        %v2480 = vsel %vm1407, %v2476, 0
        %v2483 = vsel %vm1500, %v2478, 0
        %2485 = vmatprep.subr.bf16.mxu0 0
        %2486 = vmatpush1.bf16.msra.mxu0 %v2483
        %2487 = vmatprep.subr.bf16.mxu0 0
        %2488 = vmatpush1.bf16.msra.mxu0 0
        %2489 = vmatprep.subr.bf16.mxu0 0
        %2490 = vmatpush1.bf16.msra.mxu0 0
        %2491 = vmatprep.subr.bf16.mxu0 0
        %2492 = vmatpush1.bf16.msra.mxu0 0
        %2493 = vmatprep.subr.bf16.mxu0 0
        %2494 = vmatpush1.bf16.msra.mxu0 0
        %2495 = vmatprep.subr.bf16.mxu0 0
        %2496 = vmatpush1.bf16.msra.mxu0 0
        %2497 = vmatprep.subr.bf16.mxu0 0
        %2498 = vmatpush1.bf16.msra.mxu0 0
        %2499 = vmatprep.subr.bf16.mxu0 0
        %2500 = vmatpush1.bf16.msra.mxu0 0
        %2501 = vmatprep.subr.bf16.mxu0 0
        %2502 = vmatpush1.bf16.msra.mxu0 0
        %2503 = vmatprep.subr.bf16.mxu0 0
        %2504 = vmatpush1.bf16.msra.mxu0 0
        %2505 = vmatprep.subr.bf16.mxu0 0
        %2506 = vmatpush1.bf16.msra.mxu0 0
        %2507 = vmatprep.subr.bf16.mxu0 0
        %2508 = vmatpush1.bf16.msra.mxu0 0
        %2509 = vmatprep.subr.bf16.mxu0 0
        %2510 = vmatpush1.bf16.msra.mxu0 0
        %2511 = vmatprep.subr.bf16.mxu0 0
        %2512 = vmatpush1.bf16.msra.mxu0 0
        %2513 = vmatprep.subr.bf16.mxu0 0
        %2514 = vmatpush1.bf16.msra.mxu0 0
        %2515 = vmatprep.subr.bf16.mxu0 0
        %2516 = vmatpush1.bf16.msra.mxu0 0
        %2517 = vmatprep.mubr.bf16.mxu0 0
        %2518 = vmatmul.mubr.bf16.gmra.mrb[0].mxu0 %v2480
        %v2519 = vpop.f32.mrb[0].mxu0
        %v2520 = vadd.f32 0.0, %v2519
        %v2521 = vpop.f32.mrb[0].mxu0
        %v2522 = vpop.f32.mrb[0].mxu0
        %v2523 = vpop.f32.mrb[0].mxu0
        %2524 = vdwg.mxu0
        %v2525 = vpack.c.bf16 %v2325, %v2325
        %v2527 = vrot.slane %v1083, 4
        %v2529 = vsel %vm1407, %v2525, 0
        %v2532 = vsel %vm1500, %v2527, 0
        %2534 = vmatprep.subr.bf16.mxu0 0
        %2535 = vmatpush1.bf16.msra.mxu0 %v2532
        %2536 = vmatprep.subr.bf16.mxu0 0
        %2537 = vmatpush1.bf16.msra.mxu0 0
        %2538 = vmatprep.subr.bf16.mxu0 0
        %2539 = vmatpush1.bf16.msra.mxu0 0
        %2540 = vmatprep.subr.bf16.mxu0 0
        %2541 = vmatpush1.bf16.msra.mxu0 0
        %2542 = vmatprep.subr.bf16.mxu0 0
        %2543 = vmatpush1.bf16.msra.mxu0 0
        %2544 = vmatprep.subr.bf16.mxu0 0
        %2545 = vmatpush1.bf16.msra.mxu0 0
        %2546 = vmatprep.subr.bf16.mxu0 0
        %2547 = vmatpush1.bf16.msra.mxu0 0
        %2548 = vmatprep.subr.bf16.mxu0 0
        %2549 = vmatpush1.bf16.msra.mxu0 0
        %2550 = vmatprep.subr.bf16.mxu0 0
        %2551 = vmatpush1.bf16.msra.mxu0 0
        %2552 = vmatprep.subr.bf16.mxu0 0
        %2553 = vmatpush1.bf16.msra.mxu0 0
        %2554 = vmatprep.subr.bf16.mxu0 0
        %2555 = vmatpush1.bf16.msra.mxu0 0
        %2556 = vmatprep.subr.bf16.mxu0 0
        %2557 = vmatpush1.bf16.msra.mxu0 0
        %2558 = vmatprep.subr.bf16.mxu0 0
        %2559 = vmatpush1.bf16.msra.mxu0 0
        %2560 = vmatprep.subr.bf16.mxu0 0
        %2561 = vmatpush1.bf16.msra.mxu0 0
        %2562 = vmatprep.subr.bf16.mxu0 0
        %2563 = vmatpush1.bf16.msra.mxu0 0
        %2564 = vmatprep.subr.bf16.mxu0 0
        %2565 = vmatpush1.bf16.msra.mxu0 0
        %2566 = vmatprep.mubr.bf16.mxu0 0
        %2567 = vmatmul.mubr.bf16.gmra.mrb[0].mxu0 %v2529
        %v2568 = vpop.f32.mrb[0].mxu0
        %v2569 = vadd.f32 0.0, %v2568
        %v2570 = vpop.f32.mrb[0].mxu0
        %v2571 = vpop.f32.mrb[0].mxu0
        %v2572 = vpop.f32.mrb[0].mxu0
        %2573 = vdwg.mxu0
        %v2574 = vpack.c.bf16 %v2326, %v2326
        %v2576 = vrot.slane %v1084, 4
        %v2578 = vsel %vm1407, %v2574, 0
        %v2581 = vsel %vm1500, %v2576, 0
        %2583 = vmatprep.subr.bf16.mxu0 0
        %2584 = vmatpush1.bf16.msra.mxu0 %v2581
        %2585 = vmatprep.subr.bf16.mxu0 0
        %2586 = vmatpush1.bf16.msra.mxu0 0
        %2587 = vmatprep.subr.bf16.mxu0 0
        %2588 = vmatpush1.bf16.msra.mxu0 0
        %2589 = vmatprep.subr.bf16.mxu0 0
        %2590 = vmatpush1.bf16.msra.mxu0 0
        %2591 = vmatprep.subr.bf16.mxu0 0
        %2592 = vmatpush1.bf16.msra.mxu0 0
        %2593 = vmatprep.subr.bf16.mxu0 0
        %2594 = vmatpush1.bf16.msra.mxu0 0
        %2595 = vmatprep.subr.bf16.mxu0 0
        %2596 = vmatpush1.bf16.msra.mxu0 0
        %2597 = vmatprep.subr.bf16.mxu0 0
        %2598 = vmatpush1.bf16.msra.mxu0 0
        %2599 = vmatprep.subr.bf16.mxu0 0
        %2600 = vmatpush1.bf16.msra.mxu0 0
        %2601 = vmatprep.subr.bf16.mxu0 0
        %2602 = vmatpush1.bf16.msra.mxu0 0
        %2603 = vmatprep.subr.bf16.mxu0 0
        %2604 = vmatpush1.bf16.msra.mxu0 0
        %2605 = vmatprep.subr.bf16.mxu0 0
        %2606 = vmatpush1.bf16.msra.mxu0 0
        %2607 = vmatprep.subr.bf16.mxu0 0
        %2608 = vmatpush1.bf16.msra.mxu0 0
        %2609 = vmatprep.subr.bf16.mxu0 0
        %2610 = vmatpush1.bf16.msra.mxu0 0
        %2611 = vmatprep.subr.bf16.mxu0 0
        %2612 = vmatpush1.bf16.msra.mxu0 0
        %2613 = vmatprep.subr.bf16.mxu0 0
        %2614 = vmatpush1.bf16.msra.mxu0 0
        %2615 = vmatprep.mubr.bf16.mxu0 0
        %2616 = vmatmul.mubr.bf16.gmra.mrb[0].mxu0 %v2578
        %v2617 = vpop.f32.mrb[0].mxu0
        %v2618 = vadd.f32 0.0, %v2617
        %v2619 = vpop.f32.mrb[0].mxu0
        %v2620 = vpop.f32.mrb[0].mxu0
        %v2621 = vpop.f32.mrb[0].mxu0
        %2622 = vdwg.mxu0
        %v2623 = vpack.c.bf16 %v2327, %v2327
        %v2625 = vrot.slane %v1085, 4
        %v2627 = vsel %vm1407, %v2623, 0
        %v2630 = vsel %vm1500, %v2625, 0
        %2632 = vmatprep.subr.bf16.mxu0 0
        %2633 = vmatpush1.bf16.msra.mxu0 %v2630
        %2634 = vmatprep.subr.bf16.mxu0 0
        %2635 = vmatpush1.bf16.msra.mxu0 0
        %2636 = vmatprep.subr.bf16.mxu0 0
        %2637 = vmatpush1.bf16.msra.mxu0 0
        %2638 = vmatprep.subr.bf16.mxu0 0
        %2639 = vmatpush1.bf16.msra.mxu0 0
        %2640 = vmatprep.subr.bf16.mxu0 0
        %2641 = vmatpush1.bf16.msra.mxu0 0
        %2642 = vmatprep.subr.bf16.mxu0 0
        %2643 = vmatpush1.bf16.msra.mxu0 0
        %2644 = vmatprep.subr.bf16.mxu0 0
        %2645 = vmatpush1.bf16.msra.mxu0 0
        %2646 = vmatprep.subr.bf16.mxu0 0
        %2647 = vmatpush1.bf16.msra.mxu0 0
        %2648 = vmatprep.subr.bf16.mxu0 0
        %2649 = vmatpush1.bf16.msra.mxu0 0
        %2650 = vmatprep.subr.bf16.mxu0 0
        %2651 = vmatpush1.bf16.msra.mxu0 0
        %2652 = vmatprep.subr.bf16.mxu0 0
        %2653 = vmatpush1.bf16.msra.mxu0 0
        %2654 = vmatprep.subr.bf16.mxu0 0
        %2655 = vmatpush1.bf16.msra.mxu0 0
        %2656 = vmatprep.subr.bf16.mxu0 0
        %2657 = vmatpush1.bf16.msra.mxu0 0
        %2658 = vmatprep.subr.bf16.mxu0 0
        %2659 = vmatpush1.bf16.msra.mxu0 0
        %2660 = vmatprep.subr.bf16.mxu0 0
        %2661 = vmatpush1.bf16.msra.mxu0 0
        %2662 = vmatprep.subr.bf16.mxu0 0
        %2663 = vmatpush1.bf16.msra.mxu0 0
        %2664 = vmatprep.mubr.bf16.mxu0 0
        %2665 = vmatmul.mubr.bf16.gmra.mrb[0].mxu0 %v2627
        %v2666 = vpop.f32.mrb[0].mxu0
        %v2667 = vadd.f32 0.0, %v2666
        %v2668 = vpop.f32.mrb[0].mxu0
        %v2669 = vpop.f32.mrb[0].mxu0
        %v2670 = vpop.f32.mrb[0].mxu0
        %2671 = vdwg.mxu0
        %v2672 = vpack.c.bf16 %v2328, %v2328
        %v2674 = vrot.slane %v1086, 4
        %v2676 = vsel %vm1407, %v2672, 0
        %v2679 = vsel %vm1500, %v2674, 0
        %2681 = vmatprep.subr.bf16.mxu0 0
        %2682 = vmatpush1.bf16.msra.mxu0 %v2679
        %2683 = vmatprep.subr.bf16.mxu0 0
        %2684 = vmatpush1.bf16.msra.mxu0 0
        %2685 = vmatprep.subr.bf16.mxu0 0
        %2686 = vmatpush1.bf16.msra.mxu0 0
        %2687 = vmatprep.subr.bf16.mxu0 0
        %2688 = vmatpush1.bf16.msra.mxu0 0
        %2689 = vmatprep.subr.bf16.mxu0 0
        %2690 = vmatpush1.bf16.msra.mxu0 0
        %2691 = vmatprep.subr.bf16.mxu0 0
        %2692 = vmatpush1.bf16.msra.mxu0 0
        %2693 = vmatprep.subr.bf16.mxu0 0
        %2694 = vmatpush1.bf16.msra.mxu0 0
        %2695 = vmatprep.subr.bf16.mxu0 0
        %2696 = vmatpush1.bf16.msra.mxu0 0
        %2697 = vmatprep.subr.bf16.mxu0 0
        %2698 = vmatpush1.bf16.msra.mxu0 0
        %2699 = vmatprep.subr.bf16.mxu0 0
        %2700 = vmatpush1.bf16.msra.mxu0 0
        %2701 = vmatprep.subr.bf16.mxu0 0
        %2702 = vmatpush1.bf16.msra.mxu0 0
        %2703 = vmatprep.subr.bf16.mxu0 0
        %2704 = vmatpush1.bf16.msra.mxu0 0
        %2705 = vmatprep.subr.bf16.mxu0 0
        %2706 = vmatpush1.bf16.msra.mxu0 0
        %2707 = vmatprep.subr.bf16.mxu0 0
        %2708 = vmatpush1.bf16.msra.mxu0 0
        %2709 = vmatprep.subr.bf16.mxu0 0
        %2710 = vmatpush1.bf16.msra.mxu0 0
        %2711 = vmatprep.subr.bf16.mxu0 0
        %2712 = vmatpush1.bf16.msra.mxu0 0
        %2713 = vmatprep.mubr.bf16.mxu0 0
        %2714 = vmatmul.mubr.bf16.gmra.mrb[0].mxu0 %v2676
        %v2715 = vpop.f32.mrb[0].mxu0
        %v2716 = vadd.f32 0.0, %v2715
        %v2717 = vpop.f32.mrb[0].mxu0
        %v2718 = vpop.f32.mrb[0].mxu0
        %v2719 = vpop.f32.mrb[0].mxu0
        %2720 = vdwg.mxu0
        %v2721 = vpack.c.bf16 %v2373, %v1539
        %v2722 = vpack.c.bf16 %v2422, %v1586
        %v2723 = vpack.c.bf16 %v2471, %v1633
        %v2724 = vpack.c.bf16 %v2520, %v1680
        %v2725 = vpack.c.bf16 %v2569, %v1727
        %v2726 = vpack.c.bf16 %v2618, %v1774
        %v2727 = vpack.c.bf16 %v2667, %v1821
        %v2728 = vpack.c.bf16 %v2716, %v1868
        %v2729 = vld [vmem:[#allocation7] sm:$0xf]
        %v2730 = vld [vmem:[#allocation7 + $0x4] sm:$0xf]
        %v2731 = vld [vmem:[#allocation7 + $0x8] sm:$0xf]
        %v2732 = vld [vmem:[#allocation7 + $0xc] sm:$0xf]
        %v2733 = vld [vmem:[#allocation7 + $0x10] sm:$0xf]
        %v2734 = vld [vmem:[#allocation7 + $0x14] sm:$0xf]
        %v2735 = vld [vmem:[#allocation7 + $0x18] sm:$0xf]
        %v2736 = vld [vmem:[#allocation7 + $0x1c] sm:$0xf]
        %v2737 = vld [vmem:[#allocation7 + $0x20] sm:$0xf]
        %v2738 = vld [vmem:[#allocation7 + $0x24] sm:$0xf]
        %v2739 = vld [vmem:[#allocation7 + $0x28] sm:$0xf]
        %v2740 = vld [vmem:[#allocation7 + $0x2c] sm:$0xf]
        %v2741 = vld [vmem:[#allocation7 + $0x30] sm:$0xf]
        %v2742 = vld [vmem:[#allocation7 + $0x34] sm:$0xf]
        %v2743 = vld [vmem:[#allocation7 + $0x38] sm:$0xf]
        %v2744 = vld [vmem:[#allocation7 + $0x3c] sm:$0xf]
        %v2745 = vld [vmem:[#allocation7 + $0x40] sm:$0xf]
        %v2746 = vld [vmem:[#allocation7 + $0x44] sm:$0xf]
        %v2747 = vld [vmem:[#allocation7 + $0x48] sm:$0xf]
        %v2748 = vld [vmem:[#allocation7 + $0x4c] sm:$0xf]
        %v2749 = vld [vmem:[#allocation7 + $0x50] sm:$0xf]
        %v2750 = vld [vmem:[#allocation7 + $0x54] sm:$0xf]
        %v2751 = vld [vmem:[#allocation7 + $0x58] sm:$0xf]
        %v2752 = vld [vmem:[#allocation7 + $0x5c] sm:$0xf]
        %v2753 = vld [vmem:[#allocation7 + $0x60] sm:$0xf]
        %v2754 = vld [vmem:[#allocation7 + $0x64] sm:$0xf]
        %v2755 = vld [vmem:[#allocation7 + $0x68] sm:$0xf]
        %v2756 = vld [vmem:[#allocation7 + $0x6c] sm:$0xf]
        %v2757 = vld [vmem:[#allocation7 + $0x70] sm:$0xf]
        %v2758 = vld [vmem:[#allocation7 + $0x74] sm:$0xf]
        %v2759 = vld [vmem:[#allocation7 + $0x78] sm:$0xf]
        %v2760 = vld [vmem:[#allocation7 + $0x7c] sm:$0xf]
        %v2761 = vld [vmem:[#allocation7 + $0x80] sm:$0xf]
        %v2762 = vld [vmem:[#allocation7 + $0x84] sm:$0xf]
        %v2763 = vld [vmem:[#allocation7 + $0x88] sm:$0xf]
        %v2764 = vld [vmem:[#allocation7 + $0x8c] sm:$0xf]
        %v2765 = vld [vmem:[#allocation7 + $0x90] sm:$0xf]
        %v2766 = vld [vmem:[#allocation7 + $0x94] sm:$0xf]
        %v2767 = vld [vmem:[#allocation7 + $0x98] sm:$0xf]
        %v2768 = vld [vmem:[#allocation7 + $0x9c] sm:$0xf]
        %v2769 = vld [vmem:[#allocation7 + $0xa0] sm:$0xf]
        %v2770 = vld [vmem:[#allocation7 + $0xa4] sm:$0xf]
        %v2771 = vld [vmem:[#allocation7 + $0xa8] sm:$0xf]
        %v2772 = vld [vmem:[#allocation7 + $0xac] sm:$0xf]
        %v2773 = vld [vmem:[#allocation7 + $0xb0] sm:$0xf]
        %v2774 = vld [vmem:[#allocation7 + $0xb4] sm:$0xf]
        %v2775 = vld [vmem:[#allocation7 + $0xb8] sm:$0xf]
        %v2776 = vld [vmem:[#allocation7 + $0xbc] sm:$0xf]
        %v2777 = vld [vmem:[#allocation7 + $0xc0] sm:$0xf]
        %v2778 = vld [vmem:[#allocation7 + $0xc4] sm:$0xf]
        %v2779 = vld [vmem:[#allocation7 + $0xc8] sm:$0xf]
        %v2780 = vld [vmem:[#allocation7 + $0xcc] sm:$0xf]
        %v2781 = vld [vmem:[#allocation7 + $0xd0] sm:$0xf]
        %v2782 = vld [vmem:[#allocation7 + $0xd4] sm:$0xf]
        %v2783 = vld [vmem:[#allocation7 + $0xd8] sm:$0xf]
        %v2784 = vld [vmem:[#allocation7 + $0xdc] sm:$0xf]
        %v2785 = vld [vmem:[#allocation7 + $0xe0] sm:$0xf]
        %v2786 = vld [vmem:[#allocation7 + $0xe4] sm:$0xf]
        %v2787 = vld [vmem:[#allocation7 + $0xe8] sm:$0xf]
        %v2788 = vld [vmem:[#allocation7 + $0xec] sm:$0xf]
        %v2789 = vld [vmem:[#allocation7 + $0xf0] sm:$0xf]
        %v2790 = vld [vmem:[#allocation7 + $0xf4] sm:$0xf]
        %v2791 = vld [vmem:[#allocation7 + $0xf8] sm:$0xf]
        %v2792 = vld [vmem:[#allocation7 + $0xfc] sm:$0xf]
        %v2793 = vld [vmem:[#allocation7 + $0x100] sm:$0xf]
        %v2794 = vld [vmem:[#allocation7 + $0x104] sm:$0xf]
        %v2795 = vld [vmem:[#allocation7 + $0x108] sm:$0xf]
        %v2796 = vld [vmem:[#allocation7 + $0x10c] sm:$0xf]
        %v2797 = vld [vmem:[#allocation7 + $0x110] sm:$0xf]
        %v2798 = vld [vmem:[#allocation7 + $0x114] sm:$0xf]
        %v2799 = vld [vmem:[#allocation7 + $0x118] sm:$0xf]
        %v2800 = vld [vmem:[#allocation7 + $0x11c] sm:$0xf]
        %v2801 = vld [vmem:[#allocation7 + $0x120] sm:$0xf]
        %v2802 = vld [vmem:[#allocation7 + $0x124] sm:$0xf]
        %v2803 = vld [vmem:[#allocation7 + $0x128] sm:$0xf]
        %v2804 = vld [vmem:[#allocation7 + $0x12c] sm:$0xf]
        %v2805 = vld [vmem:[#allocation7 + $0x130] sm:$0xf]
        %v2806 = vld [vmem:[#allocation7 + $0x134] sm:$0xf]
        %v2807 = vld [vmem:[#allocation7 + $0x138] sm:$0xf]
        %v2808 = vld [vmem:[#allocation7 + $0x13c] sm:$0xf]
        %v2809 = vld [vmem:[#allocation7 + $0x140] sm:$0xf]
        %v2810 = vld [vmem:[#allocation7 + $0x144] sm:$0xf]
        %v2811 = vld [vmem:[#allocation7 + $0x148] sm:$0xf]
        %v2812 = vld [vmem:[#allocation7 + $0x14c] sm:$0xf]
        %v2813 = vld [vmem:[#allocation7 + $0x150] sm:$0xf]
        %v2814 = vld [vmem:[#allocation7 + $0x154] sm:$0xf]
        %v2815 = vld [vmem:[#allocation7 + $0x158] sm:$0xf]
        %v2816 = vld [vmem:[#allocation7 + $0x15c] sm:$0xf]
        %v2817 = vld [vmem:[#allocation7 + $0x160] sm:$0xf]
        %v2818 = vld [vmem:[#allocation7 + $0x164] sm:$0xf]
        %v2819 = vld [vmem:[#allocation7 + $0x168] sm:$0xf]
        %v2820 = vld [vmem:[#allocation7 + $0x16c] sm:$0xf]
        %v2821 = vld [vmem:[#allocation7 + $0x170] sm:$0xf]
        %v2822 = vld [vmem:[#allocation7 + $0x174] sm:$0xf]
        %v2823 = vld [vmem:[#allocation7 + $0x178] sm:$0xf]
        %v2824 = vld [vmem:[#allocation7 + $0x17c] sm:$0xf]
        %v2825 = vld [vmem:[#allocation7 + $0x180] sm:$0xf]
        %v2826 = vld [vmem:[#allocation7 + $0x184] sm:$0xf]
        %v2827 = vld [vmem:[#allocation7 + $0x188] sm:$0xf]
        %v2828 = vld [vmem:[#allocation7 + $0x18c] sm:$0xf]
        %v2829 = vld [vmem:[#allocation7 + $0x190] sm:$0xf]
        %v2830 = vld [vmem:[#allocation7 + $0x194] sm:$0xf]
        %v2831 = vld [vmem:[#allocation7 + $0x198] sm:$0xf]
        %v2832 = vld [vmem:[#allocation7 + $0x19c] sm:$0xf]
        %v2833 = vld [vmem:[#allocation7 + $0x1a0] sm:$0xf]
        %v2834 = vld [vmem:[#allocation7 + $0x1a4] sm:$0xf]
        %v2835 = vld [vmem:[#allocation7 + $0x1a8] sm:$0xf]
        %v2836 = vld [vmem:[#allocation7 + $0x1ac] sm:$0xf]
        %v2837 = vld [vmem:[#allocation7 + $0x1b0] sm:$0xf]
        %v2838 = vld [vmem:[#allocation7 + $0x1b4] sm:$0xf]
        %v2839 = vld [vmem:[#allocation7 + $0x1b8] sm:$0xf]
        %v2840 = vld [vmem:[#allocation7 + $0x1bc] sm:$0xf]
        %v2841 = vld [vmem:[#allocation7 + $0x1c0] sm:$0xf]
        %v2842 = vld [vmem:[#allocation7 + $0x1c4] sm:$0xf]
        %v2843 = vld [vmem:[#allocation7 + $0x1c8] sm:$0xf]
        %v2844 = vld [vmem:[#allocation7 + $0x1cc] sm:$0xf]
        %v2845 = vld [vmem:[#allocation7 + $0x1d0] sm:$0xf]
        %v2846 = vld [vmem:[#allocation7 + $0x1d4] sm:$0xf]
        %v2847 = vld [vmem:[#allocation7 + $0x1d8] sm:$0xf]
        %v2848 = vld [vmem:[#allocation7 + $0x1dc] sm:$0xf]
        %v2849 = vld [vmem:[#allocation7 + $0x1e0] sm:$0xf]
        %v2850 = vld [vmem:[#allocation7 + $0x1e4] sm:$0xf]
        %v2851 = vld [vmem:[#allocation7 + $0x1e8] sm:$0xf]
        %v2852 = vld [vmem:[#allocation7 + $0x1ec] sm:$0xf]
        %v2853 = vld [vmem:[#allocation7 + $0x1f0] sm:$0xf]
        %v2854 = vld [vmem:[#allocation7 + $0x1f4] sm:$0xf]
        %v2855 = vld [vmem:[#allocation7 + $0x1f8] sm:$0xf]
        %v2856 = vld [vmem:[#allocation7 + $0x1fc] sm:$0xf]
        %v2857 = vld [vmem:[%s3] sm:$0x1]
        %v2859 = vlaneseq
        %v2860 = vshrl.u32 %v2859, 7
        %v2861 = vsub.s32 0, %v2860
        %v2862 = vrot.slane %v2857, %v2861
        %v2992 = vunpack.c.l.b16 %v2729
        %v2993 = vunpack.c.l.b16 %v2730
        %v2994 = vunpack.c.l.b16 %v2731
        %v2995 = vunpack.c.l.b16 %v2732
        %v2996 = vunpack.c.l.b16 %v2733
        %v2997 = vunpack.c.l.b16 %v2734
        %v2998 = vunpack.c.l.b16 %v2735
        %v2999 = vunpack.c.l.b16 %v2736
        %v3000 = vunpack.c.l.b16 %v2737
        %v3001 = vunpack.c.l.b16 %v2738
        %v3002 = vunpack.c.l.b16 %v2739
        %v3003 = vunpack.c.l.b16 %v2740
        %v3004 = vunpack.c.l.b16 %v2741
        %v3005 = vunpack.c.l.b16 %v2742
        %v3006 = vunpack.c.l.b16 %v2743
        %v3007 = vunpack.c.l.b16 %v2744
        %v3008 = vunpack.c.l.b16 %v2745
        %v3009 = vunpack.c.l.b16 %v2746
        %v3010 = vunpack.c.l.b16 %v2747
        %v3011 = vunpack.c.l.b16 %v2748
        %v3012 = vunpack.c.l.b16 %v2749
        %v3013 = vunpack.c.l.b16 %v2750
        %v3014 = vunpack.c.l.b16 %v2751
        %v3015 = vunpack.c.l.b16 %v2752
        %v3016 = vunpack.c.l.b16 %v2753
        %v3017 = vunpack.c.l.b16 %v2754
        %v3018 = vunpack.c.l.b16 %v2755
        %v3019 = vunpack.c.l.b16 %v2756
        %v3020 = vunpack.c.l.b16 %v2757
        %v3021 = vunpack.c.l.b16 %v2758
        %v3022 = vunpack.c.l.b16 %v2759
        %v3023 = vunpack.c.l.b16 %v2760
        %v3024 = vunpack.c.l.b16 %v2761
        %v3025 = vunpack.c.l.b16 %v2762
        %v3026 = vunpack.c.l.b16 %v2763
        %v3027 = vunpack.c.l.b16 %v2764
        %v3028 = vunpack.c.l.b16 %v2765
        %v3029 = vunpack.c.l.b16 %v2766
        %v3030 = vunpack.c.l.b16 %v2767
        %v3031 = vunpack.c.l.b16 %v2768
        %v3032 = vunpack.c.l.b16 %v2769
        %v3033 = vunpack.c.l.b16 %v2770
        %v3034 = vunpack.c.l.b16 %v2771
        %v3035 = vunpack.c.l.b16 %v2772
        %v3036 = vunpack.c.l.b16 %v2773
        %v3037 = vunpack.c.l.b16 %v2774
        %v3038 = vunpack.c.l.b16 %v2775
        %v3039 = vunpack.c.l.b16 %v2776
        %v3040 = vunpack.c.l.b16 %v2777
        %v3041 = vunpack.c.l.b16 %v2778
        %v3042 = vunpack.c.l.b16 %v2779
        %v3043 = vunpack.c.l.b16 %v2780
        %v3044 = vunpack.c.l.b16 %v2781
        %v3045 = vunpack.c.l.b16 %v2782
        %v3046 = vunpack.c.l.b16 %v2783
        %v3047 = vunpack.c.l.b16 %v2784
        %v3048 = vunpack.c.l.b16 %v2785
        %v3049 = vunpack.c.l.b16 %v2786
        %v3050 = vunpack.c.l.b16 %v2787
        %v3051 = vunpack.c.l.b16 %v2788
        %v3052 = vunpack.c.l.b16 %v2789
        %v3053 = vunpack.c.l.b16 %v2790
        %v3054 = vunpack.c.l.b16 %v2791
        %v3055 = vunpack.c.l.b16 %v2792
        %v3056 = vunpack.c.l.b16 %v2793
        %v3057 = vunpack.c.l.b16 %v2794
        %v3058 = vunpack.c.l.b16 %v2795
        %v3059 = vunpack.c.l.b16 %v2796
        %v3060 = vunpack.c.l.b16 %v2797
        %v3061 = vunpack.c.l.b16 %v2798
        %v3062 = vunpack.c.l.b16 %v2799
        %v3063 = vunpack.c.l.b16 %v2800
        %v3064 = vunpack.c.l.b16 %v2801
        %v3065 = vunpack.c.l.b16 %v2802
        %v3066 = vunpack.c.l.b16 %v2803
        %v3067 = vunpack.c.l.b16 %v2804
        %v3068 = vunpack.c.l.b16 %v2805
        %v3069 = vunpack.c.l.b16 %v2806
        %v3070 = vunpack.c.l.b16 %v2807
        %v3071 = vunpack.c.l.b16 %v2808
        %v3072 = vunpack.c.l.b16 %v2809
        %v3073 = vunpack.c.l.b16 %v2810
        %v3074 = vunpack.c.l.b16 %v2811
        %v3075 = vunpack.c.l.b16 %v2812
        %v3076 = vunpack.c.l.b16 %v2813
        %v3077 = vunpack.c.l.b16 %v2814
        %v3078 = vunpack.c.l.b16 %v2815
        %v3079 = vunpack.c.l.b16 %v2816
        %v3080 = vunpack.c.l.b16 %v2817
        %v3081 = vunpack.c.l.b16 %v2818
        %v3082 = vunpack.c.l.b16 %v2819
        %v3083 = vunpack.c.l.b16 %v2820
        %v3084 = vunpack.c.l.b16 %v2821
        %v3085 = vunpack.c.l.b16 %v2822
        %v3086 = vunpack.c.l.b16 %v2823
        %v3087 = vunpack.c.l.b16 %v2824
        %v3088 = vunpack.c.l.b16 %v2825
        %v3089 = vunpack.c.l.b16 %v2826
        %v3090 = vunpack.c.l.b16 %v2827
        %v3091 = vunpack.c.l.b16 %v2828
        %v3092 = vunpack.c.l.b16 %v2829
        %v3093 = vunpack.c.l.b16 %v2830
        %v3094 = vunpack.c.l.b16 %v2831
        %v3095 = vunpack.c.l.b16 %v2832
        %v3096 = vunpack.c.l.b16 %v2833
        %v3097 = vunpack.c.l.b16 %v2834
        %v3098 = vunpack.c.l.b16 %v2835
        %v3099 = vunpack.c.l.b16 %v2836
        %v3100 = vunpack.c.l.b16 %v2837
        %v3101 = vunpack.c.l.b16 %v2838
        %v3102 = vunpack.c.l.b16 %v2839
        %v3103 = vunpack.c.l.b16 %v2840
        %v3104 = vunpack.c.l.b16 %v2841
        %v3105 = vunpack.c.l.b16 %v2842
        %v3106 = vunpack.c.l.b16 %v2843
        %v3107 = vunpack.c.l.b16 %v2844
        %v3108 = vunpack.c.l.b16 %v2845
        %v3109 = vunpack.c.l.b16 %v2846
        %v3110 = vunpack.c.l.b16 %v2847
        %v3111 = vunpack.c.l.b16 %v2848
        %v3112 = vunpack.c.l.b16 %v2849
        %v3113 = vunpack.c.l.b16 %v2850
        %v3114 = vunpack.c.l.b16 %v2851
        %v3115 = vunpack.c.l.b16 %v2852
        %v3116 = vunpack.c.l.b16 %v2853
        %v3117 = vunpack.c.l.b16 %v2854
        %v3118 = vunpack.c.l.b16 %v2855
        %v3119 = vunpack.c.l.b16 %v2856
        %v3120 = vpack.c.b16 %v2993, %v2992
        %v3121 = vpack.c.b16 %v2995, %v2994
        %v3122 = vpack.c.b16 %v2997, %v2996
        %v3123 = vpack.c.b16 %v2999, %v2998
        %v3124 = vpack.c.b16 %v3001, %v3000
        %v3125 = vpack.c.b16 %v3003, %v3002
        %v3126 = vpack.c.b16 %v3005, %v3004
        %v3127 = vpack.c.b16 %v3007, %v3006
        %v3128 = vpack.c.b16 %v3009, %v3008
        %v3129 = vpack.c.b16 %v3011, %v3010
        %v3130 = vpack.c.b16 %v3013, %v3012
        %v3131 = vpack.c.b16 %v3015, %v3014
        %v3132 = vpack.c.b16 %v3017, %v3016
        %v3133 = vpack.c.b16 %v3019, %v3018
        %v3134 = vpack.c.b16 %v3021, %v3020
        %v3135 = vpack.c.b16 %v3023, %v3022
        %v3136 = vpack.c.b16 %v3025, %v3024
        %v3137 = vpack.c.b16 %v3027, %v3026
        %v3138 = vpack.c.b16 %v3029, %v3028
        %v3139 = vpack.c.b16 %v3031, %v3030
        %v3140 = vpack.c.b16 %v3033, %v3032
        %v3141 = vpack.c.b16 %v3035, %v3034
        %v3142 = vpack.c.b16 %v3037, %v3036
        %v3143 = vpack.c.b16 %v3039, %v3038
        %v3144 = vpack.c.b16 %v3041, %v3040
        %v3145 = vpack.c.b16 %v3043, %v3042
        %v3146 = vpack.c.b16 %v3045, %v3044
        %v3147 = vpack.c.b16 %v3047, %v3046
        %v3148 = vpack.c.b16 %v3049, %v3048
        %v3149 = vpack.c.b16 %v3051, %v3050
        %v3150 = vpack.c.b16 %v3053, %v3052
        %v3151 = vpack.c.b16 %v3055, %v3054
        %v3152 = vpack.c.b16 %v3057, %v3056
        %v3153 = vpack.c.b16 %v3059, %v3058
        %v3154 = vpack.c.b16 %v3061, %v3060
        %v3155 = vpack.c.b16 %v3063, %v3062
        %v3156 = vpack.c.b16 %v3065, %v3064
        %v3157 = vpack.c.b16 %v3067, %v3066
        %v3158 = vpack.c.b16 %v3069, %v3068
        %v3159 = vpack.c.b16 %v3071, %v3070
        %v3160 = vpack.c.b16 %v3073, %v3072
        %v3161 = vpack.c.b16 %v3075, %v3074
        %v3162 = vpack.c.b16 %v3077, %v3076
        %v3163 = vpack.c.b16 %v3079, %v3078
        %v3164 = vpack.c.b16 %v3081, %v3080
        %v3165 = vpack.c.b16 %v3083, %v3082
        %v3166 = vpack.c.b16 %v3085, %v3084
        %v3167 = vpack.c.b16 %v3087, %v3086
        %v3168 = vpack.c.b16 %v3089, %v3088
        %v3169 = vpack.c.b16 %v3091, %v3090
        %v3170 = vpack.c.b16 %v3093, %v3092
        %v3171 = vpack.c.b16 %v3095, %v3094
        %v3172 = vpack.c.b16 %v3097, %v3096
        %v3173 = vpack.c.b16 %v3099, %v3098
        %v3174 = vpack.c.b16 %v3101, %v3100
        %v3175 = vpack.c.b16 %v3103, %v3102
        %v3176 = vpack.c.b16 %v3105, %v3104
        %v3177 = vpack.c.b16 %v3107, %v3106
        %v3178 = vpack.c.b16 %v3109, %v3108
        %v3179 = vpack.c.b16 %v3111, %v3110
        %v3180 = vpack.c.b16 %v3113, %v3112
        %v3181 = vpack.c.b16 %v3115, %v3114
        %v3182 = vpack.c.b16 %v3117, %v3116
        %v3183 = vpack.c.b16 %v3119, %v3118
        %3248 = vmatprep.subr.bf16.mxu0 0
        %3249 = vmatpush1.bf16.msra.mxu0 %v3120
        %3250 = vmatprep.subr.bf16.mxu0 0
        %3251 = vmatpush1.bf16.msra.mxu0 %v3121
        %3252 = vmatprep.subr.bf16.mxu0 0
        %3253 = vmatpush1.bf16.msra.mxu0 %v3122
        %3254 = vmatprep.subr.bf16.mxu0 0
        %3255 = vmatpush1.bf16.msra.mxu0 %v3123
        %3256 = vmatprep.subr.bf16.mxu0 0
        %3257 = vmatpush1.bf16.msra.mxu0 %v3124
        %3258 = vmatprep.subr.bf16.mxu0 0
        %3259 = vmatpush1.bf16.msra.mxu0 %v3125
        %3260 = vmatprep.subr.bf16.mxu0 0
        %3261 = vmatpush1.bf16.msra.mxu0 %v3126
        %3262 = vmatprep.subr.bf16.mxu0 0
        %3263 = vmatpush1.bf16.msra.mxu0 %v3127
        %3264 = vmatprep.subr.bf16.mxu0 0
        %3265 = vmatpush1.bf16.msra.mxu0 %v3128
        %3266 = vmatprep.subr.bf16.mxu0 0
        %3267 = vmatpush1.bf16.msra.mxu0 %v3129
        %3268 = vmatprep.subr.bf16.mxu0 0
        %3269 = vmatpush1.bf16.msra.mxu0 %v3130
        %3270 = vmatprep.subr.bf16.mxu0 0
        %3271 = vmatpush1.bf16.msra.mxu0 %v3131
        %3272 = vmatprep.subr.bf16.mxu0 0
        %3273 = vmatpush1.bf16.msra.mxu0 %v3132
        %3274 = vmatprep.subr.bf16.mxu0 0
        %3275 = vmatpush1.bf16.msra.mxu0 %v3133
        %3276 = vmatprep.subr.bf16.mxu0 0
        %3277 = vmatpush1.bf16.msra.mxu0 %v3134
        %3278 = vmatprep.subr.bf16.mxu0 0
        %3279 = vmatpush1.bf16.msra.mxu0 %v3135
        %3280 = vmatprep.mubr.bf16.mxu0 %v2722
        %3281 = vmatmul.mubr.bf16.gmra.mrb[0].mxu0 %v2721
        %v3282 = vpop.f32.mrb[0].mxu0
        %v3283 = vadd.f32 %v2862, %v3282
        %v3284 = vpop.f32.mrb[0].mxu0
        %v3285 = vpop.f32.mrb[0].mxu0
        %v3286 = vadd.f32 %v2862, %v3285
        %v3287 = vpop.f32.mrb[0].mxu0
        %3288 = vdwg.mxu0
        %3289 = vmatprep.subr.bf16.mxu0 0
        %3290 = vmatpush1.bf16.msra.mxu0 %v3136
        %3291 = vmatprep.subr.bf16.mxu0 0
        %3292 = vmatpush1.bf16.msra.mxu0 %v3137
        %3293 = vmatprep.subr.bf16.mxu0 0
        %3294 = vmatpush1.bf16.msra.mxu0 %v3138
        %3295 = vmatprep.subr.bf16.mxu0 0
        %3296 = vmatpush1.bf16.msra.mxu0 %v3139
        %3297 = vmatprep.subr.bf16.mxu0 0
        %3298 = vmatpush1.bf16.msra.mxu0 %v3140
        %3299 = vmatprep.subr.bf16.mxu0 0
        %3300 = vmatpush1.bf16.msra.mxu0 %v3141
        %3301 = vmatprep.subr.bf16.mxu0 0
        %3302 = vmatpush1.bf16.msra.mxu0 %v3142
        %3303 = vmatprep.subr.bf16.mxu0 0
        %3304 = vmatpush1.bf16.msra.mxu0 %v3143
        %3305 = vmatprep.subr.bf16.mxu0 0
        %3306 = vmatpush1.bf16.msra.mxu0 %v3144
        %3307 = vmatprep.subr.bf16.mxu0 0
        %3308 = vmatpush1.bf16.msra.mxu0 %v3145
        %3309 = vmatprep.subr.bf16.mxu0 0
        %3310 = vmatpush1.bf16.msra.mxu0 %v3146
        %3311 = vmatprep.subr.bf16.mxu0 0
        %3312 = vmatpush1.bf16.msra.mxu0 %v3147
        %3313 = vmatprep.subr.bf16.mxu0 0
        %3314 = vmatpush1.bf16.msra.mxu0 %v3148
        %3315 = vmatprep.subr.bf16.mxu0 0
        %3316 = vmatpush1.bf16.msra.mxu0 %v3149
        %3317 = vmatprep.subr.bf16.mxu0 0
        %3318 = vmatpush1.bf16.msra.mxu0 %v3150
        %3319 = vmatprep.subr.bf16.mxu0 0
        %3320 = vmatpush1.bf16.msra.mxu0 %v3151
        %3321 = vmatprep.mubr.bf16.mxu0 %v2724
        %3322 = vmatmul.mubr.bf16.gmra.mrb[0].mxu0 %v2723
        %v3323 = vpop.f32.mrb[0].mxu0
        %v3324 = vadd.f32 %v3283, %v3323
        %v3325 = vpop.f32.mrb[0].mxu0
        %v3326 = vpop.f32.mrb[0].mxu0
        %v3327 = vadd.f32 %v3286, %v3326
        %v3328 = vpop.f32.mrb[0].mxu0
        %3329 = vdwg.mxu0
        %3330 = vmatprep.subr.bf16.mxu0 0
        %3331 = vmatpush1.bf16.msra.mxu0 %v3152
        %3332 = vmatprep.subr.bf16.mxu0 0
        %3333 = vmatpush1.bf16.msra.mxu0 %v3153
        %3334 = vmatprep.subr.bf16.mxu0 0
        %3335 = vmatpush1.bf16.msra.mxu0 %v3154
        %3336 = vmatprep.subr.bf16.mxu0 0
        %3337 = vmatpush1.bf16.msra.mxu0 %v3155
        %3338 = vmatprep.subr.bf16.mxu0 0
        %3339 = vmatpush1.bf16.msra.mxu0 %v3156
        %3340 = vmatprep.subr.bf16.mxu0 0
        %3341 = vmatpush1.bf16.msra.mxu0 %v3157
        %3342 = vmatprep.subr.bf16.mxu0 0
        %3343 = vmatpush1.bf16.msra.mxu0 %v3158
        %3344 = vmatprep.subr.bf16.mxu0 0
        %3345 = vmatpush1.bf16.msra.mxu0 %v3159
        %3346 = vmatprep.subr.bf16.mxu0 0
        %3347 = vmatpush1.bf16.msra.mxu0 %v3160
        %3348 = vmatprep.subr.bf16.mxu0 0
        %3349 = vmatpush1.bf16.msra.mxu0 %v3161
        %3350 = vmatprep.subr.bf16.mxu0 0
        %3351 = vmatpush1.bf16.msra.mxu0 %v3162
        %3352 = vmatprep.subr.bf16.mxu0 0
        %3353 = vmatpush1.bf16.msra.mxu0 %v3163
        %3354 = vmatprep.subr.bf16.mxu0 0
        %3355 = vmatpush1.bf16.msra.mxu0 %v3164
        %3356 = vmatprep.subr.bf16.mxu0 0
        %3357 = vmatpush1.bf16.msra.mxu0 %v3165
        %3358 = vmatprep.subr.bf16.mxu0 0
        %3359 = vmatpush1.bf16.msra.mxu0 %v3166
        %3360 = vmatprep.subr.bf16.mxu0 0
        %3361 = vmatpush1.bf16.msra.mxu0 %v3167
        %3362 = vmatprep.mubr.bf16.mxu0 %v2726
        %3363 = vmatmul.mubr.bf16.gmra.mrb[0].mxu0 %v2725
        %v3364 = vpop.f32.mrb[0].mxu0
        %v3365 = vadd.f32 %v3324, %v3364
        %v3366 = vpop.f32.mrb[0].mxu0
        %v3367 = vpop.f32.mrb[0].mxu0
        %v3368 = vadd.f32 %v3327, %v3367
        %v3369 = vpop.f32.mrb[0].mxu0
        %3370 = vdwg.mxu0
        %3371 = vmatprep.subr.bf16.mxu0 0
        %3372 = vmatpush1.bf16.msra.mxu0 %v3168
        %3373 = vmatprep.subr.bf16.mxu0 0
        %3374 = vmatpush1.bf16.msra.mxu0 %v3169
        %3375 = vmatprep.subr.bf16.mxu0 0
        %3376 = vmatpush1.bf16.msra.mxu0 %v3170
        %3377 = vmatprep.subr.bf16.mxu0 0
        %3378 = vmatpush1.bf16.msra.mxu0 %v3171
        %3379 = vmatprep.subr.bf16.mxu0 0
        %3380 = vmatpush1.bf16.msra.mxu0 %v3172
        %3381 = vmatprep.subr.bf16.mxu0 0
        %3382 = vmatpush1.bf16.msra.mxu0 %v3173
        %3383 = vmatprep.subr.bf16.mxu0 0
        %3384 = vmatpush1.bf16.msra.mxu0 %v3174
        %3385 = vmatprep.subr.bf16.mxu0 0
        %3386 = vmatpush1.bf16.msra.mxu0 %v3175
        %3387 = vmatprep.subr.bf16.mxu0 0
        %3388 = vmatpush1.bf16.msra.mxu0 %v3176
        %3389 = vmatprep.subr.bf16.mxu0 0
        %3390 = vmatpush1.bf16.msra.mxu0 %v3177
        %3391 = vmatprep.subr.bf16.mxu0 0
        %3392 = vmatpush1.bf16.msra.mxu0 %v3178
        %3393 = vmatprep.subr.bf16.mxu0 0
        %3394 = vmatpush1.bf16.msra.mxu0 %v3179
        %3395 = vmatprep.subr.bf16.mxu0 0
        %3396 = vmatpush1.bf16.msra.mxu0 %v3180
        %3397 = vmatprep.subr.bf16.mxu0 0
        %3398 = vmatpush1.bf16.msra.mxu0 %v3181
        %3399 = vmatprep.subr.bf16.mxu0 0
        %3400 = vmatpush1.bf16.msra.mxu0 %v3182
        %3401 = vmatprep.subr.bf16.mxu0 0
        %3402 = vmatpush1.bf16.msra.mxu0 %v3183
        %3403 = vmatprep.mubr.bf16.mxu0 %v2728
        %3404 = vmatmul.mubr.bf16.gmra.mrb[0].mxu0 %v2727
        %v3405 = vpop.f32.mrb[0].mxu0
        %v3406 = vadd.f32 %v3365, %v3405
        %v3407 = vpop.f32.mrb[0].mxu0
        %v3408 = vpop.f32.mrb[0].mxu0
        %v3409 = vadd.f32 %v3368, %v3408
        %v3410 = vpop.f32.mrb[0].mxu0
        %3411 = vdwg.mxu0
        %3412 = vst [vmem:[%s244] sm:$0xff] %v3406
        %3413 = vst [vmem:[%s244 + $0x8] sm:$0xff] %v3409
        %s3414 = sand.u32 %s119, 1
        %s3415 = scalar_lea.sflag [#allocation4], %s3414
        %s3416 = sand.u32 %s119, 1
        %s3417 = smul.addr %s3416, 16
        %s3418 = scalar_lea.vmem [#allocation8], %s3417
        // Predicated region
        $region49: #{tpu_custom_call.1} parent=35 // pred_check
          %p3419 = pneg %p129
        $region50: #{tpu_custom_call.1} parent=35 // pred_check_branch
          %3421 = sbr.rel (%p3419) target = $region52
        $region51: #{tpu_custom_call.1} parent=35 // pred_region
          %s3422 = smul.u32 2, %s22
          %s3424 = ssub.s32 256, 256
          %3425 = vsyncadd %s3415, %s3424
          %s3426 = smul.addr %s3422, 128
          %s3427 = scalar_lea.hbm %s4, %s3426
          %s3428 = sshll.u32 %s3418, 4
          %s3429 = int_to_ptr.vmem [resolvable:$true] %s3428
          %3434 = dma.vmem_to_hbm [thread:$0]  %s3429, 256, %s3427, %s3415, 128, 128, 8
        $region52: #{tpu_custom_call.1} parent=35 // pred_fallthru
          _
      $region36: #{tpu_custom_call.1} parent=5 // pred_fallthru
        _
      %p3435 = scmp.le.s32.totalorder 2, %s17
      // Predicated region
      $region53: #{tpu_custom_call.1} parent=5 // pred_check
        %p3436 = pneg %p3435
      $region54: #{tpu_custom_call.1} parent=5 // pred_check_branch
        %3438 = sbr.rel (%p3436) target = $region56
      $region55: #{tpu_custom_call.1} parent=5 // pred_region
        %s3439 = ssub.s32 %s17, 2
        // Predicated region
        $region57: #{tpu_custom_call.1} parent=55 // pred_check
          %p3440 = pneg %p135
        $region58: #{tpu_custom_call.1} parent=55 // pred_check_branch
          %3442 = sbr.rel (%p3440) target = $region60
        $region59: #{tpu_custom_call.1} parent=55 // pred_region
          %s3443 = sand.u32 %s120, 1
          %s3444 = scalar_lea.sflag [#allocation4], %s3443
          %s3445 = sand.u32 %s120, 1
          %s3446 = smul.addr %s3445, 16
          %s3447 = scalar_lea.vmem [#allocation8], %s3446
          %3448 = dma.done %s3444, 256
        $region60: #{tpu_custom_call.1} parent=55 // pred_fallthru
          _
      $region56: #{tpu_custom_call.1} parent=5 // pred_fallthru
        _
    $region6: #{tpu_custom_call.1} parent=1 // loop_footer
      %s21 = sadd.s32 1, %s17
    $region7: #{tpu_custom_call.1} parent=1 // loop_footer_branch
      %16 = sbr.rel target = $region3
    $region8: #{tpu_custom_call.1} parent=1 // loop_exit
      _
    %3449 = vsyncpa [#allocation3], 1
    %s3450 = scalar_lea.sflag [#allocation3], 1
    %3451 = vsyncpa %s3450, 1
    %3452 = vsyncpa [#allocation6], 1
    %3453 = vsyncpa [#allocation4], 1
    %s3454 = scalar_lea.sflag [#allocation4], 1
    %3455 = vsyncpa %s3454, 1

</llo_original>
